<compile_context>
chip_gen: v5e
topology: v5e:2x2
jax: 0.10.0
libtpu: 0.0.40
codegen_flags: <defaults>
</compile_context>

<pallas_src>
import functools

import jax
import jax.numpy as jnp
from jax import lax
from jax.experimental import pallas as pl
from jax.experimental.pallas import tpu as pltpu

BN_EPS = 1e-5
LANE = 128


def _cdiv(a, b):
    return -(-a // b)


def _pad_hw1(x):
    """Zero-pad H and W by 1 on each side: (Nb,H,W,C) -> (Nb,H+2,W+2,C)."""
    nb, h, w, c = x.shape
    zr = jnp.zeros((nb, 1, w, c), x.dtype)
    x = jnp.concatenate([zr, x, zr], axis=1)
    zc = jnp.zeros((nb, h + 2, 1, c), x.dtype)
    return jnp.concatenate([zc, x, zc], axis=2)


def _down_kernel(x_ref, w1_ref, b1_ref, w2_ref, b2_ref, o_ref, *, compute_dtype):
    x = x_ref[...]                                              # (Nb,H,W,Cin) f32
    Nb, H, W, Cin = x.shape
    Hp, Wp = H // 2, W // 2
    M = Nb * Hp * Wp

    # --- MaxPool2d(2): two pairwise max reductions (W pairs, then H pairs) ---
    xw = jnp.max(x.reshape(Nb, H, Wp, 2, Cin), axis=3)          # (Nb,H,Wp,Cin)
    pooled = jnp.max(xw.reshape(Nb, Hp, 2, Wp, Cin), axis=2)    # (Nb,Hp,Wp,Cin)

    # --- 3x3 "same" conv: 9 per-tap MXU matmuls into an f32 accumulator.   ---
    # BN scale is pre-folded into the weights; only bias + ReLU happen here.
    def conv3x3_bias_relu(inp, w_ref, b_ref):
        Ci = inp.shape[-1]
        Co = w_ref.shape[-1]
        inp = inp.astype(compute_dtype)          # cast ONCE, before the taps
        xp = _pad_hw1(inp)                       # (Nb, Hp+2, Wp+2, Ci)
        acc = jnp.zeros((M, Co), jnp.float32)
        for dy in range(3):
            for dx in range(3):
                tap = xp[:, dy:dy + Hp, dx:dx + Wp, :].reshape(M, Ci)
                acc += jnp.dot(tap, w_ref[dy * 3 + dx],
                               preferred_element_type=jnp.float32)
        return jnp.maximum(acc + b_ref[...], 0.0)               # (M, Co) f32

    h1 = conv3x3_bias_relu(pooled, w1_ref, b1_ref)              # (M, Cmid_p)
    h1 = h1.reshape(Nb, Hp, Wp, h1.shape[-1])
    h2 = conv3x3_bias_relu(h1, w2_ref, b2_ref)                  # (M, Cout_p)

    o_ref[...] = h2.astype(o_ref.dtype)


def _vmem_limit_bytes():
    try:
        cap = int(pltpu.get_tpu_info().vmem_capacity_bytes)
    except Exception:
        cap = 64 * 1024 * 1024                  # conservative (v7x per-core)
    # ~20% headroom for Mosaic internal scratch / pipeline buffers; never ask
    # for more than ~100 MiB even on 128 MiB parts (v5e/v6e).
    return cap, min(int(cap * 0.8), 100 * 1024 * 1024)


def _fold_bn_into_conv(w, b, gamma, beta, mean, var):
    """Fold eval-mode BatchNorm (+conv bias) into per-out-channel weight scale
    and additive bias."""
    scale = gamma / jnp.sqrt(var + BN_EPS)                      # (Co,)
    return w * scale, (b - mean) * scale + beta


def _prep_weights(p1, p2, compute_dtype):
    """Fold BN, zero-pad narrow channel dims to lane-dense 128, and lay out the
    weights tap-major as (9, Ci, Co) for per-tap matmuls."""
    w1, b1 = _fold_bn_into_conv(**p1)
    w2, b2 = _fold_bn_into_conv(**p2)
    cin = w1.shape[2]
    cmid, cout = w1.shape[3], w2.shape[3]
    cmid_p = cmid if cmid >= LANE else LANE
    cout_p = cout if cout >= LANE else LANE
    w1 = jnp.pad(w1, ((0, 0), (0, 0), (0, 0), (0, cmid_p - cmid)))
    b1 = jnp.pad(b1, ((0, cmid_p - cmid),))
    w2 = jnp.pad(w2, ((0, 0), (0, 0), (0, cmid_p - cmid), (0, cout_p - cout)))
    b2 = jnp.pad(b2, ((0, cout_p - cout),))
    w1 = w1.reshape(9, cin, cmid_p).astype(compute_dtype)
    w2 = w2.reshape(9, cmid_p, cout_p).astype(compute_dtype)
    return (w1, b1.reshape(1, cmid_p).astype(jnp.float32),
            w2, b2.reshape(1, cout_p).astype(jnp.float32),
            cmid_p, cout, cout_p)


def down_pallas_nhwc(x_nhwc, p1, p2, *, compute_dtype=jnp.float32, nb=None):
    """Fused MaxPool2d(2) + DoubleConv (eval BN). NHWC in, NHWC out (f32)."""
    N, H, W, Cin = x_nhwc.shape
    assert H % 2 == 0 and W % 2 == 0, "kernel assumes even H and W"
    Hp, Wp = H // 2, W // 2
    assert (Hp * Wp) % 8 == 0, "need Hp*Wp % 8 == 0 for a sublane-aligned output block"

    w1, b1, w2, b2, cmid_p, cout, cout_p = _prep_weights(p1, p2, compute_dtype)

    cdt = jnp.dtype(compute_dtype).itemsize
    # Rough per-image VMEM footprint: double-buffered input/output blocks, one
    # padded copy + a couple of live taps per conv, f32 accumulators.
    bytes_per_img = (
        2 * H * W * Cin * 4
        + Hp * Wp * Cin * 4
        + (Hp + 2) * (Wp + 2) * (Cin + cmid_p) * cdt
        + Hp * Wp * (2 * cmid_p + cout_p) * 4
        + 2 * Hp * Wp * cout_p * 4
        + 2 * Hp * Wp * max(Cin, cmid_p) * cdt)
    weight_bytes = cdt * 9 * (Cin * cmid_p + cmid_p * cout_p) + 4 * (cmid_p + cout_p)

    _, vmem_limit = _vmem_limit_bytes()
    if nb is None:
        budget = max(vmem_limit - 2 * weight_bytes - (4 << 20), bytes_per_img)
        nb = max(1, min(budget // bytes_per_img,     # fits in VMEM
                        _cdiv(N, 2)))                # >=2 grid steps for v7x's 2 TCs
        nb = int(min(nb, N))
    # TODO(synk): if one image exceeds the budget, spatially tile over Hp
    #             with a 2-row halo instead of whole-image blocks.

    n_pad = _cdiv(N, nb) * nb
    if n_pad != N:
        x_nhwc = jnp.pad(x_nhwc, ((0, n_pad - N), (0, 0), (0, 0), (0, 0)))
    grid = (n_pad // nb,)

    out_flat = pl.pallas_call(
        functools.partial(_down_kernel, compute_dtype=compute_dtype),
        out_shape=jax.ShapeDtypeStruct((n_pad * Hp * Wp, cout_p), jnp.float32),
        grid_spec=pltpu.PrefetchScalarGridSpec(
            num_scalar_prefetch=0,
            grid=grid,
            in_specs=[
                pl.BlockSpec((nb, H, W, Cin), lambda n: (n, 0, 0, 0)),
                # Weights / biases: constant index_map -> VMEM-resident.
                pl.BlockSpec((9, Cin, cmid_p), lambda n: (0, 0, 0)),
                pl.BlockSpec((1, cmid_p), lambda n: (0, 0)),
                pl.BlockSpec((9, cmid_p, cout_p), lambda n: (0, 0, 0)),
                pl.BlockSpec((1, cout_p), lambda n: (0, 0)),
            ],
            out_specs=pl.BlockSpec((nb * Hp * Wp, cout_p), lambda n: (n, 0)),
        ),
        compiler_params=pltpu.CompilerParams(
            dimension_semantics=("parallel",),
            vmem_limit_bytes=int(vmem_limit)),
    )(x_nhwc, w1, b1, w2, b2)

    out = out_flat.reshape(n_pad, Hp, Wp, cout_p)
    return out[:N, :, :, :cout]


def down_pallas(x_nchw, p1, p2, **kw):
    # NOTE: these NCHW<->NHWC transposes are layout plumbing for parity with
    # the PyTorch (NCHW) spec; in a real model use down_pallas_nhwc end-to-end
    # to avoid two extra HBM round trips of the activations.
    x_nhwc = jnp.transpose(x_nchw, (0, 2, 3, 1))
    out = down_pallas_nhwc(x_nhwc, p1, p2, **kw)
    return jnp.transpose(out, (0, 3, 1, 2))


def make_params(key, in_channels, out_channels, mid_channels=None):
    """Deterministic synthetic Conv+BN parameters (BN in eval mode)."""
    if mid_channels is None:
        mid_channels = out_channels
    ks = jax.random.split(key, 12)

    def conv_bn(k0, ci, co):
        return dict(
            w=jax.random.normal(ks[k0], (3, 3, ci, co), jnp.float32) * 0.1,
            b=jax.random.normal(ks[k0 + 1], (co,), jnp.float32) * 0.1,
            gamma=1.0 + 0.1 * jax.random.normal(ks[k0 + 2], (co,), jnp.float32),
            beta=0.1 * jax.random.normal(ks[k0 + 3], (co,), jnp.float32),
            mean=0.1 * jax.random.normal(ks[k0 + 4], (co,), jnp.float32),
            var=jax.random.uniform(ks[k0 + 5], (co,), jnp.float32, 0.5, 1.5))

    return (conv_bn(0, in_channels, mid_channels),
            conv_bn(6, mid_channels, out_channels))


def down_reference(x_nchw, p1, p2):
    """Plain-JAX/XLA reference: MaxPool2d(2) + (Conv3x3 -> eval BN -> ReLU) x2."""
    x = jnp.transpose(x_nchw, (0, 2, 3, 1))
    N, H, W, C = x.shape
    x = jnp.max(x.reshape(N, H // 2, 2, W // 2, 2, C), axis=(2, 4))

    def conv_bn_relu(x, p):
        y = lax.conv_general_dilated(
            x, p["w"], window_strides=(1, 1), padding="SAME",
            dimension_numbers=("NHWC", "HWIO", "NHWC"))
        y = y + p["b"]
        y = (y - p["mean"]) / jnp.sqrt(p["var"] + BN_EPS) * p["gamma"] + p["beta"]
        return jnp.maximum(y, 0.0)

    x = conv_bn_relu(x, p1)
    x = conv_bn_relu(x, p2)
    return jnp.transpose(x, (0, 3, 1, 2))


if __name__ == "__main__":
    key = jax.random.PRNGKey(0)
    k_x, k_p = jax.random.split(key)

    N, Cin, H, W = 2, 4, 16, 16
    Cout = 8
    x = jax.random.normal(k_x, (N, Cin, H, W), jnp.float32)
    p1, p2 = make_params(k_p, Cin, Cout)

    ref = down_reference(x, p1, p2)

    # f32 matmul-operand path: tight check against the XLA reference.
    out = jax.block_until_ready(down_pallas(x, p1, p2))
    assert out.shape == (N, Cout, H // 2, W // 2), out.shape
    assert jnp.allclose(out, ref, atol=1e-4, rtol=1e-4), (
        float(jnp.max(jnp.abs(out - ref))))

    # bf16 matmul-operand path (v6e/v7x MXU-friendly), f32 accumulation.
    out_bf16 = jax.block_until_ready(
        down_pallas(x, p1, p2, compute_dtype=jnp.bfloat16))
    assert jnp.allclose(out_bf16, ref, atol=1e-1, rtol=1e-1), (
        float(jnp.max(jnp.abs(out_bf16 - ref))))

    print("KERNEL_OK")
</pallas_src>

<mosaic_0001>
module attributes {stable_mosaic.version = 11 : i64} {
  func.func @_down_kernel(%arg0: i32, %arg1: memref<1x16x16x4xf32, #tpu.memory_space<vmem>>, %arg2: memref<9x4x128xf32, #tpu.memory_space<vmem>>, %arg3: memref<1x128xf32, #tpu.memory_space<vmem>>, %arg4: memref<9x128x128xf32, #tpu.memory_space<vmem>>, %arg5: memref<1x128xf32, #tpu.memory_space<vmem>>, %arg6: memref<64x128xf32, #tpu.memory_space<vmem>>) attributes {dimension_semantics = [#tpu.dimension_semantics<parallel>], iteration_bounds = array<i64: 2>, scalar_prefetch = 0 : i64, scratch_operands = 0 : i64, tpu.core_type = #tpu.core_type<tc>, window_params = [{transform_indices = @transform_0, window_bounds = array<i64: 1, 16, 16, 4>}, {pipeline_mode = #tpu.pipeline_mode<synchronous>, transform_indices = @transform_1, window_bounds = array<i64: 9, 4, 128>}, {pipeline_mode = #tpu.pipeline_mode<synchronous>, transform_indices = @transform_2, window_bounds = array<i64: 1, 128>}, {pipeline_mode = #tpu.pipeline_mode<synchronous>, transform_indices = @transform_3, window_bounds = array<i64: 9, 128, 128>}, {pipeline_mode = #tpu.pipeline_mode<synchronous>, transform_indices = @transform_4, window_bounds = array<i64: 1, 128>}, {transform_indices = @transform_5, window_bounds = array<i64: 64, 128>}]} {
    %c0 = arith.constant 0 : index
    %c0_0 = arith.constant 0 : index
    %c0_1 = arith.constant 0 : index
    %c0_2 = arith.constant 0 : index
    %0 = vector.load %arg1[%c0, %c0_0, %c0_1, %c0_2] : memref<1x16x16x4xf32, #tpu.memory_space<vmem>>, vector<1x16x16x4xf32>
    %1 = vector.shape_cast %0 : vector<1x16x16x4xf32> to vector<1x16x8x2x4xf32>
    %cst = arith.constant dense<0xFF800000> : vector<1x16x8x4xf32>
    %2 = vector.multi_reduction <maximumf>, %1, %cst [3] : vector<1x16x8x2x4xf32> to vector<1x16x8x4xf32>
    %3 = vector.shape_cast %2 : vector<1x16x8x4xf32> to vector<1x8x2x8x4xf32>
    %cst_3 = arith.constant dense<0xFF800000> : vector<1x8x8x4xf32>
    %4 = vector.multi_reduction <maximumf>, %3, %cst_3 [2] : vector<1x8x2x8x4xf32> to vector<1x8x8x4xf32>
    %cst_4 = arith.constant 0.000000e+00 : f32
    %5 = vector.broadcast %cst_4 : f32 to vector<1x1x8x4xf32>
    %6 = tpu.concatenate %5, %4, %5 in 1 : vector<1x1x8x4xf32>, vector<1x8x8x4xf32>, vector<1x1x8x4xf32> -> vector<1x10x8x4xf32>
    %cst_5 = arith.constant 0.000000e+00 : f32
    %7 = vector.broadcast %cst_5 : f32 to vector<1x10x1x4xf32>
    %8 = tpu.concatenate %7, %6, %7 in 2 : vector<1x10x1x4xf32>, vector<1x10x8x4xf32>, vector<1x10x1x4xf32> -> vector<1x10x10x4xf32>
    %cst_6 = arith.constant 0.000000e+00 : f32
    %9 = vector.broadcast %cst_6 : f32 to vector<64x128xf32>
    %10 = vector.extract_strided_slice %8 {offsets = [0, 0, 0, 0], sizes = [1, 8, 8, 4], strides = [1, 1, 1, 1]} : vector<1x10x10x4xf32> to vector<1x8x8x4xf32>
    %11 = vector.shape_cast %10 : vector<1x8x8x4xf32> to vector<64x4xf32>
    %c0_7 = arith.constant 0 : index
    %c0_8 = arith.constant 0 : index
    %c0_9 = arith.constant 0 : index
    %12 = vector.load %arg2[%c0_7, %c0_8, %c0_9] : memref<9x4x128xf32, #tpu.memory_space<vmem>>, vector<1x4x128xf32>
    %13 = vector.shape_cast %12 : vector<1x4x128xf32> to vector<4x128xf32>
    %cst_10 = arith.constant dense<0.000000e+00> : vector<64x128xf32>
    %14 = tpu.matmul %11, %13, %cst_10 {dimension_numbers = #tpu.dot_dimension_numbers<[1], [0], [0], [1], [0, 0, 1, 1], [], []>} : vector<64x4xf32>, vector<4x128xf32>, vector<64x128xf32> -> vector<64x128xf32>
    %15 = arith.addf %9, %14 : vector<64x128xf32>
    %16 = vector.extract_strided_slice %8 {offsets = [0, 0, 1, 0], sizes = [1, 8, 8, 4], strides = [1, 1, 1, 1]} : vector<1x10x10x4xf32> to vector<1x8x8x4xf32>
    %17 = vector.shape_cast %16 : vector<1x8x8x4xf32> to vector<64x4xf32>
    %c1 = arith.constant 1 : index
    %c0_11 = arith.constant 0 : index
    %c0_12 = arith.constant 0 : index
    %18 = vector.load %arg2[%c1, %c0_11, %c0_12] : memref<9x4x128xf32, #tpu.memory_space<vmem>>, vector<1x4x128xf32>
    %19 = vector.shape_cast %18 : vector<1x4x128xf32> to vector<4x128xf32>
    %cst_13 = arith.constant dense<0.000000e+00> : vector<64x128xf32>
    %20 = tpu.matmul %17, %19, %cst_13 {dimension_numbers = #tpu.dot_dimension_numbers<[1], [0], [0], [1], [0, 0, 1, 1], [], []>} : vector<64x4xf32>, vector<4x128xf32>, vector<64x128xf32> -> vector<64x128xf32>
    %21 = arith.addf %15, %20 : vector<64x128xf32>
    %22 = vector.extract_strided_slice %8 {offsets = [0, 0, 2, 0], sizes = [1, 8, 8, 4], strides = [1, 1, 1, 1]} : vector<1x10x10x4xf32> to vector<1x8x8x4xf32>
    %23 = vector.shape_cast %22 : vector<1x8x8x4xf32> to vector<64x4xf32>
    %c2 = arith.constant 2 : index
    %c0_14 = arith.constant 0 : index
    %c0_15 = arith.constant 0 : index
    %24 = vector.load %arg2[%c2, %c0_14, %c0_15] : memref<9x4x128xf32, #tpu.memory_space<vmem>>, vector<1x4x128xf32>
    %25 = vector.shape_cast %24 : vector<1x4x128xf32> to vector<4x128xf32>
    %cst_16 = arith.constant dense<0.000000e+00> : vector<64x128xf32>
    %26 = tpu.matmul %23, %25, %cst_16 {dimension_numbers = #tpu.dot_dimension_numbers<[1], [0], [0], [1], [0, 0, 1, 1], [], []>} : vector<64x4xf32>, vector<4x128xf32>, vector<64x128xf32> -> vector<64x128xf32>
    %27 = arith.addf %21, %26 : vector<64x128xf32>
    %28 = vector.extract_strided_slice %8 {offsets = [0, 1, 0, 0], sizes = [1, 8, 8, 4], strides = [1, 1, 1, 1]} : vector<1x10x10x4xf32> to vector<1x8x8x4xf32>
    %29 = vector.shape_cast %28 : vector<1x8x8x4xf32> to vector<64x4xf32>
    %c3 = arith.constant 3 : index
    %c0_17 = arith.constant 0 : index
    %c0_18 = arith.constant 0 : index
    %30 = vector.load %arg2[%c3, %c0_17, %c0_18] : memref<9x4x128xf32, #tpu.memory_space<vmem>>, vector<1x4x128xf32>
    %31 = vector.shape_cast %30 : vector<1x4x128xf32> to vector<4x128xf32>
    %cst_19 = arith.constant dense<0.000000e+00> : vector<64x128xf32>
    %32 = tpu.matmul %29, %31, %cst_19 {dimension_numbers = #tpu.dot_dimension_numbers<[1], [0], [0], [1], [0, 0, 1, 1], [], []>} : vector<64x4xf32>, vector<4x128xf32>, vector<64x128xf32> -> vector<64x128xf32>
    %33 = arith.addf %27, %32 : vector<64x128xf32>
    %34 = vector.extract_strided_slice %8 {offsets = [0, 1, 1, 0], sizes = [1, 8, 8, 4], strides = [1, 1, 1, 1]} : vector<1x10x10x4xf32> to vector<1x8x8x4xf32>
    %35 = vector.shape_cast %34 : vector<1x8x8x4xf32> to vector<64x4xf32>
    %c4 = arith.constant 4 : index
    %c0_20 = arith.constant 0 : index
    %c0_21 = arith.constant 0 : index
    %36 = vector.load %arg2[%c4, %c0_20, %c0_21] : memref<9x4x128xf32, #tpu.memory_space<vmem>>, vector<1x4x128xf32>
    %37 = vector.shape_cast %36 : vector<1x4x128xf32> to vector<4x128xf32>
    %cst_22 = arith.constant dense<0.000000e+00> : vector<64x128xf32>
    %38 = tpu.matmul %35, %37, %cst_22 {dimension_numbers = #tpu.dot_dimension_numbers<[1], [0], [0], [1], [0, 0, 1, 1], [], []>} : vector<64x4xf32>, vector<4x128xf32>, vector<64x128xf32> -> vector<64x128xf32>
    %39 = arith.addf %33, %38 : vector<64x128xf32>
    %40 = vector.extract_strided_slice %8 {offsets = [0, 1, 2, 0], sizes = [1, 8, 8, 4], strides = [1, 1, 1, 1]} : vector<1x10x10x4xf32> to vector<1x8x8x4xf32>
    %41 = vector.shape_cast %40 : vector<1x8x8x4xf32> to vector<64x4xf32>
    %c5 = arith.constant 5 : index
    %c0_23 = arith.constant 0 : index
    %c0_24 = arith.constant 0 : index
    %42 = vector.load %arg2[%c5, %c0_23, %c0_24] : memref<9x4x128xf32, #tpu.memory_space<vmem>>, vector<1x4x128xf32>
    %43 = vector.shape_cast %42 : vector<1x4x128xf32> to vector<4x128xf32>
    %cst_25 = arith.constant dense<0.000000e+00> : vector<64x128xf32>
    %44 = tpu.matmul %41, %43, %cst_25 {dimension_numbers = #tpu.dot_dimension_numbers<[1], [0], [0], [1], [0, 0, 1, 1], [], []>} : vector<64x4xf32>, vector<4x128xf32>, vector<64x128xf32> -> vector<64x128xf32>
    %45 = arith.addf %39, %44 : vector<64x128xf32>
    %46 = vector.extract_strided_slice %8 {offsets = [0, 2, 0, 0], sizes = [1, 8, 8, 4], strides = [1, 1, 1, 1]} : vector<1x10x10x4xf32> to vector<1x8x8x4xf32>
    %47 = vector.shape_cast %46 : vector<1x8x8x4xf32> to vector<64x4xf32>
    %c6 = arith.constant 6 : index
    %c0_26 = arith.constant 0 : index
    %c0_27 = arith.constant 0 : index
    %48 = vector.load %arg2[%c6, %c0_26, %c0_27] : memref<9x4x128xf32, #tpu.memory_space<vmem>>, vector<1x4x128xf32>
    %49 = vector.shape_cast %48 : vector<1x4x128xf32> to vector<4x128xf32>
    %cst_28 = arith.constant dense<0.000000e+00> : vector<64x128xf32>
    %50 = tpu.matmul %47, %49, %cst_28 {dimension_numbers = #tpu.dot_dimension_numbers<[1], [0], [0], [1], [0, 0, 1, 1], [], []>} : vector<64x4xf32>, vector<4x128xf32>, vector<64x128xf32> -> vector<64x128xf32>
    %51 = arith.addf %45, %50 : vector<64x128xf32>
    %52 = vector.extract_strided_slice %8 {offsets = [0, 2, 1, 0], sizes = [1, 8, 8, 4], strides = [1, 1, 1, 1]} : vector<1x10x10x4xf32> to vector<1x8x8x4xf32>
    %53 = vector.shape_cast %52 : vector<1x8x8x4xf32> to vector<64x4xf32>
    %c7 = arith.constant 7 : index
    %c0_29 = arith.constant 0 : index
    %c0_30 = arith.constant 0 : index
    %54 = vector.load %arg2[%c7, %c0_29, %c0_30] : memref<9x4x128xf32, #tpu.memory_space<vmem>>, vector<1x4x128xf32>
    %55 = vector.shape_cast %54 : vector<1x4x128xf32> to vector<4x128xf32>
    %cst_31 = arith.constant dense<0.000000e+00> : vector<64x128xf32>
    %56 = tpu.matmul %53, %55, %cst_31 {dimension_numbers = #tpu.dot_dimension_numbers<[1], [0], [0], [1], [0, 0, 1, 1], [], []>} : vector<64x4xf32>, vector<4x128xf32>, vector<64x128xf32> -> vector<64x128xf32>
    %57 = arith.addf %51, %56 : vector<64x128xf32>
    %58 = vector.extract_strided_slice %8 {offsets = [0, 2, 2, 0], sizes = [1, 8, 8, 4], strides = [1, 1, 1, 1]} : vector<1x10x10x4xf32> to vector<1x8x8x4xf32>
    %59 = vector.shape_cast %58 : vector<1x8x8x4xf32> to vector<64x4xf32>
    %c8 = arith.constant 8 : index
    %c0_32 = arith.constant 0 : index
    %c0_33 = arith.constant 0 : index
    %60 = vector.load %arg2[%c8, %c0_32, %c0_33] : memref<9x4x128xf32, #tpu.memory_space<vmem>>, vector<1x4x128xf32>
    %61 = vector.shape_cast %60 : vector<1x4x128xf32> to vector<4x128xf32>
    %cst_34 = arith.constant dense<0.000000e+00> : vector<64x128xf32>
    %62 = tpu.matmul %59, %61, %cst_34 {dimension_numbers = #tpu.dot_dimension_numbers<[1], [0], [0], [1], [0, 0, 1, 1], [], []>} : vector<64x4xf32>, vector<4x128xf32>, vector<64x128xf32> -> vector<64x128xf32>
    %63 = arith.addf %57, %62 : vector<64x128xf32>
    %c0_35 = arith.constant 0 : index
    %c0_36 = arith.constant 0 : index
    %64 = vector.load %arg3[%c0_35, %c0_36] : memref<1x128xf32, #tpu.memory_space<vmem>>, vector<1x128xf32>
    %65 = vector.broadcast %64 : vector<1x128xf32> to vector<64x128xf32>
    %66 = arith.addf %63, %65 : vector<64x128xf32>
    %cst_37 = arith.constant 0.000000e+00 : f32
    %67 = vector.broadcast %cst_37 : f32 to vector<64x128xf32>
    %68 = arith.maximumf %66, %67 : vector<64x128xf32>
    %69 = vector.shape_cast %68 : vector<64x128xf32> to vector<1x8x8x128xf32>
    %cst_38 = arith.constant 0.000000e+00 : f32
    %70 = vector.broadcast %cst_38 : f32 to vector<1x1x8x128xf32>
    %71 = tpu.concatenate %70, %69, %70 in 1 : vector<1x1x8x128xf32>, vector<1x8x8x128xf32>, vector<1x1x8x128xf32> -> vector<1x10x8x128xf32>
    %cst_39 = arith.constant 0.000000e+00 : f32
    %72 = vector.broadcast %cst_39 : f32 to vector<1x10x1x128xf32>
    %73 = tpu.concatenate %72, %71, %72 in 2 : vector<1x10x1x128xf32>, vector<1x10x8x128xf32>, vector<1x10x1x128xf32> -> vector<1x10x10x128xf32>
    %cst_40 = arith.constant 0.000000e+00 : f32
    %74 = vector.broadcast %cst_40 : f32 to vector<64x128xf32>
    %75 = vector.extract_strided_slice %73 {offsets = [0, 0, 0, 0], sizes = [1, 8, 8, 128], strides = [1, 1, 1, 1]} : vector<1x10x10x128xf32> to vector<1x8x8x128xf32>
    %76 = vector.shape_cast %75 : vector<1x8x8x128xf32> to vector<64x128xf32>
    %c0_41 = arith.constant 0 : index
    %c0_42 = arith.constant 0 : index
    %c0_43 = arith.constant 0 : index
    %77 = vector.load %arg4[%c0_41, %c0_42, %c0_43] : memref<9x128x128xf32, #tpu.memory_space<vmem>>, vector<1x128x128xf32>
    %78 = vector.shape_cast %77 : vector<1x128x128xf32> to vector<128x128xf32>
    %cst_44 = arith.constant dense<0.000000e+00> : vector<64x128xf32>
    %79 = tpu.matmul %76, %78, %cst_44 {dimension_numbers = #tpu.dot_dimension_numbers<[1], [0], [0], [1], [0, 0, 1, 1], [], []>} : vector<64x128xf32>, vector<128x128xf32>, vector<64x128xf32> -> vector<64x128xf32>
    %80 = arith.addf %74, %79 : vector<64x128xf32>
    %81 = vector.extract_strided_slice %73 {offsets = [0, 0, 1, 0], sizes = [1, 8, 8, 128], strides = [1, 1, 1, 1]} : vector<1x10x10x128xf32> to vector<1x8x8x128xf32>
    %82 = vector.shape_cast %81 : vector<1x8x8x128xf32> to vector<64x128xf32>
    %c1_45 = arith.constant 1 : index
    %c0_46 = arith.constant 0 : index
    %c0_47 = arith.constant 0 : index
    %83 = vector.load %arg4[%c1_45, %c0_46, %c0_47] : memref<9x128x128xf32, #tpu.memory_space<vmem>>, vector<1x128x128xf32>
    %84 = vector.shape_cast %83 : vector<1x128x128xf32> to vector<128x128xf32>
    %cst_48 = arith.constant dense<0.000000e+00> : vector<64x128xf32>
    %85 = tpu.matmul %82, %84, %cst_48 {dimension_numbers = #tpu.dot_dimension_numbers<[1], [0], [0], [1], [0, 0, 1, 1], [], []>} : vector<64x128xf32>, vector<128x128xf32>, vector<64x128xf32> -> vector<64x128xf32>
    %86 = arith.addf %80, %85 : vector<64x128xf32>
    %87 = vector.extract_strided_slice %73 {offsets = [0, 0, 2, 0], sizes = [1, 8, 8, 128], strides = [1, 1, 1, 1]} : vector<1x10x10x128xf32> to vector<1x8x8x128xf32>
    %88 = vector.shape_cast %87 : vector<1x8x8x128xf32> to vector<64x128xf32>
    %c2_49 = arith.constant 2 : index
    %c0_50 = arith.constant 0 : index
    %c0_51 = arith.constant 0 : index
    %89 = vector.load %arg4[%c2_49, %c0_50, %c0_51] : memref<9x128x128xf32, #tpu.memory_space<vmem>>, vector<1x128x128xf32>
    %90 = vector.shape_cast %89 : vector<1x128x128xf32> to vector<128x128xf32>
    %cst_52 = arith.constant dense<0.000000e+00> : vector<64x128xf32>
    %91 = tpu.matmul %88, %90, %cst_52 {dimension_numbers = #tpu.dot_dimension_numbers<[1], [0], [0], [1], [0, 0, 1, 1], [], []>} : vector<64x128xf32>, vector<128x128xf32>, vector<64x128xf32> -> vector<64x128xf32>
    %92 = arith.addf %86, %91 : vector<64x128xf32>
    %93 = vector.extract_strided_slice %73 {offsets = [0, 1, 0, 0], sizes = [1, 8, 8, 128], strides = [1, 1, 1, 1]} : vector<1x10x10x128xf32> to vector<1x8x8x128xf32>
    %94 = vector.shape_cast %93 : vector<1x8x8x128xf32> to vector<64x128xf32>
    %c3_53 = arith.constant 3 : index
    %c0_54 = arith.constant 0 : index
    %c0_55 = arith.constant 0 : index
    %95 = vector.load %arg4[%c3_53, %c0_54, %c0_55] : memref<9x128x128xf32, #tpu.memory_space<vmem>>, vector<1x128x128xf32>
    %96 = vector.shape_cast %95 : vector<1x128x128xf32> to vector<128x128xf32>
    %cst_56 = arith.constant dense<0.000000e+00> : vector<64x128xf32>
    %97 = tpu.matmul %94, %96, %cst_56 {dimension_numbers = #tpu.dot_dimension_numbers<[1], [0], [0], [1], [0, 0, 1, 1], [], []>} : vector<64x128xf32>, vector<128x128xf32>, vector<64x128xf32> -> vector<64x128xf32>
    %98 = arith.addf %92, %97 : vector<64x128xf32>
    %99 = vector.extract_strided_slice %73 {offsets = [0, 1, 1, 0], sizes = [1, 8, 8, 128], strides = [1, 1, 1, 1]} : vector<1x10x10x128xf32> to vector<1x8x8x128xf32>
    %100 = vector.shape_cast %99 : vector<1x8x8x128xf32> to vector<64x128xf32>
    %c4_57 = arith.constant 4 : index
    %c0_58 = arith.constant 0 : index
    %c0_59 = arith.constant 0 : index
    %101 = vector.load %arg4[%c4_57, %c0_58, %c0_59] : memref<9x128x128xf32, #tpu.memory_space<vmem>>, vector<1x128x128xf32>
    %102 = vector.shape_cast %101 : vector<1x128x128xf32> to vector<128x128xf32>
    %cst_60 = arith.constant dense<0.000000e+00> : vector<64x128xf32>
    %103 = tpu.matmul %100, %102, %cst_60 {dimension_numbers = #tpu.dot_dimension_numbers<[1], [0], [0], [1], [0, 0, 1, 1], [], []>} : vector<64x128xf32>, vector<128x128xf32>, vector<64x128xf32> -> vector<64x128xf32>
    %104 = arith.addf %98, %103 : vector<64x128xf32>
    %105 = vector.extract_strided_slice %73 {offsets = [0, 1, 2, 0], sizes = [1, 8, 8, 128], strides = [1, 1, 1, 1]} : vector<1x10x10x128xf32> to vector<1x8x8x128xf32>
    %106 = vector.shape_cast %105 : vector<1x8x8x128xf32> to vector<64x128xf32>
    %c5_61 = arith.constant 5 : index
    %c0_62 = arith.constant 0 : index
    %c0_63 = arith.constant 0 : index
    %107 = vector.load %arg4[%c5_61, %c0_62, %c0_63] : memref<9x128x128xf32, #tpu.memory_space<vmem>>, vector<1x128x128xf32>
    %108 = vector.shape_cast %107 : vector<1x128x128xf32> to vector<128x128xf32>
    %cst_64 = arith.constant dense<0.000000e+00> : vector<64x128xf32>
    %109 = tpu.matmul %106, %108, %cst_64 {dimension_numbers = #tpu.dot_dimension_numbers<[1], [0], [0], [1], [0, 0, 1, 1], [], []>} : vector<64x128xf32>, vector<128x128xf32>, vector<64x128xf32> -> vector<64x128xf32>
    %110 = arith.addf %104, %109 : vector<64x128xf32>
    %111 = vector.extract_strided_slice %73 {offsets = [0, 2, 0, 0], sizes = [1, 8, 8, 128], strides = [1, 1, 1, 1]} : vector<1x10x10x128xf32> to vector<1x8x8x128xf32>
    %112 = vector.shape_cast %111 : vector<1x8x8x128xf32> to vector<64x128xf32>
    %c6_65 = arith.constant 6 : index
    %c0_66 = arith.constant 0 : index
    %c0_67 = arith.constant 0 : index
    %113 = vector.load %arg4[%c6_65, %c0_66, %c0_67] : memref<9x128x128xf32, #tpu.memory_space<vmem>>, vector<1x128x128xf32>
    %114 = vector.shape_cast %113 : vector<1x128x128xf32> to vector<128x128xf32>
    %cst_68 = arith.constant dense<0.000000e+00> : vector<64x128xf32>
    %115 = tpu.matmul %112, %114, %cst_68 {dimension_numbers = #tpu.dot_dimension_numbers<[1], [0], [0], [1], [0, 0, 1, 1], [], []>} : vector<64x128xf32>, vector<128x128xf32>, vector<64x128xf32> -> vector<64x128xf32>
    %116 = arith.addf %110, %115 : vector<64x128xf32>
    %117 = vector.extract_strided_slice %73 {offsets = [0, 2, 1, 0], sizes = [1, 8, 8, 128], strides = [1, 1, 1, 1]} : vector<1x10x10x128xf32> to vector<1x8x8x128xf32>
    %118 = vector.shape_cast %117 : vector<1x8x8x128xf32> to vector<64x128xf32>
    %c7_69 = arith.constant 7 : index
    %c0_70 = arith.constant 0 : index
    %c0_71 = arith.constant 0 : index
    %119 = vector.load %arg4[%c7_69, %c0_70, %c0_71] : memref<9x128x128xf32, #tpu.memory_space<vmem>>, vector<1x128x128xf32>
    %120 = vector.shape_cast %119 : vector<1x128x128xf32> to vector<128x128xf32>
    %cst_72 = arith.constant dense<0.000000e+00> : vector<64x128xf32>
    %121 = tpu.matmul %118, %120, %cst_72 {dimension_numbers = #tpu.dot_dimension_numbers<[1], [0], [0], [1], [0, 0, 1, 1], [], []>} : vector<64x128xf32>, vector<128x128xf32>, vector<64x128xf32> -> vector<64x128xf32>
    %122 = arith.addf %116, %121 : vector<64x128xf32>
    %123 = vector.extract_strided_slice %73 {offsets = [0, 2, 2, 0], sizes = [1, 8, 8, 128], strides = [1, 1, 1, 1]} : vector<1x10x10x128xf32> to vector<1x8x8x128xf32>
    %124 = vector.shape_cast %123 : vector<1x8x8x128xf32> to vector<64x128xf32>
    %c8_73 = arith.constant 8 : index
    %c0_74 = arith.constant 0 : index
    %c0_75 = arith.constant 0 : index
    %125 = vector.load %arg4[%c8_73, %c0_74, %c0_75] : memref<9x128x128xf32, #tpu.memory_space<vmem>>, vector<1x128x128xf32>
    %126 = vector.shape_cast %125 : vector<1x128x128xf32> to vector<128x128xf32>
    %cst_76 = arith.constant dense<0.000000e+00> : vector<64x128xf32>
    %127 = tpu.matmul %124, %126, %cst_76 {dimension_numbers = #tpu.dot_dimension_numbers<[1], [0], [0], [1], [0, 0, 1, 1], [], []>} : vector<64x128xf32>, vector<128x128xf32>, vector<64x128xf32> -> vector<64x128xf32>
    %128 = arith.addf %122, %127 : vector<64x128xf32>
    %c0_77 = arith.constant 0 : index
    %c0_78 = arith.constant 0 : index
    %129 = vector.load %arg5[%c0_77, %c0_78] : memref<1x128xf32, #tpu.memory_space<vmem>>, vector<1x128xf32>
    %130 = vector.broadcast %129 : vector<1x128xf32> to vector<64x128xf32>
    %131 = arith.addf %128, %130 : vector<64x128xf32>
    %cst_79 = arith.constant 0.000000e+00 : f32
    %132 = vector.broadcast %cst_79 : f32 to vector<64x128xf32>
    %133 = arith.maximumf %131, %132 : vector<64x128xf32>
    %c0_80 = arith.constant 0 : index
    %c0_81 = arith.constant 0 : index
    %134 = vector.load %arg6[%c0_80, %c0_81] : memref<64x128xf32, #tpu.memory_space<vmem>>, vector<64x128xf32>
    tpu.vector_store %arg6[%c0_80, %c0_81], %133 {strides = array<i32>} : memref<64x128xf32, #tpu.memory_space<vmem>>, vector<64x128xf32>,
    return
  }
  func.func @transform_0(%arg0: i32) -> (i32, i32, i32, i32) {
    %c0_i32 = arith.constant 0 : i32
    %c0_i32_0 = arith.constant 0 : i32
    %c0_i32_1 = arith.constant 0 : i32
    %c0_i32_2 = arith.constant 0 : i32
    return %arg0, %c0_i32, %c0_i32_0, %c0_i32_1 : i32, i32, i32, i32
  }
  func.func @transform_1(%arg0: i32) -> (i32, i32, i32) {
    %c0_i32 = arith.constant 0 : i32
    %c0_i32_0 = arith.constant 0 : i32
    %c0_i32_1 = arith.constant 0 : i32
    %c0_i32_2 = arith.constant 0 : i32
    return %c0_i32, %c0_i32_0, %c0_i32_1 : i32, i32, i32
  }
  func.func @transform_2(%arg0: i32) -> (i32, i32) {
    %c0_i32 = arith.constant 0 : i32
    %c0_i32_0 = arith.constant 0 : i32
    %c0_i32_1 = arith.constant 0 : i32
    return %c0_i32, %c0_i32_0 : i32, i32
  }
  func.func @transform_3(%arg0: i32) -> (i32, i32, i32) {
    %c0_i32 = arith.constant 0 : i32
    %c0_i32_0 = arith.constant 0 : i32
    %c0_i32_1 = arith.constant 0 : i32
    %c0_i32_2 = arith.constant 0 : i32
    return %c0_i32, %c0_i32_0, %c0_i32_1 : i32, i32, i32
  }
  func.func @transform_4(%arg0: i32) -> (i32, i32) {
    %c0_i32 = arith.constant 0 : i32
    %c0_i32_0 = arith.constant 0 : i32
    %c0_i32_1 = arith.constant 0 : i32
    return %c0_i32, %c0_i32_0 : i32, i32
  }
  func.func @transform_5(%arg0: i32) -> (i32, i32) {
    %c0_i32 = arith.constant 0 : i32
    %c0_i32_0 = arith.constant 0 : i32
    return %arg0, %c0_i32 : i32, i32
  }
}

</mosaic_0001>

<llo_original>
// kernel: tpu_custom_call.1
$region0: #{tpu_custom_call.1}
  #allocation0 [shape = 'u32[]', space=smem, size = 0x4, offset = 0x4, fixed_abs, tag = 'smem constant byte address 0x4 - core index']
  #allocation1 [shape = 'u32[72,128]{1,0:T(1,128)}', space=vmem, size = 0x9000, scoped, tag = 'internal scratch']
  %s0 = inlined_call_operand.vmem [shape: f32[2,16,16,4], index: 0, kind: input, shape index: {}]
  %s1 = inlined_call_operand.vmem [shape: f32[9,4,128], index: 1, kind: input, shape index: {}]
  %s2 = inlined_call_operand.vmem [shape: f32[1,128], index: 2, kind: input, shape index: {}]
  %s3 = inlined_call_operand.hbm [shape: f32[9,128,128], index: 3, kind: input, shape index: {}]
  %s4 = inlined_call_operand.vmem [shape: f32[1,128], index: 4, kind: input, shape index: {}]
  %s5 = inlined_call_operand.hbm [shape: f32[128,128], index: 5, kind: output, shape index: {}]
  %s6 = sld [smem:[#allocation0]]
  $region57: #{tpu_custom_call.1} parent=0
    _
  %s8 = ssub.s32 1, %s6
  %s9 = scalar_select 0, %s8, %s6
  $region1: #{tpu_custom_call.1} parent=0
    #allocation2 [shape = 'u8[589824]{0}', space=vmem, size = 0x90000, scoped, tag = 'input window, operand 3, single buffered']
    #allocation3 [shape = 's32[2]{0}', space=sflag, size = 0x8, scoped, tag = 'scoped memory for tpu_custom_call.1']
    #allocation4 [shape = 's32[2]{0}', space=sflag, size = 0x8, scoped, tag = 'scoped memory for tpu_custom_call.1']
    #allocation5 [shape = 'u8[65536]{0}', space=vmem, size = 0x10000, scoped, tag = 'output window, operand 0']
    %10 = vsyncpa [#allocation3], 0
    %11 = vsyncpa [#allocation4], 0
    %s12 = scalar_lea.sflag [#allocation4], 1
    %13 = vsyncpa %s12, 0
    loop: start=0, step=1, limit=4
    $region2: #{tpu_custom_call.1} parent=1 // loop_pre_header
      _
    $region3: #{tpu_custom_call.1} parent=1 // loop_header
      %s15 = sphi 0, %s19
      %p16 = scmp.ge.s32.totalorder %s15, 4
      %s25 = sphi 0, %s27
      %s28 = sphi 0, %s25
      %s29 = sphi 0, %s28
      %s45 = sphi 0, %s29
      %s49 = sphi 0, %s49
      %s51 = sphi 0, %s49
      %s52 = sphi 0, %s51
      %s66 = sphi 0, %s52
      %s70 = sphi 0, %s70
      %s72 = sphi 0, %s70
      %s73 = sphi 0, %s72
      %s87 = sphi 0, %s73
      %s91 = sphi 0, %s91
      %s93 = sphi 0, %s91
      %s94 = sphi 0, %s93
      %s108 = sphi 0, %s94
      %s112 = sphi 0, %s112
      %s114 = sphi 0, %s112
      %s115 = sphi 0, %s114
      %s129 = sphi 0, %s115
      %s135 = sphi 0, %s137
      %s138 = sphi 0, %s135
      %s139 = sphi 0, %s138
      %s155 = sphi 0, %s139
    $region4: #{tpu_custom_call.1} parent=1 // loop_header_branch
      %18 = sbr.rel (%p16) target = $region8
    $region5: #{tpu_custom_call.1} parent=1 // loop_body
      %s20 = ssub.s32 %s15, 1
      %s21 = ssub.s32 %s15, 2
      %s22 = sadd.s32 %s15, 1
      %s23 = ssub.s32 %s15, %s22
      %p24 = scmp.eq.s32.totalorder %s23, 0
      %s26 = sadd.s32 %s25, 1
      %s27 = scalar_select %p24, %s25, %s26
      %p30 = pneg %p24
      %p31 = scmp.eq.s32.totalorder %s15, 1
      %p32 = por %p30, %p31
      %p33 = scmp.ne.s32.totalorder %s25, %s28
      %p34 = scmp.eq.s32.totalorder %s15, 0
      %p35 = por %p33, %p34
      %p36 = scmp.ne.s32.totalorder %s25, %s28
      %p37 = scmp.eq.s32.totalorder %s20, 1
      %p38 = por %p36, %p37
      %p39 = scmp.ne.s32.totalorder %s28, %s29
      %p40 = scmp.eq.s32.totalorder %s20, 0
      %p41 = por %p39, %p40
      %p42 = scmp.ne.s32.totalorder %s28, %s29
      %p43 = scmp.eq.s32.totalorder %s21, 1
      %p44 = por %p42, %p43
      %p46 = scmp.ne.s32.totalorder %s29, %s45
      %p47 = scmp.eq.s32.totalorder %s21, 0
      %p48 = por %p46, %p47
      %s50 = sadd.s32 %s49, 1
      %p53 = scmp.eq.s32.totalorder %s15, 1
      %p54 = scmp.ne.s32.totalorder %s49, %s51
      %p55 = scmp.eq.s32.totalorder %s15, 0
      %p56 = por %p54, %p55
      %p57 = scmp.ne.s32.totalorder %s49, %s51
      %p58 = scmp.eq.s32.totalorder %s20, 1
      %p59 = por %p57, %p58
      %p60 = scmp.ne.s32.totalorder %s51, %s52
      %p61 = scmp.eq.s32.totalorder %s20, 0
      %p62 = por %p60, %p61
      %p63 = scmp.ne.s32.totalorder %s51, %s52
      %p64 = scmp.eq.s32.totalorder %s21, 1
      %p65 = por %p63, %p64
      %p67 = scmp.ne.s32.totalorder %s52, %s66
      %p68 = scmp.eq.s32.totalorder %s21, 0
      %p69 = por %p67, %p68
      %s71 = sadd.s32 %s70, 1
      %p74 = scmp.eq.s32.totalorder %s15, 1
      %p75 = scmp.ne.s32.totalorder %s70, %s72
      %p76 = scmp.eq.s32.totalorder %s15, 0
      %p77 = por %p75, %p76
      %p78 = scmp.ne.s32.totalorder %s70, %s72
      %p79 = scmp.eq.s32.totalorder %s20, 1
      %p80 = por %p78, %p79
      %p81 = scmp.ne.s32.totalorder %s72, %s73
      %p82 = scmp.eq.s32.totalorder %s20, 0
      %p83 = por %p81, %p82
      %p84 = scmp.ne.s32.totalorder %s72, %s73
      %p85 = scmp.eq.s32.totalorder %s21, 1
      %p86 = por %p84, %p85
      %p88 = scmp.ne.s32.totalorder %s73, %s87
      %p89 = scmp.eq.s32.totalorder %s21, 0
      %p90 = por %p88, %p89
      %s92 = sadd.s32 %s91, 1
      %p95 = scmp.eq.s32.totalorder %s15, 1
      %p96 = scmp.ne.s32.totalorder %s91, %s93
      %p97 = scmp.eq.s32.totalorder %s15, 0
      %p98 = por %p96, %p97
      %p99 = scmp.ne.s32.totalorder %s91, %s93
      %p100 = scmp.eq.s32.totalorder %s20, 1
      %p101 = por %p99, %p100
      %p102 = scmp.ne.s32.totalorder %s93, %s94
      %p103 = scmp.eq.s32.totalorder %s20, 0
      %p104 = por %p102, %p103
      %p105 = scmp.ne.s32.totalorder %s93, %s94
      %p106 = scmp.eq.s32.totalorder %s21, 1
      %p107 = por %p105, %p106
      %p109 = scmp.ne.s32.totalorder %s94, %s108
      %p110 = scmp.eq.s32.totalorder %s21, 0
      %p111 = por %p109, %p110
      %s113 = sadd.s32 %s112, 1
      %p116 = scmp.eq.s32.totalorder %s15, 1
      %p117 = scmp.ne.s32.totalorder %s112, %s114
      %p118 = scmp.eq.s32.totalorder %s15, 0
      %p119 = por %p117, %p118
      %p120 = scmp.ne.s32.totalorder %s112, %s114
      %p121 = scmp.eq.s32.totalorder %s20, 1
      %p122 = por %p120, %p121
      %p123 = scmp.ne.s32.totalorder %s114, %s115
      %p124 = scmp.eq.s32.totalorder %s20, 0
      %p125 = por %p123, %p124
      %p126 = scmp.ne.s32.totalorder %s114, %s115
      %p127 = scmp.eq.s32.totalorder %s21, 1
      %p128 = por %p126, %p127
      %p130 = scmp.ne.s32.totalorder %s115, %s129
      %p131 = scmp.eq.s32.totalorder %s21, 0
      %p132 = por %p130, %p131
      %s133 = ssub.s32 %s15, %s22
      %p134 = scmp.eq.s32.totalorder %s133, 0
      %s136 = sadd.s32 %s135, 1
      %s137 = scalar_select %p134, %s135, %s136
      %p140 = pneg %p134
      %p141 = scmp.eq.s32.totalorder %s15, 1
      %p142 = por %p140, %p141
      %p143 = scmp.ne.s32.totalorder %s135, %s138
      %p144 = scmp.eq.s32.totalorder %s15, 0
      %p145 = por %p143, %p144
      %p146 = scmp.ne.s32.totalorder %s135, %s138
      %p147 = scmp.eq.s32.totalorder %s20, 1
      %p148 = por %p146, %p147
      %p149 = scmp.ne.s32.totalorder %s138, %s139
      %p150 = scmp.eq.s32.totalorder %s20, 0
      %p151 = por %p149, %p150
      %p152 = scmp.ne.s32.totalorder %s138, %s139
      %p153 = scmp.eq.s32.totalorder %s21, 1
      %p154 = por %p152, %p153
      %p156 = scmp.ne.s32.totalorder %s139, %s155
      %p157 = scmp.eq.s32.totalorder %s21, 0
      %p158 = por %p156, %p157
      %p159 = scmp.le.s32.totalorder 1, %s15
      %p160 = scmp.lt.s32.totalorder %s15, 3
      %p161 = pnand %p159, %p160
      %p162 = pneg %p161
      // Predicated region
      $region9: #{tpu_custom_call.1} parent=5 // pred_check
        _
      $region10: #{tpu_custom_call.1} parent=5 // pred_check_branch
        %164 = sbr.rel (%p161) target = $region12
      $region11: #{tpu_custom_call.1} parent=5 // pred_region
        %s165 = ssub.s32 %s15, 1
        // Predicated region
        $region13: #{tpu_custom_call.1} parent=11 // pred_check
          %p166 = pneg %p62
        $region14: #{tpu_custom_call.1} parent=11 // pred_check_branch
          %168 = sbr.rel (%p166) target = $region16
        $region15: #{tpu_custom_call.1} parent=11 // pred_region
          _
        $region16: #{tpu_custom_call.1} parent=11 // pred_fallthru
          _
        // Predicated region
        $region17: #{tpu_custom_call.1} parent=11 // pred_check
          %p169 = pneg %p83
        $region18: #{tpu_custom_call.1} parent=11 // pred_check_branch
          %171 = sbr.rel (%p169) target = $region20
        $region19: #{tpu_custom_call.1} parent=11 // pred_region
          _
        $region20: #{tpu_custom_call.1} parent=11 // pred_fallthru
          _
        // Predicated region
        $region21: #{tpu_custom_call.1} parent=11 // pred_check
          %p172 = pneg %p104
        $region22: #{tpu_custom_call.1} parent=11 // pred_check_branch
          %174 = sbr.rel (%p172) target = $region24
        $region23: #{tpu_custom_call.1} parent=11 // pred_region
          %176 = vsyncadd [#allocation3], 0
          %s177 = sshll.u32 %s3, 4
          %s178 = int_to_ptr.hbm [resolvable:$true] %s177
          %s179 = sshll.u32 [#allocation2], 4
          %s180 = int_to_ptr.vmem [resolvable:$true] %s179
          %185 = dma.hbm_to_vmem [thread:$0]  %s178, 18432, %s180, [#allocation3], 128, 128, 8
        $region24: #{tpu_custom_call.1} parent=11 // pred_fallthru
          _
        // Predicated region
        $region25: #{tpu_custom_call.1} parent=11 // pred_check
          %p186 = pneg %p125
        $region26: #{tpu_custom_call.1} parent=11 // pred_check_branch
          %188 = sbr.rel (%p186) target = $region28
        $region27: #{tpu_custom_call.1} parent=11 // pred_region
          _
        $region28: #{tpu_custom_call.1} parent=11 // pred_fallthru
          _
      $region12: #{tpu_custom_call.1} parent=5 // pred_fallthru
        _
      %p189 = scmp.lt.s32.totalorder %s15, 2
      // Predicated region
      $region29: #{tpu_custom_call.1} parent=5 // pred_check
        %p190 = pneg %p189
      $region30: #{tpu_custom_call.1} parent=5 // pred_check_branch
        %192 = sbr.rel (%p190) target = $region32
      $region31: #{tpu_custom_call.1} parent=5 // pred_region
        // Predicated region
        $region33: #{tpu_custom_call.1} parent=31 // pred_check
          %p193 = pneg %p35
        $region34: #{tpu_custom_call.1} parent=31 // pred_check_branch
          %195 = sbr.rel (%p193) target = $region36
        $region35: #{tpu_custom_call.1} parent=31 // pred_region
          %p196 = scmp.lt.s32.totalorder %s15, 1
          %s197 = scalar_select %p196, %s15, 1
          %s198 = smul.addr %s197, 32
          %s199 = smul.addr %s198, 8
          %s200 = scalar_lea.vmem %s0, %s199
        $region36: #{tpu_custom_call.1} parent=31 // pred_fallthru
          _
      $region32: #{tpu_custom_call.1} parent=5 // pred_fallthru
        _
      %p201 = scmp.le.s32.totalorder 1, %s15
      %p202 = scmp.lt.s32.totalorder %s15, 3
      %p203 = pnand %p201, %p202
      %p204 = pneg %p203
      // Predicated region
      $region37: #{tpu_custom_call.1} parent=5 // pred_check
        _
      $region38: #{tpu_custom_call.1} parent=5 // pred_check_branch
        %206 = sbr.rel (%p203) target = $region40
      $region39: #{tpu_custom_call.1} parent=5 // pred_region
        %s207 = ssub.s32 %s15, 1
        // Predicated region
        $region41: #{tpu_custom_call.1} parent=39 // pred_check
          %p208 = pneg %p104
        $region42: #{tpu_custom_call.1} parent=39 // pred_check_branch
          %210 = sbr.rel (%p208) target = $region44
        $region43: #{tpu_custom_call.1} parent=39 // pred_region
          %212 = dma.done [#allocation3], 18432
        $region44: #{tpu_custom_call.1} parent=39 // pred_fallthru
          _
        %p213 = scmp.lt.s32.totalorder %s20, 1
        %s214 = scalar_select %p213, %s20, 1
        %s215 = smul.addr %s214, 32
        %s216 = smul.addr %s215, 8
        %s217 = scalar_lea.vmem %s0, %s216
        %p218 = pneg %p41
        %p219 = pneg %p38
        %p220 = pneg %p62
        %p221 = pneg %p59
        %p222 = pneg %p83
        %p223 = pneg %p80
        %p224 = pneg %p104
        %p225 = pneg %p101
        %p226 = pneg %p125
        %p227 = pneg %p122
        %p228 = pneg %p151
        %p229 = pneg %p148
        %s230 = sand.u32 %s138, 1
        %s231 = scalar_lea.sflag [#allocation4], %s230
        %s232 = sand.u32 %s138, 1
        %s233 = smul.addr %s232, 64
        %s234 = scalar_lea.vmem [#allocation5], %s233
        %p235 = scmp.lt.s32.totalorder %s20, 1
        %s236 = scalar_select %p235, %s20, 1
        %s237 = smul.addr %s236, 32
        %s238 = smul.addr %s237, 8
        %s239 = scalar_lea.vmem %s0, %s238
        %s240 = smul.u32 8, %s20
        %v241 = vld [vmem:[%s239] sm:$0xff]
        %v242 = vld [vmem:[%s239 + $0x8] sm:$0xff]
        %v243 = vld [vmem:[%s239 + $0x10] sm:$0xff]
        %v244 = vld [vmem:[%s239 + $0x18] sm:$0xff]
        %v245 = vld [vmem:[%s239 + $0x20] sm:$0xff]
        %v246 = vld [vmem:[%s239 + $0x28] sm:$0xff]
        %v247 = vld [vmem:[%s239 + $0x30] sm:$0xff]
        %v248 = vld [vmem:[%s239 + $0x38] sm:$0xff]
        %v249 = vld [vmem:[%s239 + $0x40] sm:$0xff]
        %v250 = vld [vmem:[%s239 + $0x48] sm:$0xff]
        %v251 = vld [vmem:[%s239 + $0x50] sm:$0xff]
        %v252 = vld [vmem:[%s239 + $0x58] sm:$0xff]
        %v253 = vld [vmem:[%s239 + $0x60] sm:$0xff]
        %v254 = vld [vmem:[%s239 + $0x68] sm:$0xff]
        %v255 = vld [vmem:[%s239 + $0x70] sm:$0xff]
        %v256 = vld [vmem:[%s239 + $0x78] sm:$0xff]
        %v257 = vld [vmem:[%s239 + $0x80] sm:$0xff]
        %v258 = vld [vmem:[%s239 + $0x88] sm:$0xff]
        %v259 = vld [vmem:[%s239 + $0x90] sm:$0xff]
        %v260 = vld [vmem:[%s239 + $0x98] sm:$0xff]
        %v261 = vld [vmem:[%s239 + $0xa0] sm:$0xff]
        %v262 = vld [vmem:[%s239 + $0xa8] sm:$0xff]
        %v263 = vld [vmem:[%s239 + $0xb0] sm:$0xff]
        %v264 = vld [vmem:[%s239 + $0xb8] sm:$0xff]
        %v265 = vld [vmem:[%s239 + $0xc0] sm:$0xff]
        %v266 = vld [vmem:[%s239 + $0xc8] sm:$0xff]
        %v267 = vld [vmem:[%s239 + $0xd0] sm:$0xff]
        %v268 = vld [vmem:[%s239 + $0xd8] sm:$0xff]
        %v269 = vld [vmem:[%s239 + $0xe0] sm:$0xff]
        %v270 = vld [vmem:[%s239 + $0xe8] sm:$0xff]
        %v271 = vld [vmem:[%s239 + $0xf0] sm:$0xff]
        %v272 = vld [vmem:[%s239 + $0xf8] sm:$0xff]
        %v305 = vrot.slane %v241, 2
        %v306 = vrot.slane %v241, 4
        %v307 = vrot.slane %v241, 6
        %v308 = vrot.slane %v242, 2
        %v309 = vrot.slane %v242, 4
        %v310 = vrot.slane %v242, 6
        %v311 = vrot.slane %v243, 2
        %v312 = vrot.slane %v243, 4
        %v313 = vrot.slane %v243, 6
        %v314 = vrot.slane %v244, 2
        %v315 = vrot.slane %v244, 4
        %v316 = vrot.slane %v244, 6
        %v317 = vrot.slane %v245, 2
        %v318 = vrot.slane %v245, 4
        %v319 = vrot.slane %v245, 6
        %v320 = vrot.slane %v246, 2
        %v321 = vrot.slane %v246, 4
        %v322 = vrot.slane %v246, 6
        %v323 = vrot.slane %v247, 2
        %v324 = vrot.slane %v247, 4
        %v325 = vrot.slane %v247, 6
        %v326 = vrot.slane %v248, 2
        %v327 = vrot.slane %v248, 4
        %v328 = vrot.slane %v248, 6
        %v329 = vrot.slane %v249, 2
        %v330 = vrot.slane %v249, 4
        %v331 = vrot.slane %v249, 6
        %v332 = vrot.slane %v250, 2
        %v333 = vrot.slane %v250, 4
        %v334 = vrot.slane %v250, 6
        %v335 = vrot.slane %v251, 2
        %v336 = vrot.slane %v251, 4
        %v337 = vrot.slane %v251, 6
        %v338 = vrot.slane %v252, 2
        %v339 = vrot.slane %v252, 4
        %v340 = vrot.slane %v252, 6
        %v341 = vrot.slane %v253, 2
        %v342 = vrot.slane %v253, 4
        %v343 = vrot.slane %v253, 6
        %v344 = vrot.slane %v254, 2
        %v345 = vrot.slane %v254, 4
        %v346 = vrot.slane %v254, 6
        %v347 = vrot.slane %v255, 2
        %v348 = vrot.slane %v255, 4
        %v349 = vrot.slane %v255, 6
        %v350 = vrot.slane %v256, 2
        %v351 = vrot.slane %v256, 4
        %v352 = vrot.slane %v256, 6
        %v353 = vrot.slane %v257, 2
        %v354 = vrot.slane %v257, 4
        %v355 = vrot.slane %v257, 6
        %v356 = vrot.slane %v258, 2
        %v357 = vrot.slane %v258, 4
        %v358 = vrot.slane %v258, 6
        %v359 = vrot.slane %v259, 2
        %v360 = vrot.slane %v259, 4
        %v361 = vrot.slane %v259, 6
        %v362 = vrot.slane %v260, 2
        %v363 = vrot.slane %v260, 4
        %v364 = vrot.slane %v260, 6
        %v365 = vrot.slane %v261, 2
        %v366 = vrot.slane %v261, 4
        %v367 = vrot.slane %v261, 6
        %v368 = vrot.slane %v262, 2
        %v369 = vrot.slane %v262, 4
        %v370 = vrot.slane %v262, 6
        %v371 = vrot.slane %v263, 2
        %v372 = vrot.slane %v263, 4
        %v373 = vrot.slane %v263, 6
        %v374 = vrot.slane %v264, 2
        %v375 = vrot.slane %v264, 4
        %v376 = vrot.slane %v264, 6
        %v377 = vrot.slane %v265, 2
        %v378 = vrot.slane %v265, 4
        %v379 = vrot.slane %v265, 6
        %v380 = vrot.slane %v266, 2
        %v381 = vrot.slane %v266, 4
        %v382 = vrot.slane %v266, 6
        %v383 = vrot.slane %v267, 2
        %v384 = vrot.slane %v267, 4
        %v385 = vrot.slane %v267, 6
        %v386 = vrot.slane %v268, 2
        %v387 = vrot.slane %v268, 4
        %v388 = vrot.slane %v268, 6
        %v389 = vrot.slane %v269, 2
        %v390 = vrot.slane %v269, 4
        %v391 = vrot.slane %v269, 6
        %v392 = vrot.slane %v270, 2
        %v393 = vrot.slane %v270, 4
        %v394 = vrot.slane %v270, 6
        %v395 = vrot.slane %v271, 2
        %v396 = vrot.slane %v271, 4
        %v397 = vrot.slane %v271, 6
        %v398 = vrot.slane %v272, 2
        %v399 = vrot.slane %v272, 4
        %v400 = vrot.slane %v272, 6
        %vm497 = vcmask 25600
        %v498 = vsel %vm497, %v241, -inf
        %v499 = vrot.slane %v498, 4
        %v500 = vmax.f32 %v498, %v499
        %v501 = vrot.slane %v500, 2
        %v502 = vmax.f32 %v500, %v501
        %v503 = vrot.slane %v502, 1
        %v504 = vmax.f32 %v502, %v503
        %v505 = vsel %vm497, %v305, -inf
        %v506 = vrot.slane %v505, 4
        %v507 = vmax.f32 %v505, %v506
        %v508 = vrot.slane %v507, 2
        %v509 = vmax.f32 %v507, %v508
        %v510 = vrot.slane %v509, 1
        %v511 = vmax.f32 %v509, %v510
        %v512 = vsel %vm497, %v306, -inf
        %v513 = vrot.slane %v512, 4
        %v514 = vmax.f32 %v512, %v513
        %v515 = vrot.slane %v514, 2
        %v516 = vmax.f32 %v514, %v515
        %v517 = vrot.slane %v516, 1
        %v518 = vmax.f32 %v516, %v517
        %v519 = vsel %vm497, %v307, -inf
        %v520 = vrot.slane %v519, 4
        %v521 = vmax.f32 %v519, %v520
        %v522 = vrot.slane %v521, 2
        %v523 = vmax.f32 %v521, %v522
        %v524 = vrot.slane %v523, 1
        %v525 = vmax.f32 %v523, %v524
        %v526 = vsel %vm497, %v242, -inf
        %v527 = vrot.slane %v526, 4
        %v528 = vmax.f32 %v526, %v527
        %v529 = vrot.slane %v528, 2
        %v530 = vmax.f32 %v528, %v529
        %v531 = vrot.slane %v530, 1
        %v532 = vmax.f32 %v530, %v531
        %v533 = vsel %vm497, %v308, -inf
        %v534 = vrot.slane %v533, 4
        %v535 = vmax.f32 %v533, %v534
        %v536 = vrot.slane %v535, 2
        %v537 = vmax.f32 %v535, %v536
        %v538 = vrot.slane %v537, 1
        %v539 = vmax.f32 %v537, %v538
        %v540 = vsel %vm497, %v309, -inf
        %v541 = vrot.slane %v540, 4
        %v542 = vmax.f32 %v540, %v541
        %v543 = vrot.slane %v542, 2
        %v544 = vmax.f32 %v542, %v543
        %v545 = vrot.slane %v544, 1
        %v546 = vmax.f32 %v544, %v545
        %v547 = vsel %vm497, %v310, -inf
        %v548 = vrot.slane %v547, 4
        %v549 = vmax.f32 %v547, %v548
        %v550 = vrot.slane %v549, 2
        %v551 = vmax.f32 %v549, %v550
        %v552 = vrot.slane %v551, 1
        %v553 = vmax.f32 %v551, %v552
        %v554 = vsel %vm497, %v243, -inf
        %v555 = vrot.slane %v554, 4
        %v556 = vmax.f32 %v554, %v555
        %v557 = vrot.slane %v556, 2
        %v558 = vmax.f32 %v556, %v557
        %v559 = vrot.slane %v558, 1
        %v560 = vmax.f32 %v558, %v559
        %v561 = vsel %vm497, %v311, -inf
        %v562 = vrot.slane %v561, 4
        %v563 = vmax.f32 %v561, %v562
        %v564 = vrot.slane %v563, 2
        %v565 = vmax.f32 %v563, %v564
        %v566 = vrot.slane %v565, 1
        %v567 = vmax.f32 %v565, %v566
        %v568 = vsel %vm497, %v312, -inf
        %v569 = vrot.slane %v568, 4
        %v570 = vmax.f32 %v568, %v569
        %v571 = vrot.slane %v570, 2
        %v572 = vmax.f32 %v570, %v571
        %v573 = vrot.slane %v572, 1
        %v574 = vmax.f32 %v572, %v573
        %v575 = vsel %vm497, %v313, -inf
        %v576 = vrot.slane %v575, 4
        %v577 = vmax.f32 %v575, %v576
        %v578 = vrot.slane %v577, 2
        %v579 = vmax.f32 %v577, %v578
        %v580 = vrot.slane %v579, 1
        %v581 = vmax.f32 %v579, %v580
        %v582 = vsel %vm497, %v244, -inf
        %v583 = vrot.slane %v582, 4
        %v584 = vmax.f32 %v582, %v583
        %v585 = vrot.slane %v584, 2
        %v586 = vmax.f32 %v584, %v585
        %v587 = vrot.slane %v586, 1
        %v588 = vmax.f32 %v586, %v587
        %v589 = vsel %vm497, %v314, -inf
        %v590 = vrot.slane %v589, 4
        %v591 = vmax.f32 %v589, %v590
        %v592 = vrot.slane %v591, 2
        %v593 = vmax.f32 %v591, %v592
        %v594 = vrot.slane %v593, 1
        %v595 = vmax.f32 %v593, %v594
        %v596 = vsel %vm497, %v315, -inf
        %v597 = vrot.slane %v596, 4
        %v598 = vmax.f32 %v596, %v597
        %v599 = vrot.slane %v598, 2
        %v600 = vmax.f32 %v598, %v599
        %v601 = vrot.slane %v600, 1
        %v602 = vmax.f32 %v600, %v601
        %v603 = vsel %vm497, %v316, -inf
        %v604 = vrot.slane %v603, 4
        %v605 = vmax.f32 %v603, %v604
        %v606 = vrot.slane %v605, 2
        %v607 = vmax.f32 %v605, %v606
        %v608 = vrot.slane %v607, 1
        %v609 = vmax.f32 %v607, %v608
        %v610 = vsel %vm497, %v245, -inf
        %v611 = vrot.slane %v610, 4
        %v612 = vmax.f32 %v610, %v611
        %v613 = vrot.slane %v612, 2
        %v614 = vmax.f32 %v612, %v613
        %v615 = vrot.slane %v614, 1
        %v616 = vmax.f32 %v614, %v615
        %v617 = vsel %vm497, %v317, -inf
        %v618 = vrot.slane %v617, 4
        %v619 = vmax.f32 %v617, %v618
        %v620 = vrot.slane %v619, 2
        %v621 = vmax.f32 %v619, %v620
        %v622 = vrot.slane %v621, 1
        %v623 = vmax.f32 %v621, %v622
        %v624 = vsel %vm497, %v318, -inf
        %v625 = vrot.slane %v624, 4
        %v626 = vmax.f32 %v624, %v625
        %v627 = vrot.slane %v626, 2
        %v628 = vmax.f32 %v626, %v627
        %v629 = vrot.slane %v628, 1
        %v630 = vmax.f32 %v628, %v629
        %v631 = vsel %vm497, %v319, -inf
        %v632 = vrot.slane %v631, 4
        %v633 = vmax.f32 %v631, %v632
        %v634 = vrot.slane %v633, 2
        %v635 = vmax.f32 %v633, %v634
        %v636 = vrot.slane %v635, 1
        %v637 = vmax.f32 %v635, %v636
        %v638 = vsel %vm497, %v246, -inf
        %v639 = vrot.slane %v638, 4
        %v640 = vmax.f32 %v638, %v639
        %v641 = vrot.slane %v640, 2
        %v642 = vmax.f32 %v640, %v641
        %v643 = vrot.slane %v642, 1
        %v644 = vmax.f32 %v642, %v643
        %v645 = vsel %vm497, %v320, -inf
        %v646 = vrot.slane %v645, 4
        %v647 = vmax.f32 %v645, %v646
        %v648 = vrot.slane %v647, 2
        %v649 = vmax.f32 %v647, %v648
        %v650 = vrot.slane %v649, 1
        %v651 = vmax.f32 %v649, %v650
        %v652 = vsel %vm497, %v321, -inf
        %v653 = vrot.slane %v652, 4
        %v654 = vmax.f32 %v652, %v653
        %v655 = vrot.slane %v654, 2
        %v656 = vmax.f32 %v654, %v655
        %v657 = vrot.slane %v656, 1
        %v658 = vmax.f32 %v656, %v657
        %v659 = vsel %vm497, %v322, -inf
        %v660 = vrot.slane %v659, 4
        %v661 = vmax.f32 %v659, %v660
        %v662 = vrot.slane %v661, 2
        %v663 = vmax.f32 %v661, %v662
        %v664 = vrot.slane %v663, 1
        %v665 = vmax.f32 %v663, %v664
        %v666 = vsel %vm497, %v247, -inf
        %v667 = vrot.slane %v666, 4
        %v668 = vmax.f32 %v666, %v667
        %v669 = vrot.slane %v668, 2
        %v670 = vmax.f32 %v668, %v669
        %v671 = vrot.slane %v670, 1
        %v672 = vmax.f32 %v670, %v671
        %v673 = vsel %vm497, %v323, -inf
        %v674 = vrot.slane %v673, 4
        %v675 = vmax.f32 %v673, %v674
        %v676 = vrot.slane %v675, 2
        %v677 = vmax.f32 %v675, %v676
        %v678 = vrot.slane %v677, 1
        %v679 = vmax.f32 %v677, %v678
        %v680 = vsel %vm497, %v324, -inf
        %v681 = vrot.slane %v680, 4
        %v682 = vmax.f32 %v680, %v681
        %v683 = vrot.slane %v682, 2
        %v684 = vmax.f32 %v682, %v683
        %v685 = vrot.slane %v684, 1
        %v686 = vmax.f32 %v684, %v685
        %v687 = vsel %vm497, %v325, -inf
        %v688 = vrot.slane %v687, 4
        %v689 = vmax.f32 %v687, %v688
        %v690 = vrot.slane %v689, 2
        %v691 = vmax.f32 %v689, %v690
        %v692 = vrot.slane %v691, 1
        %v693 = vmax.f32 %v691, %v692
        %v694 = vsel %vm497, %v248, -inf
        %v695 = vrot.slane %v694, 4
        %v696 = vmax.f32 %v694, %v695
        %v697 = vrot.slane %v696, 2
        %v698 = vmax.f32 %v696, %v697
        %v699 = vrot.slane %v698, 1
        %v700 = vmax.f32 %v698, %v699
        %v701 = vsel %vm497, %v326, -inf
        %v702 = vrot.slane %v701, 4
        %v703 = vmax.f32 %v701, %v702
        %v704 = vrot.slane %v703, 2
        %v705 = vmax.f32 %v703, %v704
        %v706 = vrot.slane %v705, 1
        %v707 = vmax.f32 %v705, %v706
        %v708 = vsel %vm497, %v327, -inf
        %v709 = vrot.slane %v708, 4
        %v710 = vmax.f32 %v708, %v709
        %v711 = vrot.slane %v710, 2
        %v712 = vmax.f32 %v710, %v711
        %v713 = vrot.slane %v712, 1
        %v714 = vmax.f32 %v712, %v713
        %v715 = vsel %vm497, %v328, -inf
        %v716 = vrot.slane %v715, 4
        %v717 = vmax.f32 %v715, %v716
        %v718 = vrot.slane %v717, 2
        %v719 = vmax.f32 %v717, %v718
        %v720 = vrot.slane %v719, 1
        %v721 = vmax.f32 %v719, %v720
        %v722 = vsel %vm497, %v249, -inf
        %v723 = vrot.slane %v722, 4
        %v724 = vmax.f32 %v722, %v723
        %v725 = vrot.slane %v724, 2
        %v726 = vmax.f32 %v724, %v725
        %v727 = vrot.slane %v726, 1
        %v728 = vmax.f32 %v726, %v727
        %v729 = vsel %vm497, %v329, -inf
        %v730 = vrot.slane %v729, 4
        %v731 = vmax.f32 %v729, %v730
        %v732 = vrot.slane %v731, 2
        %v733 = vmax.f32 %v731, %v732
        %v734 = vrot.slane %v733, 1
        %v735 = vmax.f32 %v733, %v734
        %v736 = vsel %vm497, %v330, -inf
        %v737 = vrot.slane %v736, 4
        %v738 = vmax.f32 %v736, %v737
        %v739 = vrot.slane %v738, 2
        %v740 = vmax.f32 %v738, %v739
        %v741 = vrot.slane %v740, 1
        %v742 = vmax.f32 %v740, %v741
        %v743 = vsel %vm497, %v331, -inf
        %v744 = vrot.slane %v743, 4
        %v745 = vmax.f32 %v743, %v744
        %v746 = vrot.slane %v745, 2
        %v747 = vmax.f32 %v745, %v746
        %v748 = vrot.slane %v747, 1
        %v749 = vmax.f32 %v747, %v748
        %v750 = vsel %vm497, %v250, -inf
        %v751 = vrot.slane %v750, 4
        %v752 = vmax.f32 %v750, %v751
        %v753 = vrot.slane %v752, 2
        %v754 = vmax.f32 %v752, %v753
        %v755 = vrot.slane %v754, 1
        %v756 = vmax.f32 %v754, %v755
        %v757 = vsel %vm497, %v332, -inf
        %v758 = vrot.slane %v757, 4
        %v759 = vmax.f32 %v757, %v758
        %v760 = vrot.slane %v759, 2
        %v761 = vmax.f32 %v759, %v760
        %v762 = vrot.slane %v761, 1
        %v763 = vmax.f32 %v761, %v762
        %v764 = vsel %vm497, %v333, -inf
        %v765 = vrot.slane %v764, 4
        %v766 = vmax.f32 %v764, %v765
        %v767 = vrot.slane %v766, 2
        %v768 = vmax.f32 %v766, %v767
        %v769 = vrot.slane %v768, 1
        %v770 = vmax.f32 %v768, %v769
        %v771 = vsel %vm497, %v334, -inf
        %v772 = vrot.slane %v771, 4
        %v773 = vmax.f32 %v771, %v772
        %v774 = vrot.slane %v773, 2
        %v775 = vmax.f32 %v773, %v774
        %v776 = vrot.slane %v775, 1
        %v777 = vmax.f32 %v775, %v776
        %v778 = vsel %vm497, %v251, -inf
        %v779 = vrot.slane %v778, 4
        %v780 = vmax.f32 %v778, %v779
        %v781 = vrot.slane %v780, 2
        %v782 = vmax.f32 %v780, %v781
        %v783 = vrot.slane %v782, 1
        %v784 = vmax.f32 %v782, %v783
        %v785 = vsel %vm497, %v335, -inf
        %v786 = vrot.slane %v785, 4
        %v787 = vmax.f32 %v785, %v786
        %v788 = vrot.slane %v787, 2
        %v789 = vmax.f32 %v787, %v788
        %v790 = vrot.slane %v789, 1
        %v791 = vmax.f32 %v789, %v790
        %v792 = vsel %vm497, %v336, -inf
        %v793 = vrot.slane %v792, 4
        %v794 = vmax.f32 %v792, %v793
        %v795 = vrot.slane %v794, 2
        %v796 = vmax.f32 %v794, %v795
        %v797 = vrot.slane %v796, 1
        %v798 = vmax.f32 %v796, %v797
        %v799 = vsel %vm497, %v337, -inf
        %v800 = vrot.slane %v799, 4
        %v801 = vmax.f32 %v799, %v800
        %v802 = vrot.slane %v801, 2
        %v803 = vmax.f32 %v801, %v802
        %v804 = vrot.slane %v803, 1
        %v805 = vmax.f32 %v803, %v804
        %v806 = vsel %vm497, %v252, -inf
        %v807 = vrot.slane %v806, 4
        %v808 = vmax.f32 %v806, %v807
        %v809 = vrot.slane %v808, 2
        %v810 = vmax.f32 %v808, %v809
        %v811 = vrot.slane %v810, 1
        %v812 = vmax.f32 %v810, %v811
        %v813 = vsel %vm497, %v338, -inf
        %v814 = vrot.slane %v813, 4
        %v815 = vmax.f32 %v813, %v814
        %v816 = vrot.slane %v815, 2
        %v817 = vmax.f32 %v815, %v816
        %v818 = vrot.slane %v817, 1
        %v819 = vmax.f32 %v817, %v818
        %v820 = vsel %vm497, %v339, -inf
        %v821 = vrot.slane %v820, 4
        %v822 = vmax.f32 %v820, %v821
        %v823 = vrot.slane %v822, 2
        %v824 = vmax.f32 %v822, %v823
        %v825 = vrot.slane %v824, 1
        %v826 = vmax.f32 %v824, %v825
        %v827 = vsel %vm497, %v340, -inf
        %v828 = vrot.slane %v827, 4
        %v829 = vmax.f32 %v827, %v828
        %v830 = vrot.slane %v829, 2
        %v831 = vmax.f32 %v829, %v830
        %v832 = vrot.slane %v831, 1
        %v833 = vmax.f32 %v831, %v832
        %v834 = vsel %vm497, %v253, -inf
        %v835 = vrot.slane %v834, 4
        %v836 = vmax.f32 %v834, %v835
        %v837 = vrot.slane %v836, 2
        %v838 = vmax.f32 %v836, %v837
        %v839 = vrot.slane %v838, 1
        %v840 = vmax.f32 %v838, %v839
        %v841 = vsel %vm497, %v341, -inf
        %v842 = vrot.slane %v841, 4
        %v843 = vmax.f32 %v841, %v842
        %v844 = vrot.slane %v843, 2
        %v845 = vmax.f32 %v843, %v844
        %v846 = vrot.slane %v845, 1
        %v847 = vmax.f32 %v845, %v846
        %v848 = vsel %vm497, %v342, -inf
        %v849 = vrot.slane %v848, 4
        %v850 = vmax.f32 %v848, %v849
        %v851 = vrot.slane %v850, 2
        %v852 = vmax.f32 %v850, %v851
        %v853 = vrot.slane %v852, 1
        %v854 = vmax.f32 %v852, %v853
        %v855 = vsel %vm497, %v343, -inf
        %v856 = vrot.slane %v855, 4
        %v857 = vmax.f32 %v855, %v856
        %v858 = vrot.slane %v857, 2
        %v859 = vmax.f32 %v857, %v858
        %v860 = vrot.slane %v859, 1
        %v861 = vmax.f32 %v859, %v860
        %v862 = vsel %vm497, %v254, -inf
        %v863 = vrot.slane %v862, 4
        %v864 = vmax.f32 %v862, %v863
        %v865 = vrot.slane %v864, 2
        %v866 = vmax.f32 %v864, %v865
        %v867 = vrot.slane %v866, 1
        %v868 = vmax.f32 %v866, %v867
        %v869 = vsel %vm497, %v344, -inf
        %v870 = vrot.slane %v869, 4
        %v871 = vmax.f32 %v869, %v870
        %v872 = vrot.slane %v871, 2
        %v873 = vmax.f32 %v871, %v872
        %v874 = vrot.slane %v873, 1
        %v875 = vmax.f32 %v873, %v874
        %v876 = vsel %vm497, %v345, -inf
        %v877 = vrot.slane %v876, 4
        %v878 = vmax.f32 %v876, %v877
        %v879 = vrot.slane %v878, 2
        %v880 = vmax.f32 %v878, %v879
        %v881 = vrot.slane %v880, 1
        %v882 = vmax.f32 %v880, %v881
        %v883 = vsel %vm497, %v346, -inf
        %v884 = vrot.slane %v883, 4
        %v885 = vmax.f32 %v883, %v884
        %v886 = vrot.slane %v885, 2
        %v887 = vmax.f32 %v885, %v886
        %v888 = vrot.slane %v887, 1
        %v889 = vmax.f32 %v887, %v888
        %v890 = vsel %vm497, %v255, -inf
        %v891 = vrot.slane %v890, 4
        %v892 = vmax.f32 %v890, %v891
        %v893 = vrot.slane %v892, 2
        %v894 = vmax.f32 %v892, %v893
        %v895 = vrot.slane %v894, 1
        %v896 = vmax.f32 %v894, %v895
        %v897 = vsel %vm497, %v347, -inf
        %v898 = vrot.slane %v897, 4
        %v899 = vmax.f32 %v897, %v898
        %v900 = vrot.slane %v899, 2
        %v901 = vmax.f32 %v899, %v900
        %v902 = vrot.slane %v901, 1
        %v903 = vmax.f32 %v901, %v902
        %v904 = vsel %vm497, %v348, -inf
        %v905 = vrot.slane %v904, 4
        %v906 = vmax.f32 %v904, %v905
        %v907 = vrot.slane %v906, 2
        %v908 = vmax.f32 %v906, %v907
        %v909 = vrot.slane %v908, 1
        %v910 = vmax.f32 %v908, %v909
        %v911 = vsel %vm497, %v349, -inf
        %v912 = vrot.slane %v911, 4
        %v913 = vmax.f32 %v911, %v912
        %v914 = vrot.slane %v913, 2
        %v915 = vmax.f32 %v913, %v914
        %v916 = vrot.slane %v915, 1
        %v917 = vmax.f32 %v915, %v916
        %v918 = vsel %vm497, %v256, -inf
        %v919 = vrot.slane %v918, 4
        %v920 = vmax.f32 %v918, %v919
        %v921 = vrot.slane %v920, 2
        %v922 = vmax.f32 %v920, %v921
        %v923 = vrot.slane %v922, 1
        %v924 = vmax.f32 %v922, %v923
        %v925 = vsel %vm497, %v350, -inf
        %v926 = vrot.slane %v925, 4
        %v927 = vmax.f32 %v925, %v926
        %v928 = vrot.slane %v927, 2
        %v929 = vmax.f32 %v927, %v928
        %v930 = vrot.slane %v929, 1
        %v931 = vmax.f32 %v929, %v930
        %v932 = vsel %vm497, %v351, -inf
        %v933 = vrot.slane %v932, 4
        %v934 = vmax.f32 %v932, %v933
        %v935 = vrot.slane %v934, 2
        %v936 = vmax.f32 %v934, %v935
        %v937 = vrot.slane %v936, 1
        %v938 = vmax.f32 %v936, %v937
        %v939 = vsel %vm497, %v352, -inf
        %v940 = vrot.slane %v939, 4
        %v941 = vmax.f32 %v939, %v940
        %v942 = vrot.slane %v941, 2
        %v943 = vmax.f32 %v941, %v942
        %v944 = vrot.slane %v943, 1
        %v945 = vmax.f32 %v943, %v944
        %v946 = vsel %vm497, %v257, -inf
        %v947 = vrot.slane %v946, 4
        %v948 = vmax.f32 %v946, %v947
        %v949 = vrot.slane %v948, 2
        %v950 = vmax.f32 %v948, %v949
        %v951 = vrot.slane %v950, 1
        %v952 = vmax.f32 %v950, %v951
        %v953 = vsel %vm497, %v353, -inf
        %v954 = vrot.slane %v953, 4
        %v955 = vmax.f32 %v953, %v954
        %v956 = vrot.slane %v955, 2
        %v957 = vmax.f32 %v955, %v956
        %v958 = vrot.slane %v957, 1
        %v959 = vmax.f32 %v957, %v958
        %v960 = vsel %vm497, %v354, -inf
        %v961 = vrot.slane %v960, 4
        %v962 = vmax.f32 %v960, %v961
        %v963 = vrot.slane %v962, 2
        %v964 = vmax.f32 %v962, %v963
        %v965 = vrot.slane %v964, 1
        %v966 = vmax.f32 %v964, %v965
        %v967 = vsel %vm497, %v355, -inf
        %v968 = vrot.slane %v967, 4
        %v969 = vmax.f32 %v967, %v968
        %v970 = vrot.slane %v969, 2
        %v971 = vmax.f32 %v969, %v970
        %v972 = vrot.slane %v971, 1
        %v973 = vmax.f32 %v971, %v972
        %v974 = vsel %vm497, %v258, -inf
        %v975 = vrot.slane %v974, 4
        %v976 = vmax.f32 %v974, %v975
        %v977 = vrot.slane %v976, 2
        %v978 = vmax.f32 %v976, %v977
        %v979 = vrot.slane %v978, 1
        %v980 = vmax.f32 %v978, %v979
        %v981 = vsel %vm497, %v356, -inf
        %v982 = vrot.slane %v981, 4
        %v983 = vmax.f32 %v981, %v982
        %v984 = vrot.slane %v983, 2
        %v985 = vmax.f32 %v983, %v984
        %v986 = vrot.slane %v985, 1
        %v987 = vmax.f32 %v985, %v986
        %v988 = vsel %vm497, %v357, -inf
        %v989 = vrot.slane %v988, 4
        %v990 = vmax.f32 %v988, %v989
        %v991 = vrot.slane %v990, 2
        %v992 = vmax.f32 %v990, %v991
        %v993 = vrot.slane %v992, 1
        %v994 = vmax.f32 %v992, %v993
        %v995 = vsel %vm497, %v358, -inf
        %v996 = vrot.slane %v995, 4
        %v997 = vmax.f32 %v995, %v996
        %v998 = vrot.slane %v997, 2
        %v999 = vmax.f32 %v997, %v998
        %v1000 = vrot.slane %v999, 1
        %v1001 = vmax.f32 %v999, %v1000
        %v1002 = vsel %vm497, %v259, -inf
        %v1003 = vrot.slane %v1002, 4
        %v1004 = vmax.f32 %v1002, %v1003
        %v1005 = vrot.slane %v1004, 2
        %v1006 = vmax.f32 %v1004, %v1005
        %v1007 = vrot.slane %v1006, 1
        %v1008 = vmax.f32 %v1006, %v1007
        %v1009 = vsel %vm497, %v359, -inf
        %v1010 = vrot.slane %v1009, 4
        %v1011 = vmax.f32 %v1009, %v1010
        %v1012 = vrot.slane %v1011, 2
        %v1013 = vmax.f32 %v1011, %v1012
        %v1014 = vrot.slane %v1013, 1
        %v1015 = vmax.f32 %v1013, %v1014
        %v1016 = vsel %vm497, %v360, -inf
        %v1017 = vrot.slane %v1016, 4
        %v1018 = vmax.f32 %v1016, %v1017
        %v1019 = vrot.slane %v1018, 2
        %v1020 = vmax.f32 %v1018, %v1019
        %v1021 = vrot.slane %v1020, 1
        %v1022 = vmax.f32 %v1020, %v1021
        %v1023 = vsel %vm497, %v361, -inf
        %v1024 = vrot.slane %v1023, 4
        %v1025 = vmax.f32 %v1023, %v1024
        %v1026 = vrot.slane %v1025, 2
        %v1027 = vmax.f32 %v1025, %v1026
        %v1028 = vrot.slane %v1027, 1
        %v1029 = vmax.f32 %v1027, %v1028
        %v1030 = vsel %vm497, %v260, -inf
        %v1031 = vrot.slane %v1030, 4
        %v1032 = vmax.f32 %v1030, %v1031
        %v1033 = vrot.slane %v1032, 2
        %v1034 = vmax.f32 %v1032, %v1033
        %v1035 = vrot.slane %v1034, 1
        %v1036 = vmax.f32 %v1034, %v1035
        %v1037 = vsel %vm497, %v362, -inf
        %v1038 = vrot.slane %v1037, 4
        %v1039 = vmax.f32 %v1037, %v1038
        %v1040 = vrot.slane %v1039, 2
        %v1041 = vmax.f32 %v1039, %v1040
        %v1042 = vrot.slane %v1041, 1
        %v1043 = vmax.f32 %v1041, %v1042
        %v1044 = vsel %vm497, %v363, -inf
        %v1045 = vrot.slane %v1044, 4
        %v1046 = vmax.f32 %v1044, %v1045
        %v1047 = vrot.slane %v1046, 2
        %v1048 = vmax.f32 %v1046, %v1047
        %v1049 = vrot.slane %v1048, 1
        %v1050 = vmax.f32 %v1048, %v1049
        %v1051 = vsel %vm497, %v364, -inf
        %v1052 = vrot.slane %v1051, 4
        %v1053 = vmax.f32 %v1051, %v1052
        %v1054 = vrot.slane %v1053, 2
        %v1055 = vmax.f32 %v1053, %v1054
        %v1056 = vrot.slane %v1055, 1
        %v1057 = vmax.f32 %v1055, %v1056
        %v1058 = vsel %vm497, %v261, -inf
        %v1059 = vrot.slane %v1058, 4
        %v1060 = vmax.f32 %v1058, %v1059
        %v1061 = vrot.slane %v1060, 2
        %v1062 = vmax.f32 %v1060, %v1061
        %v1063 = vrot.slane %v1062, 1
        %v1064 = vmax.f32 %v1062, %v1063
        %v1065 = vsel %vm497, %v365, -inf
        %v1066 = vrot.slane %v1065, 4
        %v1067 = vmax.f32 %v1065, %v1066
        %v1068 = vrot.slane %v1067, 2
        %v1069 = vmax.f32 %v1067, %v1068
        %v1070 = vrot.slane %v1069, 1
        %v1071 = vmax.f32 %v1069, %v1070
        %v1072 = vsel %vm497, %v366, -inf
        %v1073 = vrot.slane %v1072, 4
        %v1074 = vmax.f32 %v1072, %v1073
        %v1075 = vrot.slane %v1074, 2
        %v1076 = vmax.f32 %v1074, %v1075
        %v1077 = vrot.slane %v1076, 1
        %v1078 = vmax.f32 %v1076, %v1077
        %v1079 = vsel %vm497, %v367, -inf
        %v1080 = vrot.slane %v1079, 4
        %v1081 = vmax.f32 %v1079, %v1080
        %v1082 = vrot.slane %v1081, 2
        %v1083 = vmax.f32 %v1081, %v1082
        %v1084 = vrot.slane %v1083, 1
        %v1085 = vmax.f32 %v1083, %v1084
        %v1086 = vsel %vm497, %v262, -inf
        %v1087 = vrot.slane %v1086, 4
        %v1088 = vmax.f32 %v1086, %v1087
        %v1089 = vrot.slane %v1088, 2
        %v1090 = vmax.f32 %v1088, %v1089
        %v1091 = vrot.slane %v1090, 1
        %v1092 = vmax.f32 %v1090, %v1091
        %v1093 = vsel %vm497, %v368, -inf
        %v1094 = vrot.slane %v1093, 4
        %v1095 = vmax.f32 %v1093, %v1094
        %v1096 = vrot.slane %v1095, 2
        %v1097 = vmax.f32 %v1095, %v1096
        %v1098 = vrot.slane %v1097, 1
        %v1099 = vmax.f32 %v1097, %v1098
        %v1100 = vsel %vm497, %v369, -inf
        %v1101 = vrot.slane %v1100, 4
        %v1102 = vmax.f32 %v1100, %v1101
        %v1103 = vrot.slane %v1102, 2
        %v1104 = vmax.f32 %v1102, %v1103
        %v1105 = vrot.slane %v1104, 1
        %v1106 = vmax.f32 %v1104, %v1105
        %v1107 = vsel %vm497, %v370, -inf
        %v1108 = vrot.slane %v1107, 4
        %v1109 = vmax.f32 %v1107, %v1108
        %v1110 = vrot.slane %v1109, 2
        %v1111 = vmax.f32 %v1109, %v1110
        %v1112 = vrot.slane %v1111, 1
        %v1113 = vmax.f32 %v1111, %v1112
        %v1114 = vsel %vm497, %v263, -inf
        %v1115 = vrot.slane %v1114, 4
        %v1116 = vmax.f32 %v1114, %v1115
        %v1117 = vrot.slane %v1116, 2
        %v1118 = vmax.f32 %v1116, %v1117
        %v1119 = vrot.slane %v1118, 1
        %v1120 = vmax.f32 %v1118, %v1119
        %v1121 = vsel %vm497, %v371, -inf
        %v1122 = vrot.slane %v1121, 4
        %v1123 = vmax.f32 %v1121, %v1122
        %v1124 = vrot.slane %v1123, 2
        %v1125 = vmax.f32 %v1123, %v1124
        %v1126 = vrot.slane %v1125, 1
        %v1127 = vmax.f32 %v1125, %v1126
        %v1128 = vsel %vm497, %v372, -inf
        %v1129 = vrot.slane %v1128, 4
        %v1130 = vmax.f32 %v1128, %v1129
        %v1131 = vrot.slane %v1130, 2
        %v1132 = vmax.f32 %v1130, %v1131
        %v1133 = vrot.slane %v1132, 1
        %v1134 = vmax.f32 %v1132, %v1133
        %v1135 = vsel %vm497, %v373, -inf
        %v1136 = vrot.slane %v1135, 4
        %v1137 = vmax.f32 %v1135, %v1136
        %v1138 = vrot.slane %v1137, 2
        %v1139 = vmax.f32 %v1137, %v1138
        %v1140 = vrot.slane %v1139, 1
        %v1141 = vmax.f32 %v1139, %v1140
        %v1142 = vsel %vm497, %v264, -inf
        %v1143 = vrot.slane %v1142, 4
        %v1144 = vmax.f32 %v1142, %v1143
        %v1145 = vrot.slane %v1144, 2
        %v1146 = vmax.f32 %v1144, %v1145
        %v1147 = vrot.slane %v1146, 1
        %v1148 = vmax.f32 %v1146, %v1147
        %v1149 = vsel %vm497, %v374, -inf
        %v1150 = vrot.slane %v1149, 4
        %v1151 = vmax.f32 %v1149, %v1150
        %v1152 = vrot.slane %v1151, 2
        %v1153 = vmax.f32 %v1151, %v1152
        %v1154 = vrot.slane %v1153, 1
        %v1155 = vmax.f32 %v1153, %v1154
        %v1156 = vsel %vm497, %v375, -inf
        %v1157 = vrot.slane %v1156, 4
        %v1158 = vmax.f32 %v1156, %v1157
        %v1159 = vrot.slane %v1158, 2
        %v1160 = vmax.f32 %v1158, %v1159
        %v1161 = vrot.slane %v1160, 1
        %v1162 = vmax.f32 %v1160, %v1161
        %v1163 = vsel %vm497, %v376, -inf
        %v1164 = vrot.slane %v1163, 4
        %v1165 = vmax.f32 %v1163, %v1164
        %v1166 = vrot.slane %v1165, 2
        %v1167 = vmax.f32 %v1165, %v1166
        %v1168 = vrot.slane %v1167, 1
        %v1169 = vmax.f32 %v1167, %v1168
        %v1170 = vsel %vm497, %v265, -inf
        %v1171 = vrot.slane %v1170, 4
        %v1172 = vmax.f32 %v1170, %v1171
        %v1173 = vrot.slane %v1172, 2
        %v1174 = vmax.f32 %v1172, %v1173
        %v1175 = vrot.slane %v1174, 1
        %v1176 = vmax.f32 %v1174, %v1175
        %v1177 = vsel %vm497, %v377, -inf
        %v1178 = vrot.slane %v1177, 4
        %v1179 = vmax.f32 %v1177, %v1178
        %v1180 = vrot.slane %v1179, 2
        %v1181 = vmax.f32 %v1179, %v1180
        %v1182 = vrot.slane %v1181, 1
        %v1183 = vmax.f32 %v1181, %v1182
        %v1184 = vsel %vm497, %v378, -inf
        %v1185 = vrot.slane %v1184, 4
        %v1186 = vmax.f32 %v1184, %v1185
        %v1187 = vrot.slane %v1186, 2
        %v1188 = vmax.f32 %v1186, %v1187
        %v1189 = vrot.slane %v1188, 1
        %v1190 = vmax.f32 %v1188, %v1189
        %v1191 = vsel %vm497, %v379, -inf
        %v1192 = vrot.slane %v1191, 4
        %v1193 = vmax.f32 %v1191, %v1192
        %v1194 = vrot.slane %v1193, 2
        %v1195 = vmax.f32 %v1193, %v1194
        %v1196 = vrot.slane %v1195, 1
        %v1197 = vmax.f32 %v1195, %v1196
        %v1198 = vsel %vm497, %v266, -inf
        %v1199 = vrot.slane %v1198, 4
        %v1200 = vmax.f32 %v1198, %v1199
        %v1201 = vrot.slane %v1200, 2
        %v1202 = vmax.f32 %v1200, %v1201
        %v1203 = vrot.slane %v1202, 1
        %v1204 = vmax.f32 %v1202, %v1203
        %v1205 = vsel %vm497, %v380, -inf
        %v1206 = vrot.slane %v1205, 4
        %v1207 = vmax.f32 %v1205, %v1206
        %v1208 = vrot.slane %v1207, 2
        %v1209 = vmax.f32 %v1207, %v1208
        %v1210 = vrot.slane %v1209, 1
        %v1211 = vmax.f32 %v1209, %v1210
        %v1212 = vsel %vm497, %v381, -inf
        %v1213 = vrot.slane %v1212, 4
        %v1214 = vmax.f32 %v1212, %v1213
        %v1215 = vrot.slane %v1214, 2
        %v1216 = vmax.f32 %v1214, %v1215
        %v1217 = vrot.slane %v1216, 1
        %v1218 = vmax.f32 %v1216, %v1217
        %v1219 = vsel %vm497, %v382, -inf
        %v1220 = vrot.slane %v1219, 4
        %v1221 = vmax.f32 %v1219, %v1220
        %v1222 = vrot.slane %v1221, 2
        %v1223 = vmax.f32 %v1221, %v1222
        %v1224 = vrot.slane %v1223, 1
        %v1225 = vmax.f32 %v1223, %v1224
        %v1226 = vsel %vm497, %v267, -inf
        %v1227 = vrot.slane %v1226, 4
        %v1228 = vmax.f32 %v1226, %v1227
        %v1229 = vrot.slane %v1228, 2
        %v1230 = vmax.f32 %v1228, %v1229
        %v1231 = vrot.slane %v1230, 1
        %v1232 = vmax.f32 %v1230, %v1231
        %v1233 = vsel %vm497, %v383, -inf
        %v1234 = vrot.slane %v1233, 4
        %v1235 = vmax.f32 %v1233, %v1234
        %v1236 = vrot.slane %v1235, 2
        %v1237 = vmax.f32 %v1235, %v1236
        %v1238 = vrot.slane %v1237, 1
        %v1239 = vmax.f32 %v1237, %v1238
        %v1240 = vsel %vm497, %v384, -inf
        %v1241 = vrot.slane %v1240, 4
        %v1242 = vmax.f32 %v1240, %v1241
        %v1243 = vrot.slane %v1242, 2
        %v1244 = vmax.f32 %v1242, %v1243
        %v1245 = vrot.slane %v1244, 1
        %v1246 = vmax.f32 %v1244, %v1245
        %v1247 = vsel %vm497, %v385, -inf
        %v1248 = vrot.slane %v1247, 4
        %v1249 = vmax.f32 %v1247, %v1248
        %v1250 = vrot.slane %v1249, 2
        %v1251 = vmax.f32 %v1249, %v1250
        %v1252 = vrot.slane %v1251, 1
        %v1253 = vmax.f32 %v1251, %v1252
        %v1254 = vsel %vm497, %v268, -inf
        %v1255 = vrot.slane %v1254, 4
        %v1256 = vmax.f32 %v1254, %v1255
        %v1257 = vrot.slane %v1256, 2
        %v1258 = vmax.f32 %v1256, %v1257
        %v1259 = vrot.slane %v1258, 1
        %v1260 = vmax.f32 %v1258, %v1259
        %v1261 = vsel %vm497, %v386, -inf
        %v1262 = vrot.slane %v1261, 4
        %v1263 = vmax.f32 %v1261, %v1262
        %v1264 = vrot.slane %v1263, 2
        %v1265 = vmax.f32 %v1263, %v1264
        %v1266 = vrot.slane %v1265, 1
        %v1267 = vmax.f32 %v1265, %v1266
        %v1268 = vsel %vm497, %v387, -inf
        %v1269 = vrot.slane %v1268, 4
        %v1270 = vmax.f32 %v1268, %v1269
        %v1271 = vrot.slane %v1270, 2
        %v1272 = vmax.f32 %v1270, %v1271
        %v1273 = vrot.slane %v1272, 1
        %v1274 = vmax.f32 %v1272, %v1273
        %v1275 = vsel %vm497, %v388, -inf
        %v1276 = vrot.slane %v1275, 4
        %v1277 = vmax.f32 %v1275, %v1276
        %v1278 = vrot.slane %v1277, 2
        %v1279 = vmax.f32 %v1277, %v1278
        %v1280 = vrot.slane %v1279, 1
        %v1281 = vmax.f32 %v1279, %v1280
        %v1282 = vsel %vm497, %v269, -inf
        %v1283 = vrot.slane %v1282, 4
        %v1284 = vmax.f32 %v1282, %v1283
        %v1285 = vrot.slane %v1284, 2
        %v1286 = vmax.f32 %v1284, %v1285
        %v1287 = vrot.slane %v1286, 1
        %v1288 = vmax.f32 %v1286, %v1287
        %v1289 = vsel %vm497, %v389, -inf
        %v1290 = vrot.slane %v1289, 4
        %v1291 = vmax.f32 %v1289, %v1290
        %v1292 = vrot.slane %v1291, 2
        %v1293 = vmax.f32 %v1291, %v1292
        %v1294 = vrot.slane %v1293, 1
        %v1295 = vmax.f32 %v1293, %v1294
        %v1296 = vsel %vm497, %v390, -inf
        %v1297 = vrot.slane %v1296, 4
        %v1298 = vmax.f32 %v1296, %v1297
        %v1299 = vrot.slane %v1298, 2
        %v1300 = vmax.f32 %v1298, %v1299
        %v1301 = vrot.slane %v1300, 1
        %v1302 = vmax.f32 %v1300, %v1301
        %v1303 = vsel %vm497, %v391, -inf
        %v1304 = vrot.slane %v1303, 4
        %v1305 = vmax.f32 %v1303, %v1304
        %v1306 = vrot.slane %v1305, 2
        %v1307 = vmax.f32 %v1305, %v1306
        %v1308 = vrot.slane %v1307, 1
        %v1309 = vmax.f32 %v1307, %v1308
        %v1310 = vsel %vm497, %v270, -inf
        %v1311 = vrot.slane %v1310, 4
        %v1312 = vmax.f32 %v1310, %v1311
        %v1313 = vrot.slane %v1312, 2
        %v1314 = vmax.f32 %v1312, %v1313
        %v1315 = vrot.slane %v1314, 1
        %v1316 = vmax.f32 %v1314, %v1315
        %v1317 = vsel %vm497, %v392, -inf
        %v1318 = vrot.slane %v1317, 4
        %v1319 = vmax.f32 %v1317, %v1318
        %v1320 = vrot.slane %v1319, 2
        %v1321 = vmax.f32 %v1319, %v1320
        %v1322 = vrot.slane %v1321, 1
        %v1323 = vmax.f32 %v1321, %v1322
        %v1324 = vsel %vm497, %v393, -inf
        %v1325 = vrot.slane %v1324, 4
        %v1326 = vmax.f32 %v1324, %v1325
        %v1327 = vrot.slane %v1326, 2
        %v1328 = vmax.f32 %v1326, %v1327
        %v1329 = vrot.slane %v1328, 1
        %v1330 = vmax.f32 %v1328, %v1329
        %v1331 = vsel %vm497, %v394, -inf
        %v1332 = vrot.slane %v1331, 4
        %v1333 = vmax.f32 %v1331, %v1332
        %v1334 = vrot.slane %v1333, 2
        %v1335 = vmax.f32 %v1333, %v1334
        %v1336 = vrot.slane %v1335, 1
        %v1337 = vmax.f32 %v1335, %v1336
        %v1338 = vsel %vm497, %v271, -inf
        %v1339 = vrot.slane %v1338, 4
        %v1340 = vmax.f32 %v1338, %v1339
        %v1341 = vrot.slane %v1340, 2
        %v1342 = vmax.f32 %v1340, %v1341
        %v1343 = vrot.slane %v1342, 1
        %v1344 = vmax.f32 %v1342, %v1343
        %v1345 = vsel %vm497, %v395, -inf
        %v1346 = vrot.slane %v1345, 4
        %v1347 = vmax.f32 %v1345, %v1346
        %v1348 = vrot.slane %v1347, 2
        %v1349 = vmax.f32 %v1347, %v1348
        %v1350 = vrot.slane %v1349, 1
        %v1351 = vmax.f32 %v1349, %v1350
        %v1352 = vsel %vm497, %v396, -inf
        %v1353 = vrot.slane %v1352, 4
        %v1354 = vmax.f32 %v1352, %v1353
        %v1355 = vrot.slane %v1354, 2
        %v1356 = vmax.f32 %v1354, %v1355
        %v1357 = vrot.slane %v1356, 1
        %v1358 = vmax.f32 %v1356, %v1357
        %v1359 = vsel %vm497, %v397, -inf
        %v1360 = vrot.slane %v1359, 4
        %v1361 = vmax.f32 %v1359, %v1360
        %v1362 = vrot.slane %v1361, 2
        %v1363 = vmax.f32 %v1361, %v1362
        %v1364 = vrot.slane %v1363, 1
        %v1365 = vmax.f32 %v1363, %v1364
        %v1366 = vsel %vm497, %v272, -inf
        %v1367 = vrot.slane %v1366, 4
        %v1368 = vmax.f32 %v1366, %v1367
        %v1369 = vrot.slane %v1368, 2
        %v1370 = vmax.f32 %v1368, %v1369
        %v1371 = vrot.slane %v1370, 1
        %v1372 = vmax.f32 %v1370, %v1371
        %v1373 = vsel %vm497, %v398, -inf
        %v1374 = vrot.slane %v1373, 4
        %v1375 = vmax.f32 %v1373, %v1374
        %v1376 = vrot.slane %v1375, 2
        %v1377 = vmax.f32 %v1375, %v1376
        %v1378 = vrot.slane %v1377, 1
        %v1379 = vmax.f32 %v1377, %v1378
        %v1380 = vsel %vm497, %v399, -inf
        %v1381 = vrot.slane %v1380, 4
        %v1382 = vmax.f32 %v1380, %v1381
        %v1383 = vrot.slane %v1382, 2
        %v1384 = vmax.f32 %v1382, %v1383
        %v1385 = vrot.slane %v1384, 1
        %v1386 = vmax.f32 %v1384, %v1385
        %v1387 = vsel %vm497, %v400, -inf
        %v1388 = vrot.slane %v1387, 4
        %v1389 = vmax.f32 %v1387, %v1388
        %v1390 = vrot.slane %v1389, 2
        %v1391 = vmax.f32 %v1389, %v1390
        %v1392 = vrot.slane %v1391, 1
        %v1393 = vmax.f32 %v1391, %v1392
        %vm1394 = vcmask 31744
        %v1395 = vsel %vm1394, %v504, -inf
        %v1396 = vsel %vm1394, %v560, -inf
        %v1397 = vmax.f32 %v1395, %v1396
        %v1398 = vsel %vm1394, %v511, -inf
        %v1399 = vsel %vm1394, %v567, -inf
        %v1400 = vmax.f32 %v1398, %v1399
        %v1401 = vsel %vm1394, %v518, -inf
        %v1402 = vsel %vm1394, %v574, -inf
        %v1403 = vmax.f32 %v1401, %v1402
        %v1404 = vsel %vm1394, %v525, -inf
        %v1405 = vsel %vm1394, %v581, -inf
        %v1406 = vmax.f32 %v1404, %v1405
        %v1407 = vsel %vm1394, %v532, -inf
        %v1408 = vsel %vm1394, %v588, -inf
        %v1409 = vmax.f32 %v1407, %v1408
        %v1410 = vsel %vm1394, %v539, -inf
        %v1411 = vsel %vm1394, %v595, -inf
        %v1412 = vmax.f32 %v1410, %v1411
        %v1413 = vsel %vm1394, %v546, -inf
        %v1414 = vsel %vm1394, %v602, -inf
        %v1415 = vmax.f32 %v1413, %v1414
        %v1416 = vsel %vm1394, %v553, -inf
        %v1417 = vsel %vm1394, %v609, -inf
        %v1418 = vmax.f32 %v1416, %v1417
        %v1419 = vsel %vm1394, %v616, -inf
        %v1420 = vsel %vm1394, %v672, -inf
        %v1421 = vmax.f32 %v1419, %v1420
        %v1422 = vsel %vm1394, %v623, -inf
        %v1423 = vsel %vm1394, %v679, -inf
        %v1424 = vmax.f32 %v1422, %v1423
        %v1425 = vsel %vm1394, %v630, -inf
        %v1426 = vsel %vm1394, %v686, -inf
        %v1427 = vmax.f32 %v1425, %v1426
        %v1428 = vsel %vm1394, %v637, -inf
        %v1429 = vsel %vm1394, %v693, -inf
        %v1430 = vmax.f32 %v1428, %v1429
        %v1431 = vsel %vm1394, %v644, -inf
        %v1432 = vsel %vm1394, %v700, -inf
        %v1433 = vmax.f32 %v1431, %v1432
        %v1434 = vsel %vm1394, %v651, -inf
        %v1435 = vsel %vm1394, %v707, -inf
        %v1436 = vmax.f32 %v1434, %v1435
        %v1437 = vsel %vm1394, %v658, -inf
        %v1438 = vsel %vm1394, %v714, -inf
        %v1439 = vmax.f32 %v1437, %v1438
        %v1440 = vsel %vm1394, %v665, -inf
        %v1441 = vsel %vm1394, %v721, -inf
        %v1442 = vmax.f32 %v1440, %v1441
        %v1443 = vsel %vm1394, %v728, -inf
        %v1444 = vsel %vm1394, %v784, -inf
        %v1445 = vmax.f32 %v1443, %v1444
        %v1446 = vsel %vm1394, %v735, -inf
        %v1447 = vsel %vm1394, %v791, -inf
        %v1448 = vmax.f32 %v1446, %v1447
        %v1449 = vsel %vm1394, %v742, -inf
        %v1450 = vsel %vm1394, %v798, -inf
        %v1451 = vmax.f32 %v1449, %v1450
        %v1452 = vsel %vm1394, %v749, -inf
        %v1453 = vsel %vm1394, %v805, -inf
        %v1454 = vmax.f32 %v1452, %v1453
        %v1455 = vsel %vm1394, %v756, -inf
        %v1456 = vsel %vm1394, %v812, -inf
        %v1457 = vmax.f32 %v1455, %v1456
        %v1458 = vsel %vm1394, %v763, -inf
        %v1459 = vsel %vm1394, %v819, -inf
        %v1460 = vmax.f32 %v1458, %v1459
        %v1461 = vsel %vm1394, %v770, -inf
        %v1462 = vsel %vm1394, %v826, -inf
        %v1463 = vmax.f32 %v1461, %v1462
        %v1464 = vsel %vm1394, %v777, -inf
        %v1465 = vsel %vm1394, %v833, -inf
        %v1466 = vmax.f32 %v1464, %v1465
        %v1467 = vsel %vm1394, %v840, -inf
        %v1468 = vsel %vm1394, %v896, -inf
        %v1469 = vmax.f32 %v1467, %v1468
        %v1470 = vsel %vm1394, %v847, -inf
        %v1471 = vsel %vm1394, %v903, -inf
        %v1472 = vmax.f32 %v1470, %v1471
        %v1473 = vsel %vm1394, %v854, -inf
        %v1474 = vsel %vm1394, %v910, -inf
        %v1475 = vmax.f32 %v1473, %v1474
        %v1476 = vsel %vm1394, %v861, -inf
        %v1477 = vsel %vm1394, %v917, -inf
        %v1478 = vmax.f32 %v1476, %v1477
        %v1479 = vsel %vm1394, %v868, -inf
        %v1480 = vsel %vm1394, %v924, -inf
        %v1481 = vmax.f32 %v1479, %v1480
        %v1482 = vsel %vm1394, %v875, -inf
        %v1483 = vsel %vm1394, %v931, -inf
        %v1484 = vmax.f32 %v1482, %v1483
        %v1485 = vsel %vm1394, %v882, -inf
        %v1486 = vsel %vm1394, %v938, -inf
        %v1487 = vmax.f32 %v1485, %v1486
        %v1488 = vsel %vm1394, %v889, -inf
        %v1489 = vsel %vm1394, %v945, -inf
        %v1490 = vmax.f32 %v1488, %v1489
        %v1491 = vsel %vm1394, %v952, -inf
        %v1492 = vsel %vm1394, %v1008, -inf
        %v1493 = vmax.f32 %v1491, %v1492
        %v1494 = vsel %vm1394, %v959, -inf
        %v1495 = vsel %vm1394, %v1015, -inf
        %v1496 = vmax.f32 %v1494, %v1495
        %v1497 = vsel %vm1394, %v966, -inf
        %v1498 = vsel %vm1394, %v1022, -inf
        %v1499 = vmax.f32 %v1497, %v1498
        %v1500 = vsel %vm1394, %v973, -inf
        %v1501 = vsel %vm1394, %v1029, -inf
        %v1502 = vmax.f32 %v1500, %v1501
        %v1503 = vsel %vm1394, %v980, -inf
        %v1504 = vsel %vm1394, %v1036, -inf
        %v1505 = vmax.f32 %v1503, %v1504
        %v1506 = vsel %vm1394, %v987, -inf
        %v1507 = vsel %vm1394, %v1043, -inf
        %v1508 = vmax.f32 %v1506, %v1507
        %v1509 = vsel %vm1394, %v994, -inf
        %v1510 = vsel %vm1394, %v1050, -inf
        %v1511 = vmax.f32 %v1509, %v1510
        %v1512 = vsel %vm1394, %v1001, -inf
        %v1513 = vsel %vm1394, %v1057, -inf
        %v1514 = vmax.f32 %v1512, %v1513
        %v1515 = vsel %vm1394, %v1064, -inf
        %v1516 = vsel %vm1394, %v1120, -inf
        %v1517 = vmax.f32 %v1515, %v1516
        %v1518 = vsel %vm1394, %v1071, -inf
        %v1519 = vsel %vm1394, %v1127, -inf
        %v1520 = vmax.f32 %v1518, %v1519
        %v1521 = vsel %vm1394, %v1078, -inf
        %v1522 = vsel %vm1394, %v1134, -inf
        %v1523 = vmax.f32 %v1521, %v1522
        %v1524 = vsel %vm1394, %v1085, -inf
        %v1525 = vsel %vm1394, %v1141, -inf
        %v1526 = vmax.f32 %v1524, %v1525
        %v1527 = vsel %vm1394, %v1092, -inf
        %v1528 = vsel %vm1394, %v1148, -inf
        %v1529 = vmax.f32 %v1527, %v1528
        %v1530 = vsel %vm1394, %v1099, -inf
        %v1531 = vsel %vm1394, %v1155, -inf
        %v1532 = vmax.f32 %v1530, %v1531
        %v1533 = vsel %vm1394, %v1106, -inf
        %v1534 = vsel %vm1394, %v1162, -inf
        %v1535 = vmax.f32 %v1533, %v1534
        %v1536 = vsel %vm1394, %v1113, -inf
        %v1537 = vsel %vm1394, %v1169, -inf
        %v1538 = vmax.f32 %v1536, %v1537
        %v1539 = vsel %vm1394, %v1176, -inf
        %v1540 = vsel %vm1394, %v1232, -inf
        %v1541 = vmax.f32 %v1539, %v1540
        %v1542 = vsel %vm1394, %v1183, -inf
        %v1543 = vsel %vm1394, %v1239, -inf
        %v1544 = vmax.f32 %v1542, %v1543
        %v1545 = vsel %vm1394, %v1190, -inf
        %v1546 = vsel %vm1394, %v1246, -inf
        %v1547 = vmax.f32 %v1545, %v1546
        %v1548 = vsel %vm1394, %v1197, -inf
        %v1549 = vsel %vm1394, %v1253, -inf
        %v1550 = vmax.f32 %v1548, %v1549
        %v1551 = vsel %vm1394, %v1204, -inf
        %v1552 = vsel %vm1394, %v1260, -inf
        %v1553 = vmax.f32 %v1551, %v1552
        %v1554 = vsel %vm1394, %v1211, -inf
        %v1555 = vsel %vm1394, %v1267, -inf
        %v1556 = vmax.f32 %v1554, %v1555
        %v1557 = vsel %vm1394, %v1218, -inf
        %v1558 = vsel %vm1394, %v1274, -inf
        %v1559 = vmax.f32 %v1557, %v1558
        %v1560 = vsel %vm1394, %v1225, -inf
        %v1561 = vsel %vm1394, %v1281, -inf
        %v1562 = vmax.f32 %v1560, %v1561
        %v1563 = vsel %vm1394, %v1288, -inf
        %v1564 = vsel %vm1394, %v1344, -inf
        %v1565 = vmax.f32 %v1563, %v1564
        %v1566 = vsel %vm1394, %v1295, -inf
        %v1567 = vsel %vm1394, %v1351, -inf
        %v1568 = vmax.f32 %v1566, %v1567
        %v1569 = vsel %vm1394, %v1302, -inf
        %v1570 = vsel %vm1394, %v1358, -inf
        %v1571 = vmax.f32 %v1569, %v1570
        %v1572 = vsel %vm1394, %v1309, -inf
        %v1573 = vsel %vm1394, %v1365, -inf
        %v1574 = vmax.f32 %v1572, %v1573
        %v1575 = vsel %vm1394, %v1316, -inf
        %v1576 = vsel %vm1394, %v1372, -inf
        %v1577 = vmax.f32 %v1575, %v1576
        %v1578 = vsel %vm1394, %v1323, -inf
        %v1579 = vsel %vm1394, %v1379, -inf
        %v1580 = vmax.f32 %v1578, %v1579
        %v1581 = vsel %vm1394, %v1330, -inf
        %v1582 = vsel %vm1394, %v1386, -inf
        %v1583 = vmax.f32 %v1581, %v1582
        %v1584 = vsel %vm1394, %v1337, -inf
        %v1585 = vsel %vm1394, %v1393, -inf
        %v1586 = vmax.f32 %v1584, %v1585
        %vm1651 = vcmask 1041409
        %v1652 = vsel %vm1651, %v1400, %v1397
        %vm1653 = vcmask 1042434
        %v1654 = vsel %vm1653, %v1403, %v1652
        %vm1655 = vcmask 1043459
        %v1656 = vsel %vm1655, %v1406, %v1654
        %vm1657 = vcmask 1044484
        %v1658 = vsel %vm1657, %v1409, %v1656
        %vm1659 = vcmask 1045509
        %v1660 = vsel %vm1659, %v1412, %v1658
        %vm1661 = vcmask 1046534
        %v1662 = vsel %vm1661, %v1415, %v1660
        %vm1663 = vcmask 1047559
        %v1664 = vsel %vm1663, %v1418, %v1662
        %v1665 = vsel %vm1651, %v1424, %v1421
        %v1666 = vsel %vm1653, %v1427, %v1665
        %v1667 = vsel %vm1655, %v1430, %v1666
        %v1668 = vsel %vm1657, %v1433, %v1667
        %v1669 = vsel %vm1659, %v1436, %v1668
        %v1670 = vsel %vm1661, %v1439, %v1669
        %v1671 = vsel %vm1663, %v1442, %v1670
        %v1672 = vsel %vm1651, %v1448, %v1445
        %v1673 = vsel %vm1653, %v1451, %v1672
        %v1674 = vsel %vm1655, %v1454, %v1673
        %v1675 = vsel %vm1657, %v1457, %v1674
        %v1676 = vsel %vm1659, %v1460, %v1675
        %v1677 = vsel %vm1661, %v1463, %v1676
        %v1678 = vsel %vm1663, %v1466, %v1677
        %v1679 = vsel %vm1651, %v1472, %v1469
        %v1680 = vsel %vm1653, %v1475, %v1679
        %v1681 = vsel %vm1655, %v1478, %v1680
        %v1682 = vsel %vm1657, %v1481, %v1681
        %v1683 = vsel %vm1659, %v1484, %v1682
        %v1684 = vsel %vm1661, %v1487, %v1683
        %v1685 = vsel %vm1663, %v1490, %v1684
        %v1686 = vsel %vm1651, %v1496, %v1493
        %v1687 = vsel %vm1653, %v1499, %v1686
        %v1688 = vsel %vm1655, %v1502, %v1687
        %v1689 = vsel %vm1657, %v1505, %v1688
        %v1690 = vsel %vm1659, %v1508, %v1689
        %v1691 = vsel %vm1661, %v1511, %v1690
        %v1692 = vsel %vm1663, %v1514, %v1691
        %v1693 = vsel %vm1651, %v1520, %v1517
        %v1694 = vsel %vm1653, %v1523, %v1693
        %v1695 = vsel %vm1655, %v1526, %v1694
        %v1696 = vsel %vm1657, %v1529, %v1695
        %v1697 = vsel %vm1659, %v1532, %v1696
        %v1698 = vsel %vm1661, %v1535, %v1697
        %v1699 = vsel %vm1663, %v1538, %v1698
        %v1700 = vsel %vm1651, %v1544, %v1541
        %v1701 = vsel %vm1653, %v1547, %v1700
        %v1702 = vsel %vm1655, %v1550, %v1701
        %v1703 = vsel %vm1657, %v1553, %v1702
        %v1704 = vsel %vm1659, %v1556, %v1703
        %v1705 = vsel %vm1661, %v1559, %v1704
        %v1706 = vsel %vm1663, %v1562, %v1705
        %v1707 = vsel %vm1651, %v1568, %v1565
        %v1708 = vsel %vm1653, %v1571, %v1707
        %v1709 = vsel %vm1655, %v1574, %v1708
        %v1710 = vsel %vm1657, %v1577, %v1709
        %v1711 = vsel %vm1659, %v1580, %v1710
        %v1712 = vsel %vm1661, %v1583, %v1711
        %v1713 = vsel %vm1663, %v1586, %v1712
        %v1715 = vrot.slane 0.0, 7
        %v1716 = vrot.slane %v1664, 7
        %v1717 = vrot.slane %v1671, 7
        %v1718 = vrot.slane %v1678, 7
        %v1719 = vrot.slane %v1685, 7
        %v1720 = vrot.slane %v1692, 7
        %v1721 = vrot.slane %v1699, 7
        %v1722 = vrot.slane %v1706, 7
        %v1723 = vrot.slane %v1713, 7
        %vm1733 = vcmask 1040384
        %v1734 = vsel %vm1733, 0.0, %v1715
        %v1735 = vsel %vm1733, 0.0, %v1716
        %v1736 = vsel %vm1733, 0.0, %v1717
        %v1737 = vsel %vm1733, 0.0, %v1718
        %v1738 = vsel %vm1733, 0.0, %v1719
        %v1739 = vsel %vm1733, 0.0, %v1720
        %v1740 = vsel %vm1733, 0.0, %v1721
        %v1741 = vsel %vm1733, 0.0, %v1722
        %v1742 = vsel %vm1733, 0.0, %v1723
        %v1743 = vsel %vm1733, %v1715, 0.0
        %v1744 = vsel %vm1733, %v1716, 0.0
        %v1745 = vsel %vm1733, %v1717, 0.0
        %v1746 = vsel %vm1733, %v1718, 0.0
        %v1747 = vsel %vm1733, %v1719, 0.0
        %v1748 = vsel %vm1733, %v1720, 0.0
        %v1749 = vsel %vm1733, %v1721, 0.0
        %v1750 = vsel %vm1733, %v1722, 0.0
        %v1751 = vsel %vm1733, %v1723, 0.0
        %v1752 = vld [vmem:[%s1] sm:$0xf]
        %vm1769 = vcmask 1046528
        %v1770 = vrot.slane %v1734, 1
        %v1771 = vrot.slane %v1743, 1
        %v1772 = vsel %vm1769, %v1770, %v1771
        %v1773 = vrot.slane %v1735, 1
        %v1774 = vrot.slane %v1744, 1
        %v1775 = vsel %vm1769, %v1773, %v1774
        %v1776 = vrot.slane %v1736, 1
        %v1777 = vrot.slane %v1745, 1
        %v1778 = vsel %vm1769, %v1776, %v1777
        %v1779 = vrot.slane %v1737, 1
        %v1780 = vrot.slane %v1746, 1
        %v1781 = vsel %vm1769, %v1779, %v1780
        %v1782 = vrot.slane %v1738, 1
        %v1783 = vrot.slane %v1747, 1
        %v1784 = vsel %vm1769, %v1782, %v1783
        %v1785 = vrot.slane %v1739, 1
        %v1786 = vrot.slane %v1748, 1
        %v1787 = vsel %vm1769, %v1785, %v1786
        %v1788 = vrot.slane %v1740, 1
        %v1789 = vrot.slane %v1749, 1
        %v1790 = vsel %vm1769, %v1788, %v1789
        %v1791 = vrot.slane %v1741, 1
        %v1792 = vrot.slane %v1750, 1
        %v1793 = vsel %vm1769, %v1791, %v1792
        %s1794 = scalar_lea.vmem %s1, 4
        %v1795 = vld [vmem:[%s1794] sm:$0xf]
        %v1796 = vsel %vm1394, %v1772, 0
        %v1798 = vsel %vm1394, %v1775, 0
        %v1800 = vsel %vm1394, %v1778, 0
        %v1802 = vsel %vm1394, %v1781, 0
        %v1804 = vsel %vm1394, %v1784, 0
        %v1806 = vsel %vm1394, %v1787, 0
        %v1808 = vsel %vm1394, %v1790, 0
        %v1810 = vsel %vm1394, %v1793, 0
        %vm1812 = vcmask 1043456
        %v1814 = vsel %vm1812, %v1795, 0
        %1816 = vmatpush.msra.mxu0 0.0
        %1817 = vmatpush.msra.mxu0 0.0
        %1818 = vmatpush.msra.mxu0 0.0
        %1819 = vmatpush.msra.mxu0 0.0
        %1820 = vmatpush.msra.mxu0 0.0
        %1821 = vmatpush.msra.mxu0 0.0
        %1822 = vmatpush.msra.mxu0 0.0
        %1823 = vmatpush.msra.mxu0 0.0
        %1824 = vmatpush.msra.mxu0 0.0
        %1825 = vmatpush.msra.mxu0 0.0
        %1826 = vmatpush.msra.mxu0 0.0
        %1827 = vmatpush.msra.mxu0 0.0
        %1828 = vmatpush.msra.mxu0 0.0
        %1829 = vmatpush.msra.mxu0 0.0
        %1830 = vmatpush.msra.mxu0 0.0
        %1831 = vmatpush.msra.mxu0 %v1814
        %1832 = vmatmul.f32.gmra.mxu0 %v1796
        %v1833 = vpop.f32.mrf.mxu0
        %v1834 = vadd.f32 0.0, %v1833
        %1835 = vmatmul.f32.gmra.mxu0 %v1798
        %v1836 = vpop.f32.mrf.mxu0
        %v1837 = vadd.f32 0.0, %v1836
        %1838 = vmatmul.f32.gmra.mxu0 %v1800
        %v1839 = vpop.f32.mrf.mxu0
        %v1840 = vadd.f32 0.0, %v1839
        %1841 = vmatmul.f32.gmra.mxu0 %v1802
        %v1842 = vpop.f32.mrf.mxu0
        %v1843 = vadd.f32 0.0, %v1842
        %1844 = vmatmul.f32.gmra.mxu0 %v1804
        %v1845 = vpop.f32.mrf.mxu0
        %v1846 = vadd.f32 0.0, %v1845
        %1847 = vmatmul.f32.gmra.mxu0 %v1806
        %v1848 = vpop.f32.mrf.mxu0
        %v1849 = vadd.f32 0.0, %v1848
        %1850 = vmatmul.f32.gmra.mxu0 %v1808
        %v1851 = vpop.f32.mrf.mxu0
        %v1852 = vadd.f32 0.0, %v1851
        %1853 = vmatmul.f32.gmra.mxu0 %v1810
        %v1854 = vpop.f32.mrf.mxu0
        %v1855 = vadd.f32 0.0, %v1854
        %1856 = vdwg.mxu0
        %v1857 = vsel %vm1394, %v1734, 0
        %v1859 = vsel %vm1394, %v1735, 0
        %v1861 = vsel %vm1394, %v1736, 0
        %v1863 = vsel %vm1394, %v1737, 0
        %v1865 = vsel %vm1394, %v1738, 0
        %v1867 = vsel %vm1394, %v1739, 0
        %v1869 = vsel %vm1394, %v1740, 0
        %v1871 = vsel %vm1394, %v1741, 0
        %v1874 = vsel %vm1812, %v1752, 0
        %1876 = vmatpush.msra.mxu0 0.0
        %1877 = vmatpush.msra.mxu0 0.0
        %1878 = vmatpush.msra.mxu0 0.0
        %1879 = vmatpush.msra.mxu0 0.0
        %1880 = vmatpush.msra.mxu0 0.0
        %1881 = vmatpush.msra.mxu0 0.0
        %1882 = vmatpush.msra.mxu0 0.0
        %1883 = vmatpush.msra.mxu0 0.0
        %1884 = vmatpush.msra.mxu0 0.0
        %1885 = vmatpush.msra.mxu0 0.0
        %1886 = vmatpush.msra.mxu0 0.0
        %1887 = vmatpush.msra.mxu0 0.0
        %1888 = vmatpush.msra.mxu0 0.0
        %1889 = vmatpush.msra.mxu0 0.0
        %1890 = vmatpush.msra.mxu0 0.0
        %1891 = vmatpush.msra.mxu0 %v1874
        %1892 = vmatmul.f32.gmra.mxu0 %v1857
        %v1893 = vpop.f32.mrf.mxu0
        %v1894 = vadd.f32 %v1834, %v1893
        %1895 = vmatmul.f32.gmra.mxu0 %v1859
        %v1896 = vpop.f32.mrf.mxu0
        %v1897 = vadd.f32 %v1837, %v1896
        %1898 = vmatmul.f32.gmra.mxu0 %v1861
        %v1899 = vpop.f32.mrf.mxu0
        %v1900 = vadd.f32 %v1840, %v1899
        %1901 = vmatmul.f32.gmra.mxu0 %v1863
        %v1902 = vpop.f32.mrf.mxu0
        %v1903 = vadd.f32 %v1843, %v1902
        %1904 = vmatmul.f32.gmra.mxu0 %v1865
        %v1905 = vpop.f32.mrf.mxu0
        %v1906 = vadd.f32 %v1846, %v1905
        %1907 = vmatmul.f32.gmra.mxu0 %v1867
        %v1908 = vpop.f32.mrf.mxu0
        %v1909 = vadd.f32 %v1849, %v1908
        %1910 = vmatmul.f32.gmra.mxu0 %v1869
        %v1911 = vpop.f32.mrf.mxu0
        %v1912 = vadd.f32 %v1852, %v1911
        %1913 = vmatmul.f32.gmra.mxu0 %v1871
        %v1914 = vpop.f32.mrf.mxu0
        %v1915 = vadd.f32 %v1855, %v1914
        %1916 = vdwg.mxu0
        %vm1917 = vcmask 1045504
        %v1918 = vrot.slane %v1734, 2
        %v1919 = vrot.slane %v1743, 2
        %v1920 = vsel %vm1917, %v1918, %v1919
        %v1921 = vrot.slane %v1735, 2
        %v1922 = vrot.slane %v1744, 2
        %v1923 = vsel %vm1917, %v1921, %v1922
        %v1924 = vrot.slane %v1736, 2
        %v1925 = vrot.slane %v1745, 2
        %v1926 = vsel %vm1917, %v1924, %v1925
        %v1927 = vrot.slane %v1737, 2
        %v1928 = vrot.slane %v1746, 2
        %v1929 = vsel %vm1917, %v1927, %v1928
        %v1930 = vrot.slane %v1738, 2
        %v1931 = vrot.slane %v1747, 2
        %v1932 = vsel %vm1917, %v1930, %v1931
        %v1933 = vrot.slane %v1739, 2
        %v1934 = vrot.slane %v1748, 2
        %v1935 = vsel %vm1917, %v1933, %v1934
        %v1936 = vrot.slane %v1740, 2
        %v1937 = vrot.slane %v1749, 2
        %v1938 = vsel %vm1917, %v1936, %v1937
        %v1939 = vrot.slane %v1741, 2
        %v1940 = vrot.slane %v1750, 2
        %v1941 = vsel %vm1917, %v1939, %v1940
        %s1942 = scalar_lea.vmem %s1, 8
        %v1943 = vld [vmem:[%s1942] sm:$0xf]
        %v1944 = vsel %vm1394, %v1920, 0
        %v1946 = vsel %vm1394, %v1923, 0
        %v1948 = vsel %vm1394, %v1926, 0
        %v1950 = vsel %vm1394, %v1929, 0
        %v1952 = vsel %vm1394, %v1932, 0
        %v1954 = vsel %vm1394, %v1935, 0
        %v1956 = vsel %vm1394, %v1938, 0
        %v1958 = vsel %vm1394, %v1941, 0
        %v1961 = vsel %vm1812, %v1943, 0
        %1963 = vmatpush.msra.mxu0 0.0
        %1964 = vmatpush.msra.mxu0 0.0
        %1965 = vmatpush.msra.mxu0 0.0
        %1966 = vmatpush.msra.mxu0 0.0
        %1967 = vmatpush.msra.mxu0 0.0
        %1968 = vmatpush.msra.mxu0 0.0
        %1969 = vmatpush.msra.mxu0 0.0
        %1970 = vmatpush.msra.mxu0 0.0
        %1971 = vmatpush.msra.mxu0 0.0
        %1972 = vmatpush.msra.mxu0 0.0
        %1973 = vmatpush.msra.mxu0 0.0
        %1974 = vmatpush.msra.mxu0 0.0
        %1975 = vmatpush.msra.mxu0 0.0
        %1976 = vmatpush.msra.mxu0 0.0
        %1977 = vmatpush.msra.mxu0 0.0
        %1978 = vmatpush.msra.mxu0 %v1961
        %1979 = vmatmul.f32.gmra.mxu0 %v1944
        %v1980 = vpop.f32.mrf.mxu0
        %v1981 = vadd.f32 0.0, %v1980
        %1982 = vmatmul.f32.gmra.mxu0 %v1946
        %v1983 = vpop.f32.mrf.mxu0
        %v1984 = vadd.f32 0.0, %v1983
        %1985 = vmatmul.f32.gmra.mxu0 %v1948
        %v1986 = vpop.f32.mrf.mxu0
        %v1987 = vadd.f32 0.0, %v1986
        %1988 = vmatmul.f32.gmra.mxu0 %v1950
        %v1989 = vpop.f32.mrf.mxu0
        %v1990 = vadd.f32 0.0, %v1989
        %1991 = vmatmul.f32.gmra.mxu0 %v1952
        %v1992 = vpop.f32.mrf.mxu0
        %v1993 = vadd.f32 0.0, %v1992
        %1994 = vmatmul.f32.gmra.mxu0 %v1954
        %v1995 = vpop.f32.mrf.mxu0
        %v1996 = vadd.f32 0.0, %v1995
        %1997 = vmatmul.f32.gmra.mxu0 %v1956
        %v1998 = vpop.f32.mrf.mxu0
        %v1999 = vadd.f32 0.0, %v1998
        %2000 = vmatmul.f32.gmra.mxu0 %v1958
        %v2001 = vpop.f32.mrf.mxu0
        %v2002 = vadd.f32 0.0, %v2001
        %2003 = vdwg.mxu0
        %v2004 = vadd.f32 %v1894, %v1981
        %v2005 = vadd.f32 %v1897, %v1984
        %v2006 = vadd.f32 %v1900, %v1987
        %v2007 = vadd.f32 %v1903, %v1990
        %v2008 = vadd.f32 %v1906, %v1993
        %v2009 = vadd.f32 %v1909, %v1996
        %v2010 = vadd.f32 %v1912, %v1999
        %v2011 = vadd.f32 %v1915, %v2002
        %s2012 = scalar_lea.vmem %s1, 12
        %v2013 = vld [vmem:[%s2012] sm:$0xf]
        %v2015 = vsel %vm1394, %v1742, 0
        %v2018 = vsel %vm1812, %v2013, 0
        %2020 = vmatpush.msra.mxu0 0.0
        %2021 = vmatpush.msra.mxu0 0.0
        %2022 = vmatpush.msra.mxu0 0.0
        %2023 = vmatpush.msra.mxu0 0.0
        %2024 = vmatpush.msra.mxu0 0.0
        %2025 = vmatpush.msra.mxu0 0.0
        %2026 = vmatpush.msra.mxu0 0.0
        %2027 = vmatpush.msra.mxu0 0.0
        %2028 = vmatpush.msra.mxu0 0.0
        %2029 = vmatpush.msra.mxu0 0.0
        %2030 = vmatpush.msra.mxu0 0.0
        %2031 = vmatpush.msra.mxu0 0.0
        %2032 = vmatpush.msra.mxu0 0.0
        %2033 = vmatpush.msra.mxu0 0.0
        %2034 = vmatpush.msra.mxu0 0.0
        %2035 = vmatpush.msra.mxu0 %v2018
        %2036 = vmatmul.f32.gmra.mxu0 %v1859
        %v2037 = vpop.f32.mrf.mxu0
        %v2038 = vadd.f32 0.0, %v2037
        %2039 = vmatmul.f32.gmra.mxu0 %v1861
        %v2040 = vpop.f32.mrf.mxu0
        %v2041 = vadd.f32 0.0, %v2040
        %2042 = vmatmul.f32.gmra.mxu0 %v1863
        %v2043 = vpop.f32.mrf.mxu0
        %v2044 = vadd.f32 0.0, %v2043
        %2045 = vmatmul.f32.gmra.mxu0 %v1865
        %v2046 = vpop.f32.mrf.mxu0
        %v2047 = vadd.f32 0.0, %v2046
        %2048 = vmatmul.f32.gmra.mxu0 %v1867
        %v2049 = vpop.f32.mrf.mxu0
        %v2050 = vadd.f32 0.0, %v2049
        %2051 = vmatmul.f32.gmra.mxu0 %v1869
        %v2052 = vpop.f32.mrf.mxu0
        %v2053 = vadd.f32 0.0, %v2052
        %2054 = vmatmul.f32.gmra.mxu0 %v1871
        %v2055 = vpop.f32.mrf.mxu0
        %v2056 = vadd.f32 0.0, %v2055
        %2057 = vmatmul.f32.gmra.mxu0 %v2015
        %v2058 = vpop.f32.mrf.mxu0
        %v2059 = vadd.f32 0.0, %v2058
        %2060 = vdwg.mxu0
        %v2061 = vadd.f32 %v2004, %v2038
        %v2062 = vadd.f32 %v2005, %v2041
        %v2063 = vadd.f32 %v2006, %v2044
        %v2064 = vadd.f32 %v2007, %v2047
        %v2065 = vadd.f32 %v2008, %v2050
        %v2066 = vadd.f32 %v2009, %v2053
        %v2067 = vadd.f32 %v2010, %v2056
        %v2068 = vadd.f32 %v2011, %v2059
        %v2070 = vrot.slane %v1742, 1
        %v2071 = vrot.slane %v1751, 1
        %v2072 = vsel %vm1769, %v2070, %v2071
        %s2073 = scalar_lea.vmem %s1, 16
        %v2074 = vld [vmem:[%s2073] sm:$0xf]
        %v2075 = vsel %vm1394, %v2072, 0
        %v2078 = vsel %vm1812, %v2074, 0
        %2080 = vmatpush.msra.mxu0 0.0
        %2081 = vmatpush.msra.mxu0 0.0
        %2082 = vmatpush.msra.mxu0 0.0
        %2083 = vmatpush.msra.mxu0 0.0
        %2084 = vmatpush.msra.mxu0 0.0
        %2085 = vmatpush.msra.mxu0 0.0
        %2086 = vmatpush.msra.mxu0 0.0
        %2087 = vmatpush.msra.mxu0 0.0
        %2088 = vmatpush.msra.mxu0 0.0
        %2089 = vmatpush.msra.mxu0 0.0
        %2090 = vmatpush.msra.mxu0 0.0
        %2091 = vmatpush.msra.mxu0 0.0
        %2092 = vmatpush.msra.mxu0 0.0
        %2093 = vmatpush.msra.mxu0 0.0
        %2094 = vmatpush.msra.mxu0 0.0
        %2095 = vmatpush.msra.mxu0 %v2078
        %2096 = vmatmul.f32.gmra.mxu0 %v1798
        %v2097 = vpop.f32.mrf.mxu0
        %v2098 = vadd.f32 0.0, %v2097
        %2099 = vmatmul.f32.gmra.mxu0 %v1800
        %v2100 = vpop.f32.mrf.mxu0
        %v2101 = vadd.f32 0.0, %v2100
        %2102 = vmatmul.f32.gmra.mxu0 %v1802
        %v2103 = vpop.f32.mrf.mxu0
        %v2104 = vadd.f32 0.0, %v2103
        %2105 = vmatmul.f32.gmra.mxu0 %v1804
        %v2106 = vpop.f32.mrf.mxu0
        %v2107 = vadd.f32 0.0, %v2106
        %2108 = vmatmul.f32.gmra.mxu0 %v1806
        %v2109 = vpop.f32.mrf.mxu0
        %v2110 = vadd.f32 0.0, %v2109
        %2111 = vmatmul.f32.gmra.mxu0 %v1808
        %v2112 = vpop.f32.mrf.mxu0
        %v2113 = vadd.f32 0.0, %v2112
        %2114 = vmatmul.f32.gmra.mxu0 %v1810
        %v2115 = vpop.f32.mrf.mxu0
        %v2116 = vadd.f32 0.0, %v2115
        %2117 = vmatmul.f32.gmra.mxu0 %v2075
        %v2118 = vpop.f32.mrf.mxu0
        %v2119 = vadd.f32 0.0, %v2118
        %2120 = vdwg.mxu0
        %v2121 = vadd.f32 %v2061, %v2098
        %v2122 = vadd.f32 %v2062, %v2101
        %v2123 = vadd.f32 %v2063, %v2104
        %v2124 = vadd.f32 %v2064, %v2107
        %v2125 = vadd.f32 %v2065, %v2110
        %v2126 = vadd.f32 %v2066, %v2113
        %v2127 = vadd.f32 %v2067, %v2116
        %v2128 = vadd.f32 %v2068, %v2119
        %v2129 = vrot.slane %v1742, 2
        %v2130 = vrot.slane %v1751, 2
        %v2131 = vsel %vm1917, %v2129, %v2130
        %s2132 = scalar_lea.vmem %s1, 20
        %v2133 = vld [vmem:[%s2132] sm:$0xf]
        %v2134 = vsel %vm1394, %v2131, 0
        %v2137 = vsel %vm1812, %v2133, 0
        %2139 = vmatpush.msra.mxu0 0.0
        %2140 = vmatpush.msra.mxu0 0.0
        %2141 = vmatpush.msra.mxu0 0.0
        %2142 = vmatpush.msra.mxu0 0.0
        %2143 = vmatpush.msra.mxu0 0.0
        %2144 = vmatpush.msra.mxu0 0.0
        %2145 = vmatpush.msra.mxu0 0.0
        %2146 = vmatpush.msra.mxu0 0.0
        %2147 = vmatpush.msra.mxu0 0.0
        %2148 = vmatpush.msra.mxu0 0.0
        %2149 = vmatpush.msra.mxu0 0.0
        %2150 = vmatpush.msra.mxu0 0.0
        %2151 = vmatpush.msra.mxu0 0.0
        %2152 = vmatpush.msra.mxu0 0.0
        %2153 = vmatpush.msra.mxu0 0.0
        %2154 = vmatpush.msra.mxu0 %v2137
        %2155 = vmatmul.f32.gmra.mxu0 %v1946
        %v2156 = vpop.f32.mrf.mxu0
        %v2157 = vadd.f32 0.0, %v2156
        %2158 = vmatmul.f32.gmra.mxu0 %v1948
        %v2159 = vpop.f32.mrf.mxu0
        %v2160 = vadd.f32 0.0, %v2159
        %2161 = vmatmul.f32.gmra.mxu0 %v1950
        %v2162 = vpop.f32.mrf.mxu0
        %v2163 = vadd.f32 0.0, %v2162
        %2164 = vmatmul.f32.gmra.mxu0 %v1952
        %v2165 = vpop.f32.mrf.mxu0
        %v2166 = vadd.f32 0.0, %v2165
        %2167 = vmatmul.f32.gmra.mxu0 %v1954
        %v2168 = vpop.f32.mrf.mxu0
        %v2169 = vadd.f32 0.0, %v2168
        %2170 = vmatmul.f32.gmra.mxu0 %v1956
        %v2171 = vpop.f32.mrf.mxu0
        %v2172 = vadd.f32 0.0, %v2171
        %2173 = vmatmul.f32.gmra.mxu0 %v1958
        %v2174 = vpop.f32.mrf.mxu0
        %v2175 = vadd.f32 0.0, %v2174
        %2176 = vmatmul.f32.gmra.mxu0 %v2134
        %v2177 = vpop.f32.mrf.mxu0
        %v2178 = vadd.f32 0.0, %v2177
        %2179 = vdwg.mxu0
        %v2180 = vadd.f32 %v2121, %v2157
        %v2181 = vadd.f32 %v2122, %v2160
        %v2182 = vadd.f32 %v2123, %v2163
        %v2183 = vadd.f32 %v2124, %v2166
        %v2184 = vadd.f32 %v2125, %v2169
        %v2185 = vadd.f32 %v2126, %v2172
        %v2186 = vadd.f32 %v2127, %v2175
        %v2187 = vadd.f32 %v2128, %v2178
        %s2188 = scalar_lea.vmem %s1, 24
        %v2189 = vld [vmem:[%s2188] sm:$0xf]
        %v2191 = vsel %vm1812, %v2189, 0
        %2193 = vmatpush.msra.mxu0 0.0
        %2194 = vmatpush.msra.mxu0 0.0
        %2195 = vmatpush.msra.mxu0 0.0
        %2196 = vmatpush.msra.mxu0 0.0
        %2197 = vmatpush.msra.mxu0 0.0
        %2198 = vmatpush.msra.mxu0 0.0
        %2199 = vmatpush.msra.mxu0 0.0
        %2200 = vmatpush.msra.mxu0 0.0
        %2201 = vmatpush.msra.mxu0 0.0
        %2202 = vmatpush.msra.mxu0 0.0
        %2203 = vmatpush.msra.mxu0 0.0
        %2204 = vmatpush.msra.mxu0 0.0
        %2205 = vmatpush.msra.mxu0 0.0
        %2206 = vmatpush.msra.mxu0 0.0
        %2207 = vmatpush.msra.mxu0 0.0
        %2208 = vmatpush.msra.mxu0 %v2191
        %2209 = vmatmul.f32.gmra.mxu0 %v1861
        %v2210 = vpop.f32.mrf.mxu0
        %v2211 = vadd.f32 0.0, %v2210
        %2212 = vmatmul.f32.gmra.mxu0 %v1863
        %v2213 = vpop.f32.mrf.mxu0
        %v2214 = vadd.f32 0.0, %v2213
        %2215 = vmatmul.f32.gmra.mxu0 %v1865
        %v2216 = vpop.f32.mrf.mxu0
        %v2217 = vadd.f32 0.0, %v2216
        %2218 = vmatmul.f32.gmra.mxu0 %v1867
        %v2219 = vpop.f32.mrf.mxu0
        %v2220 = vadd.f32 0.0, %v2219
        %2221 = vmatmul.f32.gmra.mxu0 %v1869
        %v2222 = vpop.f32.mrf.mxu0
        %v2223 = vadd.f32 0.0, %v2222
        %2224 = vmatmul.f32.gmra.mxu0 %v1871
        %v2225 = vpop.f32.mrf.mxu0
        %v2226 = vadd.f32 0.0, %v2225
        %2227 = vmatmul.f32.gmra.mxu0 %v2015
        %v2228 = vpop.f32.mrf.mxu0
        %v2229 = vadd.f32 0.0, %v2228
        %2230 = vmatmul.f32.gmra.mxu0 %v1857
        %v2231 = vpop.f32.mrf.mxu0
        %v2232 = vadd.f32 0.0, %v2231
        %2233 = vdwg.mxu0
        %v2234 = vadd.f32 %v2180, %v2211
        %v2235 = vadd.f32 %v2181, %v2214
        %v2236 = vadd.f32 %v2182, %v2217
        %v2237 = vadd.f32 %v2183, %v2220
        %v2238 = vadd.f32 %v2184, %v2223
        %v2239 = vadd.f32 %v2185, %v2226
        %v2240 = vadd.f32 %v2186, %v2229
        %v2241 = vadd.f32 %v2187, %v2232
        %s2242 = scalar_lea.vmem %s1, 28
        %v2243 = vld [vmem:[%s2242] sm:$0xf]
        %v2245 = vsel %vm1812, %v2243, 0
        %2247 = vmatpush.msra.mxu0 0.0
        %2248 = vmatpush.msra.mxu0 0.0
        %2249 = vmatpush.msra.mxu0 0.0
        %2250 = vmatpush.msra.mxu0 0.0
        %2251 = vmatpush.msra.mxu0 0.0
        %2252 = vmatpush.msra.mxu0 0.0
        %2253 = vmatpush.msra.mxu0 0.0
        %2254 = vmatpush.msra.mxu0 0.0
        %2255 = vmatpush.msra.mxu0 0.0
        %2256 = vmatpush.msra.mxu0 0.0
        %2257 = vmatpush.msra.mxu0 0.0
        %2258 = vmatpush.msra.mxu0 0.0
        %2259 = vmatpush.msra.mxu0 0.0
        %2260 = vmatpush.msra.mxu0 0.0
        %2261 = vmatpush.msra.mxu0 0.0
        %2262 = vmatpush.msra.mxu0 %v2245
        %2263 = vmatmul.f32.gmra.mxu0 %v1800
        %v2264 = vpop.f32.mrf.mxu0
        %v2265 = vadd.f32 0.0, %v2264
        %2266 = vmatmul.f32.gmra.mxu0 %v1802
        %v2267 = vpop.f32.mrf.mxu0
        %v2268 = vadd.f32 0.0, %v2267
        %2269 = vmatmul.f32.gmra.mxu0 %v1804
        %v2270 = vpop.f32.mrf.mxu0
        %v2271 = vadd.f32 0.0, %v2270
        %2272 = vmatmul.f32.gmra.mxu0 %v1806
        %v2273 = vpop.f32.mrf.mxu0
        %v2274 = vadd.f32 0.0, %v2273
        %2275 = vmatmul.f32.gmra.mxu0 %v1808
        %v2276 = vpop.f32.mrf.mxu0
        %v2277 = vadd.f32 0.0, %v2276
        %2278 = vmatmul.f32.gmra.mxu0 %v1810
        %v2279 = vpop.f32.mrf.mxu0
        %v2280 = vadd.f32 0.0, %v2279
        %2281 = vmatmul.f32.gmra.mxu0 %v2075
        %v2282 = vpop.f32.mrf.mxu0
        %v2283 = vadd.f32 0.0, %v2282
        %2284 = vmatmul.f32.gmra.mxu0 %v1796
        %v2285 = vpop.f32.mrf.mxu0
        %v2286 = vadd.f32 0.0, %v2285
        %2287 = vdwg.mxu0
        %v2288 = vadd.f32 %v2234, %v2265
        %v2289 = vadd.f32 %v2235, %v2268
        %v2290 = vadd.f32 %v2236, %v2271
        %v2291 = vadd.f32 %v2237, %v2274
        %v2292 = vadd.f32 %v2238, %v2277
        %v2293 = vadd.f32 %v2239, %v2280
        %v2294 = vadd.f32 %v2240, %v2283
        %v2295 = vadd.f32 %v2241, %v2286
        %s2296 = scalar_lea.vmem %s1, 32
        %v2297 = vld [vmem:[%s2296] sm:$0xf]
        %v2299 = vsel %vm1812, %v2297, 0
        %2301 = vmatpush.msra.mxu0 0.0
        %2302 = vmatpush.msra.mxu0 0.0
        %2303 = vmatpush.msra.mxu0 0.0
        %2304 = vmatpush.msra.mxu0 0.0
        %2305 = vmatpush.msra.mxu0 0.0
        %2306 = vmatpush.msra.mxu0 0.0
        %2307 = vmatpush.msra.mxu0 0.0
        %2308 = vmatpush.msra.mxu0 0.0
        %2309 = vmatpush.msra.mxu0 0.0
        %2310 = vmatpush.msra.mxu0 0.0
        %2311 = vmatpush.msra.mxu0 0.0
        %2312 = vmatpush.msra.mxu0 0.0
        %2313 = vmatpush.msra.mxu0 0.0
        %2314 = vmatpush.msra.mxu0 0.0
        %2315 = vmatpush.msra.mxu0 0.0
        %2316 = vmatpush.msra.mxu0 %v2299
        %2317 = vmatmul.f32.gmra.mxu0 %v1948
        %v2318 = vpop.f32.mrf.mxu0
        %v2319 = vadd.f32 0.0, %v2318
        %2320 = vmatmul.f32.gmra.mxu0 %v1950
        %v2321 = vpop.f32.mrf.mxu0
        %v2322 = vadd.f32 0.0, %v2321
        %2323 = vmatmul.f32.gmra.mxu0 %v1952
        %v2324 = vpop.f32.mrf.mxu0
        %v2325 = vadd.f32 0.0, %v2324
        %2326 = vmatmul.f32.gmra.mxu0 %v1954
        %v2327 = vpop.f32.mrf.mxu0
        %v2328 = vadd.f32 0.0, %v2327
        %2329 = vmatmul.f32.gmra.mxu0 %v1956
        %v2330 = vpop.f32.mrf.mxu0
        %v2331 = vadd.f32 0.0, %v2330
        %2332 = vmatmul.f32.gmra.mxu0 %v1958
        %v2333 = vpop.f32.mrf.mxu0
        %v2334 = vadd.f32 0.0, %v2333
        %2335 = vmatmul.f32.gmra.mxu0 %v2134
        %v2336 = vpop.f32.mrf.mxu0
        %v2337 = vadd.f32 0.0, %v2336
        %2338 = vmatmul.f32.gmra.mxu0 %v1944
        %v2339 = vpop.f32.mrf.mxu0
        %v2340 = vadd.f32 0.0, %v2339
        %2341 = vdwg.mxu0
        %v2342 = vadd.f32 %v2288, %v2319
        %v2343 = vadd.f32 %v2289, %v2322
        %v2344 = vadd.f32 %v2290, %v2325
        %v2345 = vadd.f32 %v2291, %v2328
        %v2346 = vadd.f32 %v2292, %v2331
        %v2347 = vadd.f32 %v2293, %v2334
        %v2348 = vadd.f32 %v2294, %v2337
        %v2349 = vadd.f32 %v2295, %v2340
        %v2350 = vld [vmem:[%s2] sm:$0x1]
        %v2352 = vperm.slane %v2350, 0
        %v2354 = vadd.f32 %v2342, %v2352
        %v2355 = vadd.f32 %v2343, %v2352
        %v2356 = vadd.f32 %v2344, %v2352
        %v2357 = vadd.f32 %v2345, %v2352
        %v2358 = vadd.f32 %v2346, %v2352
        %v2359 = vadd.f32 %v2347, %v2352
        %v2360 = vadd.f32 %v2348, %v2352
        %v2361 = vadd.f32 %v2349, %v2352
        %v2362 = vmax.f32 %v2354, 0.0
        %v2363 = vmax.f32 %v2355, 0.0
        %v2364 = vmax.f32 %v2356, 0.0
        %v2365 = vmax.f32 %v2357, 0.0
        %v2366 = vmax.f32 %v2358, 0.0
        %v2367 = vmax.f32 %v2359, 0.0
        %v2368 = vmax.f32 %v2360, 0.0
        %v2369 = vmax.f32 %v2361, 0.0
        %v2378 = vrot.slane %v2362, 7
        %v2379 = vrot.slane %v2363, 7
        %v2380 = vrot.slane %v2364, 7
        %v2381 = vrot.slane %v2365, 7
        %v2382 = vrot.slane %v2366, 7
        %v2383 = vrot.slane %v2367, 7
        %v2384 = vrot.slane %v2368, 7
        %v2385 = vrot.slane %v2369, 7
        %v2394 = vsel %vm1733, 0.0, %v2378
        %v2395 = vsel %vm1733, 0.0, %v2379
        %v2396 = vsel %vm1733, 0.0, %v2380
        %v2397 = vsel %vm1733, 0.0, %v2381
        %v2398 = vsel %vm1733, 0.0, %v2382
        %v2399 = vsel %vm1733, 0.0, %v2383
        %v2400 = vsel %vm1733, 0.0, %v2384
        %v2401 = vsel %vm1733, 0.0, %v2385
        %v2402 = vsel %vm1733, %v2378, 0.0
        %v2403 = vsel %vm1733, %v2379, 0.0
        %v2404 = vsel %vm1733, %v2380, 0.0
        %v2405 = vsel %vm1733, %v2381, 0.0
        %v2406 = vsel %vm1733, %v2382, 0.0
        %v2407 = vsel %vm1733, %v2383, 0.0
        %v2408 = vsel %vm1733, %v2384, 0.0
        %v2409 = vsel %vm1733, %v2385, 0.0
        %v2410 = vld [vmem:[#allocation2] sm:$0xff]
        %v2411 = vld [vmem:[#allocation2 + $0x8] sm:$0xff]
        %v2412 = vld [vmem:[#allocation2 + $0x10] sm:$0xff]
        %v2413 = vld [vmem:[#allocation2 + $0x18] sm:$0xff]
        %v2414 = vld [vmem:[#allocation2 + $0x20] sm:$0xff]
        %v2415 = vld [vmem:[#allocation2 + $0x28] sm:$0xff]
        %v2416 = vld [vmem:[#allocation2 + $0x30] sm:$0xff]
        %v2417 = vld [vmem:[#allocation2 + $0x38] sm:$0xff]
        %v2418 = vld [vmem:[#allocation2 + $0x40] sm:$0xff]
        %v2419 = vld [vmem:[#allocation2 + $0x48] sm:$0xff]
        %v2420 = vld [vmem:[#allocation2 + $0x50] sm:$0xff]
        %v2421 = vld [vmem:[#allocation2 + $0x58] sm:$0xff]
        %v2422 = vld [vmem:[#allocation2 + $0x60] sm:$0xff]
        %v2423 = vld [vmem:[#allocation2 + $0x68] sm:$0xff]
        %v2424 = vld [vmem:[#allocation2 + $0x70] sm:$0xff]
        %v2425 = vld [vmem:[#allocation2 + $0x78] sm:$0xff]
        %v2440 = vrot.slane %v2394, 1
        %v2441 = vrot.slane %v2402, 1
        %v2442 = vsel %vm1769, %v2440, %v2441
        %v2443 = vrot.slane %v2395, 1
        %v2444 = vrot.slane %v2403, 1
        %v2445 = vsel %vm1769, %v2443, %v2444
        %v2446 = vrot.slane %v2396, 1
        %v2447 = vrot.slane %v2404, 1
        %v2448 = vsel %vm1769, %v2446, %v2447
        %v2449 = vrot.slane %v2397, 1
        %v2450 = vrot.slane %v2405, 1
        %v2451 = vsel %vm1769, %v2449, %v2450
        %v2452 = vrot.slane %v2398, 1
        %v2453 = vrot.slane %v2406, 1
        %v2454 = vsel %vm1769, %v2452, %v2453
        %v2455 = vrot.slane %v2399, 1
        %v2456 = vrot.slane %v2407, 1
        %v2457 = vsel %vm1769, %v2455, %v2456
        %v2458 = vrot.slane %v2400, 1
        %v2459 = vrot.slane %v2408, 1
        %v2460 = vsel %vm1769, %v2458, %v2459
        %s2469 = scalar_lea.vmem [#allocation2], 128
        %v2470 = vld [vmem:[%s2469] sm:$0xff]
        %v2471 = vld [vmem:[%s2469 + $0x8] sm:$0xff]
        %v2472 = vld [vmem:[%s2469 + $0x10] sm:$0xff]
        %v2473 = vld [vmem:[%s2469 + $0x18] sm:$0xff]
        %v2474 = vld [vmem:[%s2469 + $0x20] sm:$0xff]
        %v2475 = vld [vmem:[%s2469 + $0x28] sm:$0xff]
        %v2476 = vld [vmem:[%s2469 + $0x30] sm:$0xff]
        %v2477 = vld [vmem:[%s2469 + $0x38] sm:$0xff]
        %v2478 = vld [vmem:[%s2469 + $0x40] sm:$0xff]
        %v2479 = vld [vmem:[%s2469 + $0x48] sm:$0xff]
        %v2480 = vld [vmem:[%s2469 + $0x50] sm:$0xff]
        %v2481 = vld [vmem:[%s2469 + $0x58] sm:$0xff]
        %v2482 = vld [vmem:[%s2469 + $0x60] sm:$0xff]
        %v2483 = vld [vmem:[%s2469 + $0x68] sm:$0xff]
        %v2484 = vld [vmem:[%s2469 + $0x70] sm:$0xff]
        %v2485 = vld [vmem:[%s2469 + $0x78] sm:$0xff]
        %2486 = vmatpush.msra.mxu0 %v2485
        %2487 = vmatpush.msra.mxu0 %v2484
        %2488 = vmatpush.msra.mxu0 %v2483
        %2489 = vmatpush.msra.mxu0 %v2482
        %2490 = vmatpush.msra.mxu0 %v2481
        %2491 = vmatpush.msra.mxu0 %v2480
        %2492 = vmatpush.msra.mxu0 %v2479
        %2493 = vmatpush.msra.mxu0 %v2478
        %2494 = vmatpush.msra.mxu0 %v2477
        %2495 = vmatpush.msra.mxu0 %v2476
        %2496 = vmatpush.msra.mxu0 %v2475
        %2497 = vmatpush.msra.mxu0 %v2474
        %2498 = vmatpush.msra.mxu0 %v2473
        %2499 = vmatpush.msra.mxu0 %v2472
        %2500 = vmatpush.msra.mxu0 %v2471
        %2501 = vmatpush.msra.mxu0 %v2470
        %2502 = vmatmul.f32.gmra.mxu0 %v1772
        %v2503 = vpop.f32.mrf.mxu0
        %v2504 = vadd.f32 0.0, %v2503
        %2505 = vmatmul.f32.gmra.mxu0 %v2442
        %v2506 = vpop.f32.mrf.mxu0
        %v2507 = vadd.f32 0.0, %v2506
        %2508 = vmatmul.f32.gmra.mxu0 %v2445
        %v2509 = vpop.f32.mrf.mxu0
        %v2510 = vadd.f32 0.0, %v2509
        %2511 = vmatmul.f32.gmra.mxu0 %v2448
        %v2512 = vpop.f32.mrf.mxu0
        %v2513 = vadd.f32 0.0, %v2512
        %2514 = vmatmul.f32.gmra.mxu0 %v2451
        %v2515 = vpop.f32.mrf.mxu0
        %v2516 = vadd.f32 0.0, %v2515
        %2517 = vmatmul.f32.gmra.mxu0 %v2454
        %v2518 = vpop.f32.mrf.mxu0
        %v2519 = vadd.f32 0.0, %v2518
        %2520 = vmatmul.f32.gmra.mxu0 %v2457
        %v2521 = vpop.f32.mrf.mxu0
        %v2522 = vadd.f32 0.0, %v2521
        %2523 = vmatmul.f32.gmra.mxu0 %v2460
        %v2524 = vpop.f32.mrf.mxu0
        %v2525 = vadd.f32 0.0, %v2524
        %2526 = vdwg.mxu0
        %2527 = vmatpush.msra.mxu0 %v2425
        %2528 = vmatpush.msra.mxu0 %v2424
        %2529 = vmatpush.msra.mxu0 %v2423
        %2530 = vmatpush.msra.mxu0 %v2422
        %2531 = vmatpush.msra.mxu0 %v2421
        %2532 = vmatpush.msra.mxu0 %v2420
        %2533 = vmatpush.msra.mxu0 %v2419
        %2534 = vmatpush.msra.mxu0 %v2418
        %2535 = vmatpush.msra.mxu0 %v2417
        %2536 = vmatpush.msra.mxu0 %v2416
        %2537 = vmatpush.msra.mxu0 %v2415
        %2538 = vmatpush.msra.mxu0 %v2414
        %2539 = vmatpush.msra.mxu0 %v2413
        %2540 = vmatpush.msra.mxu0 %v2412
        %2541 = vmatpush.msra.mxu0 %v2411
        %2542 = vmatpush.msra.mxu0 %v2410
        %2543 = vmatmul.f32.gmra.mxu0 %v1734
        %v2544 = vpop.f32.mrf.mxu0
        %v2545 = vadd.f32 %v2504, %v2544
        %2546 = vmatmul.f32.gmra.mxu0 %v2394
        %v2547 = vpop.f32.mrf.mxu0
        %v2548 = vadd.f32 %v2507, %v2547
        %2549 = vmatmul.f32.gmra.mxu0 %v2395
        %v2550 = vpop.f32.mrf.mxu0
        %v2551 = vadd.f32 %v2510, %v2550
        %2552 = vmatmul.f32.gmra.mxu0 %v2396
        %v2553 = vpop.f32.mrf.mxu0
        %v2554 = vadd.f32 %v2513, %v2553
        %2555 = vmatmul.f32.gmra.mxu0 %v2397
        %v2556 = vpop.f32.mrf.mxu0
        %v2557 = vadd.f32 %v2516, %v2556
        %2558 = vmatmul.f32.gmra.mxu0 %v2398
        %v2559 = vpop.f32.mrf.mxu0
        %v2560 = vadd.f32 %v2519, %v2559
        %2561 = vmatmul.f32.gmra.mxu0 %v2399
        %v2562 = vpop.f32.mrf.mxu0
        %v2563 = vadd.f32 %v2522, %v2562
        %2564 = vmatmul.f32.gmra.mxu0 %v2400
        %v2565 = vpop.f32.mrf.mxu0
        %v2566 = vadd.f32 %v2525, %v2565
        %2567 = vdwg.mxu0
        %v2568 = vrot.slane %v2394, 2
        %v2569 = vrot.slane %v2402, 2
        %v2570 = vsel %vm1917, %v2568, %v2569
        %v2571 = vrot.slane %v2395, 2
        %v2572 = vrot.slane %v2403, 2
        %v2573 = vsel %vm1917, %v2571, %v2572
        %v2574 = vrot.slane %v2396, 2
        %v2575 = vrot.slane %v2404, 2
        %v2576 = vsel %vm1917, %v2574, %v2575
        %v2577 = vrot.slane %v2397, 2
        %v2578 = vrot.slane %v2405, 2
        %v2579 = vsel %vm1917, %v2577, %v2578
        %v2580 = vrot.slane %v2398, 2
        %v2581 = vrot.slane %v2406, 2
        %v2582 = vsel %vm1917, %v2580, %v2581
        %v2583 = vrot.slane %v2399, 2
        %v2584 = vrot.slane %v2407, 2
        %v2585 = vsel %vm1917, %v2583, %v2584
        %v2586 = vrot.slane %v2400, 2
        %v2587 = vrot.slane %v2408, 2
        %v2588 = vsel %vm1917, %v2586, %v2587
        %s2597 = scalar_lea.vmem [#allocation2], 256
        %v2598 = vld [vmem:[%s2597] sm:$0xff]
        %v2599 = vld [vmem:[%s2597 + $0x8] sm:$0xff]
        %v2600 = vld [vmem:[%s2597 + $0x10] sm:$0xff]
        %v2601 = vld [vmem:[%s2597 + $0x18] sm:$0xff]
        %v2602 = vld [vmem:[%s2597 + $0x20] sm:$0xff]
        %v2603 = vld [vmem:[%s2597 + $0x28] sm:$0xff]
        %v2604 = vld [vmem:[%s2597 + $0x30] sm:$0xff]
        %v2605 = vld [vmem:[%s2597 + $0x38] sm:$0xff]
        %v2606 = vld [vmem:[%s2597 + $0x40] sm:$0xff]
        %v2607 = vld [vmem:[%s2597 + $0x48] sm:$0xff]
        %v2608 = vld [vmem:[%s2597 + $0x50] sm:$0xff]
        %v2609 = vld [vmem:[%s2597 + $0x58] sm:$0xff]
        %v2610 = vld [vmem:[%s2597 + $0x60] sm:$0xff]
        %v2611 = vld [vmem:[%s2597 + $0x68] sm:$0xff]
        %v2612 = vld [vmem:[%s2597 + $0x70] sm:$0xff]
        %v2613 = vld [vmem:[%s2597 + $0x78] sm:$0xff]
        %2614 = vmatpush.msra.mxu0 %v2613
        %2615 = vmatpush.msra.mxu0 %v2612
        %2616 = vmatpush.msra.mxu0 %v2611
        %2617 = vmatpush.msra.mxu0 %v2610
        %2618 = vmatpush.msra.mxu0 %v2609
        %2619 = vmatpush.msra.mxu0 %v2608
        %2620 = vmatpush.msra.mxu0 %v2607
        %2621 = vmatpush.msra.mxu0 %v2606
        %2622 = vmatpush.msra.mxu0 %v2605
        %2623 = vmatpush.msra.mxu0 %v2604
        %2624 = vmatpush.msra.mxu0 %v2603
        %2625 = vmatpush.msra.mxu0 %v2602
        %2626 = vmatpush.msra.mxu0 %v2601
        %2627 = vmatpush.msra.mxu0 %v2600
        %2628 = vmatpush.msra.mxu0 %v2599
        %2629 = vmatpush.msra.mxu0 %v2598
        %2630 = vmatmul.f32.gmra.mxu0 %v1920
        %v2631 = vpop.f32.mrf.mxu0
        %v2632 = vadd.f32 0.0, %v2631
        %2633 = vmatmul.f32.gmra.mxu0 %v2570
        %v2634 = vpop.f32.mrf.mxu0
        %v2635 = vadd.f32 0.0, %v2634
        %2636 = vmatmul.f32.gmra.mxu0 %v2573
        %v2637 = vpop.f32.mrf.mxu0
        %v2638 = vadd.f32 0.0, %v2637
        %2639 = vmatmul.f32.gmra.mxu0 %v2576
        %v2640 = vpop.f32.mrf.mxu0
        %v2641 = vadd.f32 0.0, %v2640
        %2642 = vmatmul.f32.gmra.mxu0 %v2579
        %v2643 = vpop.f32.mrf.mxu0
        %v2644 = vadd.f32 0.0, %v2643
        %2645 = vmatmul.f32.gmra.mxu0 %v2582
        %v2646 = vpop.f32.mrf.mxu0
        %v2647 = vadd.f32 0.0, %v2646
        %2648 = vmatmul.f32.gmra.mxu0 %v2585
        %v2649 = vpop.f32.mrf.mxu0
        %v2650 = vadd.f32 0.0, %v2649
        %2651 = vmatmul.f32.gmra.mxu0 %v2588
        %v2652 = vpop.f32.mrf.mxu0
        %v2653 = vadd.f32 0.0, %v2652
        %2654 = vdwg.mxu0
        %v2655 = vadd.f32 %v2545, %v2632
        %v2656 = vadd.f32 %v2548, %v2635
        %v2657 = vadd.f32 %v2551, %v2638
        %v2658 = vadd.f32 %v2554, %v2641
        %v2659 = vadd.f32 %v2557, %v2644
        %v2660 = vadd.f32 %v2560, %v2647
        %v2661 = vadd.f32 %v2563, %v2650
        %v2662 = vadd.f32 %v2566, %v2653
        %s2663 = scalar_lea.vmem [#allocation2], 384
        %v2664 = vld [vmem:[%s2663] sm:$0xff]
        %v2665 = vld [vmem:[%s2663 + $0x8] sm:$0xff]
        %v2666 = vld [vmem:[%s2663 + $0x10] sm:$0xff]
        %v2667 = vld [vmem:[%s2663 + $0x18] sm:$0xff]
        %v2668 = vld [vmem:[%s2663 + $0x20] sm:$0xff]
        %v2669 = vld [vmem:[%s2663 + $0x28] sm:$0xff]
        %v2670 = vld [vmem:[%s2663 + $0x30] sm:$0xff]
        %v2671 = vld [vmem:[%s2663 + $0x38] sm:$0xff]
        %v2672 = vld [vmem:[%s2663 + $0x40] sm:$0xff]
        %v2673 = vld [vmem:[%s2663 + $0x48] sm:$0xff]
        %v2674 = vld [vmem:[%s2663 + $0x50] sm:$0xff]
        %v2675 = vld [vmem:[%s2663 + $0x58] sm:$0xff]
        %v2676 = vld [vmem:[%s2663 + $0x60] sm:$0xff]
        %v2677 = vld [vmem:[%s2663 + $0x68] sm:$0xff]
        %v2678 = vld [vmem:[%s2663 + $0x70] sm:$0xff]
        %v2679 = vld [vmem:[%s2663 + $0x78] sm:$0xff]
        %2680 = vmatpush.msra.mxu0 %v2679
        %2681 = vmatpush.msra.mxu0 %v2678
        %2682 = vmatpush.msra.mxu0 %v2677
        %2683 = vmatpush.msra.mxu0 %v2676
        %2684 = vmatpush.msra.mxu0 %v2675
        %2685 = vmatpush.msra.mxu0 %v2674
        %2686 = vmatpush.msra.mxu0 %v2673
        %2687 = vmatpush.msra.mxu0 %v2672
        %2688 = vmatpush.msra.mxu0 %v2671
        %2689 = vmatpush.msra.mxu0 %v2670
        %2690 = vmatpush.msra.mxu0 %v2669
        %2691 = vmatpush.msra.mxu0 %v2668
        %2692 = vmatpush.msra.mxu0 %v2667
        %2693 = vmatpush.msra.mxu0 %v2666
        %2694 = vmatpush.msra.mxu0 %v2665
        %2695 = vmatpush.msra.mxu0 %v2664
        %2696 = vmatmul.f32.gmra.mxu0 %v2394
        %v2697 = vpop.f32.mrf.mxu0
        %v2698 = vadd.f32 0.0, %v2697
        %2699 = vmatmul.f32.gmra.mxu0 %v2395
        %v2700 = vpop.f32.mrf.mxu0
        %v2701 = vadd.f32 0.0, %v2700
        %2702 = vmatmul.f32.gmra.mxu0 %v2396
        %v2703 = vpop.f32.mrf.mxu0
        %v2704 = vadd.f32 0.0, %v2703
        %2705 = vmatmul.f32.gmra.mxu0 %v2397
        %v2706 = vpop.f32.mrf.mxu0
        %v2707 = vadd.f32 0.0, %v2706
        %2708 = vmatmul.f32.gmra.mxu0 %v2398
        %v2709 = vpop.f32.mrf.mxu0
        %v2710 = vadd.f32 0.0, %v2709
        %2711 = vmatmul.f32.gmra.mxu0 %v2399
        %v2712 = vpop.f32.mrf.mxu0
        %v2713 = vadd.f32 0.0, %v2712
        %2714 = vmatmul.f32.gmra.mxu0 %v2400
        %v2715 = vpop.f32.mrf.mxu0
        %v2716 = vadd.f32 0.0, %v2715
        %2717 = vmatmul.f32.gmra.mxu0 %v2401
        %v2718 = vpop.f32.mrf.mxu0
        %v2719 = vadd.f32 0.0, %v2718
        %2720 = vdwg.mxu0
        %v2721 = vadd.f32 %v2655, %v2698
        %v2722 = vadd.f32 %v2656, %v2701
        %v2723 = vadd.f32 %v2657, %v2704
        %v2724 = vadd.f32 %v2658, %v2707
        %v2725 = vadd.f32 %v2659, %v2710
        %v2726 = vadd.f32 %v2660, %v2713
        %v2727 = vadd.f32 %v2661, %v2716
        %v2728 = vadd.f32 %v2662, %v2719
        %v2731 = vrot.slane %v2401, 1
        %v2732 = vrot.slane %v2409, 1
        %v2733 = vsel %vm1769, %v2731, %v2732
        %s2735 = scalar_lea.vmem [#allocation2], 512
        %v2736 = vld [vmem:[%s2735] sm:$0xff]
        %v2737 = vld [vmem:[%s2735 + $0x8] sm:$0xff]
        %v2738 = vld [vmem:[%s2735 + $0x10] sm:$0xff]
        %v2739 = vld [vmem:[%s2735 + $0x18] sm:$0xff]
        %v2740 = vld [vmem:[%s2735 + $0x20] sm:$0xff]
        %v2741 = vld [vmem:[%s2735 + $0x28] sm:$0xff]
        %v2742 = vld [vmem:[%s2735 + $0x30] sm:$0xff]
        %v2743 = vld [vmem:[%s2735 + $0x38] sm:$0xff]
        %v2744 = vld [vmem:[%s2735 + $0x40] sm:$0xff]
        %v2745 = vld [vmem:[%s2735 + $0x48] sm:$0xff]
        %v2746 = vld [vmem:[%s2735 + $0x50] sm:$0xff]
        %v2747 = vld [vmem:[%s2735 + $0x58] sm:$0xff]
        %v2748 = vld [vmem:[%s2735 + $0x60] sm:$0xff]
        %v2749 = vld [vmem:[%s2735 + $0x68] sm:$0xff]
        %v2750 = vld [vmem:[%s2735 + $0x70] sm:$0xff]
        %v2751 = vld [vmem:[%s2735 + $0x78] sm:$0xff]
        %2752 = vmatpush.msra.mxu0 %v2751
        %2753 = vmatpush.msra.mxu0 %v2750
        %2754 = vmatpush.msra.mxu0 %v2749
        %2755 = vmatpush.msra.mxu0 %v2748
        %2756 = vmatpush.msra.mxu0 %v2747
        %2757 = vmatpush.msra.mxu0 %v2746
        %2758 = vmatpush.msra.mxu0 %v2745
        %2759 = vmatpush.msra.mxu0 %v2744
        %2760 = vmatpush.msra.mxu0 %v2743
        %2761 = vmatpush.msra.mxu0 %v2742
        %2762 = vmatpush.msra.mxu0 %v2741
        %2763 = vmatpush.msra.mxu0 %v2740
        %2764 = vmatpush.msra.mxu0 %v2739
        %2765 = vmatpush.msra.mxu0 %v2738
        %2766 = vmatpush.msra.mxu0 %v2737
        %2767 = vmatpush.msra.mxu0 %v2736
        %2768 = vmatmul.f32.gmra.mxu0 %v2442
        %v2769 = vpop.f32.mrf.mxu0
        %v2770 = vadd.f32 0.0, %v2769
        %2771 = vmatmul.f32.gmra.mxu0 %v2445
        %v2772 = vpop.f32.mrf.mxu0
        %v2773 = vadd.f32 0.0, %v2772
        %2774 = vmatmul.f32.gmra.mxu0 %v2448
        %v2775 = vpop.f32.mrf.mxu0
        %v2776 = vadd.f32 0.0, %v2775
        %2777 = vmatmul.f32.gmra.mxu0 %v2451
        %v2778 = vpop.f32.mrf.mxu0
        %v2779 = vadd.f32 0.0, %v2778
        %2780 = vmatmul.f32.gmra.mxu0 %v2454
        %v2781 = vpop.f32.mrf.mxu0
        %v2782 = vadd.f32 0.0, %v2781
        %2783 = vmatmul.f32.gmra.mxu0 %v2457
        %v2784 = vpop.f32.mrf.mxu0
        %v2785 = vadd.f32 0.0, %v2784
        %2786 = vmatmul.f32.gmra.mxu0 %v2460
        %v2787 = vpop.f32.mrf.mxu0
        %v2788 = vadd.f32 0.0, %v2787
        %2789 = vmatmul.f32.gmra.mxu0 %v2733
        %v2790 = vpop.f32.mrf.mxu0
        %v2791 = vadd.f32 0.0, %v2790
        %2792 = vdwg.mxu0
        %v2793 = vadd.f32 %v2721, %v2770
        %v2794 = vadd.f32 %v2722, %v2773
        %v2795 = vadd.f32 %v2723, %v2776
        %v2796 = vadd.f32 %v2724, %v2779
        %v2797 = vadd.f32 %v2725, %v2782
        %v2798 = vadd.f32 %v2726, %v2785
        %v2799 = vadd.f32 %v2727, %v2788
        %v2800 = vadd.f32 %v2728, %v2791
        %v2801 = vrot.slane %v2401, 2
        %v2802 = vrot.slane %v2409, 2
        %v2803 = vsel %vm1917, %v2801, %v2802
        %s2805 = scalar_lea.vmem [#allocation2], 640
        %v2806 = vld [vmem:[%s2805] sm:$0xff]
        %v2807 = vld [vmem:[%s2805 + $0x8] sm:$0xff]
        %v2808 = vld [vmem:[%s2805 + $0x10] sm:$0xff]
        %v2809 = vld [vmem:[%s2805 + $0x18] sm:$0xff]
        %v2810 = vld [vmem:[%s2805 + $0x20] sm:$0xff]
        %v2811 = vld [vmem:[%s2805 + $0x28] sm:$0xff]
        %v2812 = vld [vmem:[%s2805 + $0x30] sm:$0xff]
        %v2813 = vld [vmem:[%s2805 + $0x38] sm:$0xff]
        %v2814 = vld [vmem:[%s2805 + $0x40] sm:$0xff]
        %v2815 = vld [vmem:[%s2805 + $0x48] sm:$0xff]
        %v2816 = vld [vmem:[%s2805 + $0x50] sm:$0xff]
        %v2817 = vld [vmem:[%s2805 + $0x58] sm:$0xff]
        %v2818 = vld [vmem:[%s2805 + $0x60] sm:$0xff]
        %v2819 = vld [vmem:[%s2805 + $0x68] sm:$0xff]
        %v2820 = vld [vmem:[%s2805 + $0x70] sm:$0xff]
        %v2821 = vld [vmem:[%s2805 + $0x78] sm:$0xff]
        %2822 = vmatpush.msra.mxu0 %v2821
        %2823 = vmatpush.msra.mxu0 %v2820
        %2824 = vmatpush.msra.mxu0 %v2819
        %2825 = vmatpush.msra.mxu0 %v2818
        %2826 = vmatpush.msra.mxu0 %v2817
        %2827 = vmatpush.msra.mxu0 %v2816
        %2828 = vmatpush.msra.mxu0 %v2815
        %2829 = vmatpush.msra.mxu0 %v2814
        %2830 = vmatpush.msra.mxu0 %v2813
        %2831 = vmatpush.msra.mxu0 %v2812
        %2832 = vmatpush.msra.mxu0 %v2811
        %2833 = vmatpush.msra.mxu0 %v2810
        %2834 = vmatpush.msra.mxu0 %v2809
        %2835 = vmatpush.msra.mxu0 %v2808
        %2836 = vmatpush.msra.mxu0 %v2807
        %2837 = vmatpush.msra.mxu0 %v2806
        %2838 = vmatmul.f32.gmra.mxu0 %v2570
        %v2839 = vpop.f32.mrf.mxu0
        %v2840 = vadd.f32 0.0, %v2839
        %2841 = vmatmul.f32.gmra.mxu0 %v2573
        %v2842 = vpop.f32.mrf.mxu0
        %v2843 = vadd.f32 0.0, %v2842
        %2844 = vmatmul.f32.gmra.mxu0 %v2576
        %v2845 = vpop.f32.mrf.mxu0
        %v2846 = vadd.f32 0.0, %v2845
        %2847 = vmatmul.f32.gmra.mxu0 %v2579
        %v2848 = vpop.f32.mrf.mxu0
        %v2849 = vadd.f32 0.0, %v2848
        %2850 = vmatmul.f32.gmra.mxu0 %v2582
        %v2851 = vpop.f32.mrf.mxu0
        %v2852 = vadd.f32 0.0, %v2851
        %2853 = vmatmul.f32.gmra.mxu0 %v2585
        %v2854 = vpop.f32.mrf.mxu0
        %v2855 = vadd.f32 0.0, %v2854
        %2856 = vmatmul.f32.gmra.mxu0 %v2588
        %v2857 = vpop.f32.mrf.mxu0
        %v2858 = vadd.f32 0.0, %v2857
        %2859 = vmatmul.f32.gmra.mxu0 %v2803
        %v2860 = vpop.f32.mrf.mxu0
        %v2861 = vadd.f32 0.0, %v2860
        %2862 = vdwg.mxu0
        %v2863 = vadd.f32 %v2793, %v2840
        %v2864 = vadd.f32 %v2794, %v2843
        %v2865 = vadd.f32 %v2795, %v2846
        %v2866 = vadd.f32 %v2796, %v2849
        %v2867 = vadd.f32 %v2797, %v2852
        %v2868 = vadd.f32 %v2798, %v2855
        %v2869 = vadd.f32 %v2799, %v2858
        %v2870 = vadd.f32 %v2800, %v2861
        %s2871 = scalar_lea.vmem [#allocation2], 768
        %v2872 = vld [vmem:[%s2871] sm:$0xff]
        %v2873 = vld [vmem:[%s2871 + $0x8] sm:$0xff]
        %v2874 = vld [vmem:[%s2871 + $0x10] sm:$0xff]
        %v2875 = vld [vmem:[%s2871 + $0x18] sm:$0xff]
        %v2876 = vld [vmem:[%s2871 + $0x20] sm:$0xff]
        %v2877 = vld [vmem:[%s2871 + $0x28] sm:$0xff]
        %v2878 = vld [vmem:[%s2871 + $0x30] sm:$0xff]
        %v2879 = vld [vmem:[%s2871 + $0x38] sm:$0xff]
        %v2880 = vld [vmem:[%s2871 + $0x40] sm:$0xff]
        %v2881 = vld [vmem:[%s2871 + $0x48] sm:$0xff]
        %v2882 = vld [vmem:[%s2871 + $0x50] sm:$0xff]
        %v2883 = vld [vmem:[%s2871 + $0x58] sm:$0xff]
        %v2884 = vld [vmem:[%s2871 + $0x60] sm:$0xff]
        %v2885 = vld [vmem:[%s2871 + $0x68] sm:$0xff]
        %v2886 = vld [vmem:[%s2871 + $0x70] sm:$0xff]
        %v2887 = vld [vmem:[%s2871 + $0x78] sm:$0xff]
        %2888 = vmatpush.msra.mxu0 %v2887
        %2889 = vmatpush.msra.mxu0 %v2886
        %2890 = vmatpush.msra.mxu0 %v2885
        %2891 = vmatpush.msra.mxu0 %v2884
        %2892 = vmatpush.msra.mxu0 %v2883
        %2893 = vmatpush.msra.mxu0 %v2882
        %2894 = vmatpush.msra.mxu0 %v2881
        %2895 = vmatpush.msra.mxu0 %v2880
        %2896 = vmatpush.msra.mxu0 %v2879
        %2897 = vmatpush.msra.mxu0 %v2878
        %2898 = vmatpush.msra.mxu0 %v2877
        %2899 = vmatpush.msra.mxu0 %v2876
        %2900 = vmatpush.msra.mxu0 %v2875
        %2901 = vmatpush.msra.mxu0 %v2874
        %2902 = vmatpush.msra.mxu0 %v2873
        %2903 = vmatpush.msra.mxu0 %v2872
        %2904 = vmatmul.f32.gmra.mxu0 %v2395
        %v2905 = vpop.f32.mrf.mxu0
        %v2906 = vadd.f32 0.0, %v2905
        %2907 = vmatmul.f32.gmra.mxu0 %v2396
        %v2908 = vpop.f32.mrf.mxu0
        %v2909 = vadd.f32 0.0, %v2908
        %2910 = vmatmul.f32.gmra.mxu0 %v2397
        %v2911 = vpop.f32.mrf.mxu0
        %v2912 = vadd.f32 0.0, %v2911
        %2913 = vmatmul.f32.gmra.mxu0 %v2398
        %v2914 = vpop.f32.mrf.mxu0
        %v2915 = vadd.f32 0.0, %v2914
        %2916 = vmatmul.f32.gmra.mxu0 %v2399
        %v2917 = vpop.f32.mrf.mxu0
        %v2918 = vadd.f32 0.0, %v2917
        %2919 = vmatmul.f32.gmra.mxu0 %v2400
        %v2920 = vpop.f32.mrf.mxu0
        %v2921 = vadd.f32 0.0, %v2920
        %2922 = vmatmul.f32.gmra.mxu0 %v2401
        %v2923 = vpop.f32.mrf.mxu0
        %v2924 = vadd.f32 0.0, %v2923
        %2925 = vmatmul.f32.gmra.mxu0 %v1734
        %v2926 = vpop.f32.mrf.mxu0
        %v2927 = vadd.f32 0.0, %v2926
        %2928 = vdwg.mxu0
        %v2929 = vadd.f32 %v2863, %v2906
        %v2930 = vadd.f32 %v2864, %v2909
        %v2931 = vadd.f32 %v2865, %v2912
        %v2932 = vadd.f32 %v2866, %v2915
        %v2933 = vadd.f32 %v2867, %v2918
        %v2934 = vadd.f32 %v2868, %v2921
        %v2935 = vadd.f32 %v2869, %v2924
        %v2936 = vadd.f32 %v2870, %v2927
        %s2937 = scalar_lea.vmem [#allocation2], 896
        %v2938 = vld [vmem:[%s2937] sm:$0xff]
        %v2939 = vld [vmem:[%s2937 + $0x8] sm:$0xff]
        %v2940 = vld [vmem:[%s2937 + $0x10] sm:$0xff]
        %v2941 = vld [vmem:[%s2937 + $0x18] sm:$0xff]
        %v2942 = vld [vmem:[%s2937 + $0x20] sm:$0xff]
        %v2943 = vld [vmem:[%s2937 + $0x28] sm:$0xff]
        %v2944 = vld [vmem:[%s2937 + $0x30] sm:$0xff]
        %v2945 = vld [vmem:[%s2937 + $0x38] sm:$0xff]
        %v2946 = vld [vmem:[%s2937 + $0x40] sm:$0xff]
        %v2947 = vld [vmem:[%s2937 + $0x48] sm:$0xff]
        %v2948 = vld [vmem:[%s2937 + $0x50] sm:$0xff]
        %v2949 = vld [vmem:[%s2937 + $0x58] sm:$0xff]
        %v2950 = vld [vmem:[%s2937 + $0x60] sm:$0xff]
        %v2951 = vld [vmem:[%s2937 + $0x68] sm:$0xff]
        %v2952 = vld [vmem:[%s2937 + $0x70] sm:$0xff]
        %v2953 = vld [vmem:[%s2937 + $0x78] sm:$0xff]
        %2954 = vmatpush.msra.mxu0 %v2953
        %2955 = vmatpush.msra.mxu0 %v2952
        %2956 = vmatpush.msra.mxu0 %v2951
        %2957 = vmatpush.msra.mxu0 %v2950
        %2958 = vmatpush.msra.mxu0 %v2949
        %2959 = vmatpush.msra.mxu0 %v2948
        %2960 = vmatpush.msra.mxu0 %v2947
        %2961 = vmatpush.msra.mxu0 %v2946
        %2962 = vmatpush.msra.mxu0 %v2945
        %2963 = vmatpush.msra.mxu0 %v2944
        %2964 = vmatpush.msra.mxu0 %v2943
        %2965 = vmatpush.msra.mxu0 %v2942
        %2966 = vmatpush.msra.mxu0 %v2941
        %2967 = vmatpush.msra.mxu0 %v2940
        %2968 = vmatpush.msra.mxu0 %v2939
        %2969 = vmatpush.msra.mxu0 %v2938
        %2970 = vmatmul.f32.gmra.mxu0 %v2445
        %v2971 = vpop.f32.mrf.mxu0
        %v2972 = vadd.f32 0.0, %v2971
        %2973 = vmatmul.f32.gmra.mxu0 %v2448
        %v2974 = vpop.f32.mrf.mxu0
        %v2975 = vadd.f32 0.0, %v2974
        %2976 = vmatmul.f32.gmra.mxu0 %v2451
        %v2977 = vpop.f32.mrf.mxu0
        %v2978 = vadd.f32 0.0, %v2977
        %2979 = vmatmul.f32.gmra.mxu0 %v2454
        %v2980 = vpop.f32.mrf.mxu0
        %v2981 = vadd.f32 0.0, %v2980
        %2982 = vmatmul.f32.gmra.mxu0 %v2457
        %v2983 = vpop.f32.mrf.mxu0
        %v2984 = vadd.f32 0.0, %v2983
        %2985 = vmatmul.f32.gmra.mxu0 %v2460
        %v2986 = vpop.f32.mrf.mxu0
        %v2987 = vadd.f32 0.0, %v2986
        %2988 = vmatmul.f32.gmra.mxu0 %v2733
        %v2989 = vpop.f32.mrf.mxu0
        %v2990 = vadd.f32 0.0, %v2989
        %2991 = vmatmul.f32.gmra.mxu0 %v1772
        %v2992 = vpop.f32.mrf.mxu0
        %v2993 = vadd.f32 0.0, %v2992
        %2994 = vdwg.mxu0
        %v2995 = vadd.f32 %v2929, %v2972
        %v2996 = vadd.f32 %v2930, %v2975
        %v2997 = vadd.f32 %v2931, %v2978
        %v2998 = vadd.f32 %v2932, %v2981
        %v2999 = vadd.f32 %v2933, %v2984
        %v3000 = vadd.f32 %v2934, %v2987
        %v3001 = vadd.f32 %v2935, %v2990
        %v3002 = vadd.f32 %v2936, %v2993
        %s3003 = scalar_lea.vmem [#allocation2], 1024
        %v3004 = vld [vmem:[%s3003] sm:$0xff]
        %v3005 = vld [vmem:[%s3003 + $0x8] sm:$0xff]
        %v3006 = vld [vmem:[%s3003 + $0x10] sm:$0xff]
        %v3007 = vld [vmem:[%s3003 + $0x18] sm:$0xff]
        %v3008 = vld [vmem:[%s3003 + $0x20] sm:$0xff]
        %v3009 = vld [vmem:[%s3003 + $0x28] sm:$0xff]
        %v3010 = vld [vmem:[%s3003 + $0x30] sm:$0xff]
        %v3011 = vld [vmem:[%s3003 + $0x38] sm:$0xff]
        %v3012 = vld [vmem:[%s3003 + $0x40] sm:$0xff]
        %v3013 = vld [vmem:[%s3003 + $0x48] sm:$0xff]
        %v3014 = vld [vmem:[%s3003 + $0x50] sm:$0xff]
        %v3015 = vld [vmem:[%s3003 + $0x58] sm:$0xff]
        %v3016 = vld [vmem:[%s3003 + $0x60] sm:$0xff]
        %v3017 = vld [vmem:[%s3003 + $0x68] sm:$0xff]
        %v3018 = vld [vmem:[%s3003 + $0x70] sm:$0xff]
        %v3019 = vld [vmem:[%s3003 + $0x78] sm:$0xff]
        %3020 = vmatpush.msra.mxu0 %v3019
        %3021 = vmatpush.msra.mxu0 %v3018
        %3022 = vmatpush.msra.mxu0 %v3017
        %3023 = vmatpush.msra.mxu0 %v3016
        %3024 = vmatpush.msra.mxu0 %v3015
        %3025 = vmatpush.msra.mxu0 %v3014
        %3026 = vmatpush.msra.mxu0 %v3013
        %3027 = vmatpush.msra.mxu0 %v3012
        %3028 = vmatpush.msra.mxu0 %v3011
        %3029 = vmatpush.msra.mxu0 %v3010
        %3030 = vmatpush.msra.mxu0 %v3009
        %3031 = vmatpush.msra.mxu0 %v3008
        %3032 = vmatpush.msra.mxu0 %v3007
        %3033 = vmatpush.msra.mxu0 %v3006
        %3034 = vmatpush.msra.mxu0 %v3005
        %3035 = vmatpush.msra.mxu0 %v3004
        %3036 = vmatmul.f32.gmra.mxu0 %v2573
        %v3037 = vpop.f32.mrf.mxu0
        %v3038 = vadd.f32 0.0, %v3037
        %3039 = vmatmul.f32.gmra.mxu0 %v2576
        %v3040 = vpop.f32.mrf.mxu0
        %v3041 = vadd.f32 0.0, %v3040
        %3042 = vmatmul.f32.gmra.mxu0 %v2579
        %v3043 = vpop.f32.mrf.mxu0
        %v3044 = vadd.f32 0.0, %v3043
        %3045 = vmatmul.f32.gmra.mxu0 %v2582
        %v3046 = vpop.f32.mrf.mxu0
        %v3047 = vadd.f32 0.0, %v3046
        %3048 = vmatmul.f32.gmra.mxu0 %v2585
        %v3049 = vpop.f32.mrf.mxu0
        %v3050 = vadd.f32 0.0, %v3049
        %3051 = vmatmul.f32.gmra.mxu0 %v2588
        %v3052 = vpop.f32.mrf.mxu0
        %v3053 = vadd.f32 0.0, %v3052
        %3054 = vmatmul.f32.gmra.mxu0 %v2803
        %v3055 = vpop.f32.mrf.mxu0
        %v3056 = vadd.f32 0.0, %v3055
        %3057 = vmatmul.f32.gmra.mxu0 %v1920
        %v3058 = vpop.f32.mrf.mxu0
        %v3059 = vadd.f32 0.0, %v3058
        %3060 = vdwg.mxu0
        %v3061 = vadd.f32 %v2995, %v3038
        %v3062 = vadd.f32 %v2996, %v3041
        %v3063 = vadd.f32 %v2997, %v3044
        %v3064 = vadd.f32 %v2998, %v3047
        %v3065 = vadd.f32 %v2999, %v3050
        %v3066 = vadd.f32 %v3000, %v3053
        %v3067 = vadd.f32 %v3001, %v3056
        %v3068 = vadd.f32 %v3002, %v3059
        %v3069 = vld [vmem:[%s4] sm:$0x1]
        %v3071 = vperm.slane %v3069, 0
        %v3073 = vadd.f32 %v3061, %v3071
        %v3074 = vadd.f32 %v3062, %v3071
        %v3075 = vadd.f32 %v3063, %v3071
        %v3076 = vadd.f32 %v3064, %v3071
        %v3077 = vadd.f32 %v3065, %v3071
        %v3078 = vadd.f32 %v3066, %v3071
        %v3079 = vadd.f32 %v3067, %v3071
        %v3080 = vadd.f32 %v3068, %v3071
        %v3081 = vmax.f32 %v3073, 0.0
        %v3082 = vmax.f32 %v3074, 0.0
        %v3083 = vmax.f32 %v3075, 0.0
        %v3084 = vmax.f32 %v3076, 0.0
        %v3085 = vmax.f32 %v3077, 0.0
        %v3086 = vmax.f32 %v3078, 0.0
        %v3087 = vmax.f32 %v3079, 0.0
        %v3088 = vmax.f32 %v3080, 0.0
        %3089 = vst [vmem:[%s234] sm:$0xff] %v3081
        %3090 = vst [vmem:[%s234 + $0x8] sm:$0xff] %v3082
        %3091 = vst [vmem:[%s234 + $0x10] sm:$0xff] %v3083
        %3092 = vst [vmem:[%s234 + $0x18] sm:$0xff] %v3084
        %3093 = vst [vmem:[%s234 + $0x20] sm:$0xff] %v3085
        %3094 = vst [vmem:[%s234 + $0x28] sm:$0xff] %v3086
        %3095 = vst [vmem:[%s234 + $0x30] sm:$0xff] %v3087
        %3096 = vst [vmem:[%s234 + $0x38] sm:$0xff] %v3088
        %s3097 = sand.u32 %s138, 1
        %s3098 = scalar_lea.sflag [#allocation4], %s3097
        %s3099 = sand.u32 %s138, 1
        %s3100 = smul.addr %s3099, 64
        %s3101 = scalar_lea.vmem [#allocation5], %s3100
        // Predicated region
        $region45: #{tpu_custom_call.1} parent=39 // pred_check
          %p3102 = pneg %p148
        $region46: #{tpu_custom_call.1} parent=39 // pred_check_branch
          %3104 = sbr.rel (%p3102) target = $region48
        $region47: #{tpu_custom_call.1} parent=39 // pred_region
          %s3105 = smul.u32 8, %s20
          %3107 = vsyncadd %s3098, 0
          %s3108 = smul.addr %s3105, 8
          %s3109 = scalar_lea.hbm %s5, %s3108
          %s3110 = sshll.u32 %s3101, 4
          %s3111 = int_to_ptr.vmem [resolvable:$true] %s3110
          %s3112 = sshll.u32 %s3109, 4
          %s3113 = int_to_ptr.hbm [resolvable:$true] %s3112
          %3118 = dma.vmem_to_hbm [thread:$0]  %s3111, 1024, %s3113, %s3098, 128, 128, 8
        $region48: #{tpu_custom_call.1} parent=39 // pred_fallthru
          _
      $region40: #{tpu_custom_call.1} parent=5 // pred_fallthru
        _
      %p3119 = scmp.le.s32.totalorder 2, %s15
      // Predicated region
      $region49: #{tpu_custom_call.1} parent=5 // pred_check
        %p3120 = pneg %p3119
      $region50: #{tpu_custom_call.1} parent=5 // pred_check_branch
        %3122 = sbr.rel (%p3120) target = $region52
      $region51: #{tpu_custom_call.1} parent=5 // pred_region
        %s3123 = ssub.s32 %s15, 2
        // Predicated region
        $region53: #{tpu_custom_call.1} parent=51 // pred_check
          %p3124 = pneg %p154
        $region54: #{tpu_custom_call.1} parent=51 // pred_check_branch
          %3126 = sbr.rel (%p3124) target = $region56
        $region55: #{tpu_custom_call.1} parent=51 // pred_region
          %s3127 = sand.u32 %s139, 1
          %s3128 = scalar_lea.sflag [#allocation4], %s3127
          %s3129 = sand.u32 %s139, 1
          %s3130 = smul.addr %s3129, 64
          %s3131 = scalar_lea.vmem [#allocation5], %s3130
          %3133 = dma.done %s3128, 1024
        $region56: #{tpu_custom_call.1} parent=51 // pred_fallthru
          _
      $region52: #{tpu_custom_call.1} parent=5 // pred_fallthru
        _
    $region6: #{tpu_custom_call.1} parent=1 // loop_footer
      %s19 = sadd.s32 1, %s15
    $region7: #{tpu_custom_call.1} parent=1 // loop_footer_branch
      %14 = sbr.rel target = $region3
    $region8: #{tpu_custom_call.1} parent=1 // loop_exit
      _
    %3134 = vsyncpa [#allocation3], 1
    %s3135 = scalar_lea.sflag [#allocation3], 1
    %3136 = vsyncpa %s3135, 1
    %3137 = vsyncpa [#allocation4], 1
    %s3138 = scalar_lea.sflag [#allocation4], 1
    %3139 = vsyncpa %s3138, 1

</llo_original>
